<compile_context>
chip_gen: v7x
topology: tpu7x:2x2x1
jax: 0.10.0
libtpu: 0.0.40
codegen_flags: <defaults>
</compile_context>

<pallas_src>
import functools

import jax
import jax.numpy as jnp
from jax.experimental import pallas as pl
from jax.experimental.pallas import tpu as pltpu


# Scoped-VMEM budget requested for every kernel (>= default on v5e, safe on
# v6e/v7x).  Tune per generation if tiles are enlarged.
_VMEM_LIMIT = 32 * 1024 * 1024


def _cparams(dims):
    return pltpu.CompilerParams(dimension_semantics=dims,
                                vmem_limit_bytes=_VMEM_LIMIT)


def _pick_row_tile(H, W, max_rows=256):
    """Largest divisor TH of H with TH*W <= max_rows, preferring >=2 row tiles."""
    cands = [t for t in range(1, H + 1) if H % t == 0 and t * W <= max_rows]
    multi = [t for t in cands if H // t >= 2]
    if multi:
        return max(multi)
    if cands:
        return max(cands)
    return 1


# ----------------------------------------------------------------------------
# Kernel 1: row-tiled matmul + bias + activation (conv1 1x1 + folded bn1)
# ----------------------------------------------------------------------------
def _matmul_bias_act_kernel(x_ref, w_ref, b_ref, o_ref, *, act):
    x = x_ref[...].astype(jnp.bfloat16)
    y = jnp.dot(x, w_ref[...], preferred_element_type=jnp.float32)
    y = y + b_ref[...]                         # (tile, Cout) + (1, Cout), f32
    if act == "relu":
        y = jnp.maximum(y, 0.0)
    o_ref[...] = y.astype(o_ref.dtype)


def matmul_bias_act(x, w, b, act="none", out_dtype=jnp.float32, row_tile=512):
    n, cin = x.shape
    cout = w.shape[1]
    row_tile = min(row_tile, n)
    grid = (pl.cdiv(n, row_tile),)
    b2 = b.reshape(1, cout).astype(jnp.float32)
    return pl.pallas_call(
        functools.partial(_matmul_bias_act_kernel, act=act),
        out_shape=jax.ShapeDtypeStruct((n, cout), out_dtype),
        grid_spec=pltpu.PrefetchScalarGridSpec(
            num_scalar_prefetch=0,
            grid=grid,
            in_specs=[
                pl.BlockSpec((row_tile, cin), lambda i: (i, 0)),
                pl.BlockSpec((cin, cout), lambda i: (0, 0)),
                pl.BlockSpec((1, cout), lambda i: (0, 0)),
            ],
            out_specs=pl.BlockSpec((row_tile, cout), lambda i: (i, 0)),
        ),
        compiler_params=_cparams(("parallel",)),
    )(x, w, b2)


# ----------------------------------------------------------------------------
# Kernel 2: 3x3 conv (stride=1, pad=1) + ReLU, row-tiled, with fused GAP.
# Halo rows come from two extra single-row blocks; the padded tile is built
# in a VMEM scratch (interior stored at an aligned sublane offset), so no
# HBM-materialized jnp.pad is needed.
# ----------------------------------------------------------------------------
def _conv3x3_relu_gap_kernel(xc_ref, xt_ref, xb_ref, w_ref, u_ref, gap_ref,
                             pad_scr, sum_scr, *, TH, W, Cin, Cout, inv_hw):
    i = pl.program_id(1)
    nlast = pl.num_programs(1) - 1
    off = 8                      # aligned column offset of the tile interior

    # (Re)initialize the zero border of the padded scratch.
    @pl.when(i == 0)
    def _zero_all():
        pad_scr[...] = jnp.zeros_like(pad_scr)

    @pl.when(i == nlast)
    def _zero_bottom_halo():
        pad_scr[TH + 1:TH + 2, off:off + W, :] = jnp.zeros(
            (1, W, Cin), jnp.float32)

    # Interior rows of this tile.
    pad_scr[1:TH + 1, off:off + W, :] = xc_ref[0].astype(jnp.float32)

    # Halo rows from the neighbouring row tiles (zero at the image border).
    @pl.when(i > 0)
    def _top_halo():
        pad_scr[0:1, off:off + W, :] = xt_ref[0].astype(jnp.float32)

    @pl.when(i < nlast)
    def _bottom_halo():
        pad_scr[TH + 1:TH + 2, off:off + W, :] = xb_ref[0].astype(jnp.float32)

    # 3x3 conv as 9 shifted (TH*W, Cin) @ (Cin, Cout) bf16 matmuls.
    # (K=3*Cin im2col folding intentionally skipped: it needs unaligned
    #  minor-dim concatenation; the accumulator here is already tile-bounded.)
    acc = jnp.zeros((TH * W, Cout), jnp.float32)
    for ky in range(3):
        for kx in range(3):
            patch = pad_scr[ky:ky + TH, off - 1 + kx:off - 1 + kx + W, :]
            lhs = patch.reshape(TH * W, Cin).astype(jnp.bfloat16)
            acc = acc + jnp.dot(lhs, w_ref[ky, kx],
                                preferred_element_type=jnp.float32)
    acc = jnp.maximum(acc, 0.0)
    u_ref[0] = acc.astype(u_ref.dtype)

    # Fused global-average-pool accumulation (adaptive_avg_pool2d(., 1)).
    @pl.when(i == 0)
    def _init_sum():
        sum_scr[...] = jnp.zeros_like(sum_scr)

    sum_scr[...] += jnp.sum(acc, axis=0, keepdims=True)

    @pl.when(i == nlast)
    def _finalize_gap():
        gap_ref[0] = sum_scr[...] * inv_hw


def conv3x3_relu_gap(x_nhwc, w):
    B, H, W, Cin = x_nhwc.shape
    Cout = w.shape[-1]
    TH = _pick_row_tile(H, W, max_rows=256)
    nt = H // TH
    PW = W + 9                   # zero cols at index off-1=7 and off+W=W+8

    kern = functools.partial(_conv3x3_relu_gap_kernel, TH=TH, W=W, Cin=Cin,
                             Cout=Cout, inv_hw=1.0 / float(H * W))
    u, gap = pl.pallas_call(
        kern,
        out_shape=(jax.ShapeDtypeStruct((B, H * W, Cout), jnp.bfloat16),
                   jax.ShapeDtypeStruct((B, 1, Cout), jnp.float32)),
        grid_spec=pltpu.PrefetchScalarGridSpec(
            num_scalar_prefetch=0,
            grid=(B, nt),
            in_specs=[
                # current row tile
                pl.BlockSpec((1, TH, W, Cin), lambda bi, i: (bi, i, 0, 0)),
                # single row just above the tile (clamped; masked at i == 0)
                pl.BlockSpec((1, 1, W, Cin),
                             lambda bi, i: (bi, jnp.maximum(i * TH - 1, 0),
                                            0, 0)),
                # single row just below the tile (clamped; masked at i == last)
                pl.BlockSpec((1, 1, W, Cin),
                             lambda bi, i: (bi, jnp.minimum((i + 1) * TH,
                                                            H - 1), 0, 0)),
                # full 3x3 weights, resident
                pl.BlockSpec((3, 3, Cin, Cout), lambda bi, i: (0, 0, 0, 0)),
            ],
            out_specs=[
                pl.BlockSpec((1, TH * W, Cout), lambda bi, i: (bi, i, 0)),
                pl.BlockSpec((1, 1, Cout), lambda bi, i: (bi, 0, 0)),
            ],
            scratch_shapes=[
                pltpu.VMEM((TH + 2, PW, Cin), jnp.float32),   # padded tile
                pltpu.VMEM((1, Cout), jnp.float32),           # GAP accumulator
            ],
        ),
        compiler_params=_cparams(("parallel", "arbitrary")),
    )(x_nhwc, x_nhwc, x_nhwc, w)
    return u, gap


# ----------------------------------------------------------------------------
# Kernel 3: fused attention MLP: fc1 + relu -> fc2 -> sigmoid (rSoftMax, r=1)
# ----------------------------------------------------------------------------
def _atten_mlp_kernel(g_ref, w1_ref, b1_ref, w2_ref, b2_ref, o_ref):
    g = g_ref[0]                                        # (1, Cg) f32
    h = jnp.dot(g, w1_ref[...], preferred_element_type=jnp.float32)
    h = jnp.maximum(h + b1_ref[...], 0.0)
    a = jnp.dot(h, w2_ref[...], preferred_element_type=jnp.float32)
    a = a + b2_ref[...]
    # sigmoid via EUP exp + approximate reciprocal
    a = pl.reciprocal(1.0 + jnp.exp(-a), approx=True)
    o_ref[0] = a.astype(o_ref.dtype)


def atten_mlp(gap, fc1_w, fc1_b, fc2_w, fc2_b):
    B, _, Cg = gap.shape
    inter = fc1_w.shape[1]
    b1 = fc1_b.reshape(1, inter).astype(jnp.float32)
    b2 = fc2_b.reshape(1, Cg).astype(jnp.float32)
    return pl.pallas_call(
        _atten_mlp_kernel,
        out_shape=jax.ShapeDtypeStruct((B, 1, Cg), jnp.float32),
        grid_spec=pltpu.PrefetchScalarGridSpec(
            num_scalar_prefetch=0,
            grid=(B,),
            in_specs=[
                pl.BlockSpec((1, 1, Cg), lambda bi: (bi, 0, 0)),
                pl.BlockSpec((Cg, inter), lambda bi: (0, 0)),
                pl.BlockSpec((1, inter), lambda bi: (0, 0)),
                pl.BlockSpec((inter, Cg), lambda bi: (0, 0)),
                pl.BlockSpec((1, Cg), lambda bi: (0, 0)),
            ],
            out_specs=pl.BlockSpec((1, 1, Cg), lambda bi: (bi, 0, 0)),
        ),
        compiler_params=_cparams(("arbitrary",)),
    )(gap, fc1_w, b1, fc2_w, b2)


# ----------------------------------------------------------------------------
# Kernel 4: (atten * u) -> conv3(1x1)+bn3 (folded) -> + residual -> ReLU,
# tiled over (batch, HW row-tiles).
# ----------------------------------------------------------------------------
def _scale_conv_res_relu_kernel(u_ref, a_ref, w_ref, b_ref, r_ref, o_ref):
    scaled = (u_ref[0].astype(jnp.float32) * a_ref[0]).astype(jnp.bfloat16)
    y = jnp.dot(scaled, w_ref[...], preferred_element_type=jnp.float32)
    y = y + b_ref[...] + r_ref[0]
    o_ref[0] = jnp.maximum(y, 0.0).astype(o_ref.dtype)


def scale_conv_res_relu(u, atten, w, b, res, row_tile):
    B, HW, Cg = u.shape
    Cout = w.shape[1]
    nt = HW // row_tile
    b2 = b.reshape(1, Cout).astype(jnp.float32)
    return pl.pallas_call(
        _scale_conv_res_relu_kernel,
        out_shape=jax.ShapeDtypeStruct((B, HW, Cout), jnp.float32),
        grid_spec=pltpu.PrefetchScalarGridSpec(
            num_scalar_prefetch=0,
            grid=(B, nt),
            in_specs=[
                pl.BlockSpec((1, row_tile, Cg), lambda bi, i: (bi, i, 0)),
                pl.BlockSpec((1, 1, Cg), lambda bi, i: (bi, 0, 0)),
                pl.BlockSpec((Cg, Cout), lambda bi, i: (0, 0)),
                pl.BlockSpec((1, Cout), lambda bi, i: (0, 0)),
                pl.BlockSpec((1, row_tile, Cout), lambda bi, i: (bi, i, 0)),
            ],
            out_specs=pl.BlockSpec((1, row_tile, Cout), lambda bi, i: (bi, i, 0)),
        ),
        compiler_params=_cparams(("parallel", "parallel")),
    )(u, atten, w, b2, res)


# ----------------------------------------------------------------------------
# Parameter init (deterministic, synthetic) with BN folded (inference mode)
# ----------------------------------------------------------------------------
def init_params(key, inplanes, planes, bottleneck_width=64, cardinality=1,
                radix=1, reduction_factor=4, eps=1e-5):
    group_width = int(planes * (bottleneck_width / 64.0)) * cardinality
    inter = max(group_width * radix // reduction_factor, 32)
    out_ch = planes * 4
    ks = jax.random.split(key, 16)

    def rnd(k, shape, scale=0.1):
        return scale * jax.random.normal(k, shape, jnp.float32)

    # conv1 (1x1, no bias) + bn1 -> folded scale/shift
    w1 = rnd(ks[0], (inplanes, group_width))
    g1 = 1.0 + rnd(ks[1], (group_width,))
    be1 = rnd(ks[2], (group_width,))
    m1 = rnd(ks[3], (group_width,))
    v1 = jax.random.uniform(ks[4], (group_width,), jnp.float32, 0.5, 1.5)
    s1 = g1 / jnp.sqrt(v1 + eps)

    # SplAtConv2d conv (3x3, groups=radix*cardinality=1, no bias, use_bn=False)
    w2 = rnd(ks[5], (3, 3, group_width, group_width))

    # SplAtConv2d fc1 / fc2 (1x1 convs with bias)
    fc1_w = rnd(ks[6], (group_width, inter))
    fc1_b = rnd(ks[7], (inter,))
    fc2_w = rnd(ks[8], (inter, group_width))
    fc2_b = rnd(ks[9], (group_width,))

    # conv3 (1x1, no bias) + bn3 -> folded
    w3 = rnd(ks[10], (group_width, out_ch))
    g3 = 1.0 + rnd(ks[11], (out_ch,))
    be3 = rnd(ks[12], (out_ch,))
    m3 = rnd(ks[13], (out_ch,))
    v3 = jax.random.uniform(ks[14], (out_ch,), jnp.float32, 0.5, 1.5)
    s3 = g3 / jnp.sqrt(v3 + eps)

    return dict(
        w1=(w1 * s1[None, :]).astype(jnp.bfloat16),
        b1=(be1 - m1 * s1),
        w2=w2.astype(jnp.bfloat16),
        fc1_w=fc1_w, fc1_b=fc1_b, fc2_w=fc2_w, fc2_b=fc2_b,
        w3=(w3 * s3[None, :]).astype(jnp.bfloat16),
        b3=(be3 - m3 * s3),
    )


# ----------------------------------------------------------------------------
# Full Bottleneck forward (defaults: radix=1, stride=1, no downsample/avd)
# ----------------------------------------------------------------------------
def bottleneck_forward_nhwc(x_nhwc, params):
    """NHWC entry point (preferred when chaining blocks; avoids transposes)."""
    B, H, W, Cin = x_nhwc.shape
    Cg = params["w1"].shape[1]
    Cout = params["w3"].shape[1]
    assert Cin == Cout, "identity residual requires inplanes == planes*expansion"

    # conv1 (1x1) + folded bn1 + relu -> bf16 activations
    out = matmul_bias_act(x_nhwc.reshape(B * H * W, Cin), params["w1"],
                          params["b1"], act="relu", out_dtype=jnp.bfloat16)
    out_nhwc = out.reshape(B, H, W, Cg)

    # SplAtConv2d(radix=1): conv3x3 + relu, with fused global average pool
    u, gap = conv3x3_relu_gap(out_nhwc, params["w2"])        # u: (B, H*W, Cg)

    # attention MLP: fc1 + relu -> fc2 -> sigmoid (rSoftMax with radix=1)
    atten = atten_mlp(gap, params["fc1_w"], params["fc1_b"],
                      params["fc2_w"], params["fc2_b"])      # (B, 1, Cg)

    # (atten * u) -> conv3 (1x1) + folded bn3 -> + identity residual -> relu
    res = x_nhwc.reshape(B, H * W, Cin)
    th4 = _pick_row_tile(H, W, max_rows=512)
    y = scale_conv_res_relu(u, atten, params["w3"], params["b3"], res,
                            row_tile=th4 * W)
    return y.reshape(B, H, W, Cout)


def bottleneck_forward(x_nchw, params):
    # NCHW wrapper matching the PyTorch interface; the transposes are the only
    # layout plumbing left outside the kernels.
    x = jnp.transpose(x_nchw, (0, 2, 3, 1))
    y = bottleneck_forward_nhwc(x, params)
    return jnp.transpose(y, (0, 3, 1, 2))

# TODO(synk): DropBlock2D (dropblock_prob>0), avd pooling, and downsample
# branches are dead code at the module's default arguments and are not emitted.


if __name__ == "__main__":
    key = jax.random.PRNGKey(0)
    B, inplanes, H, W = 2, 16, 16, 16
    planes = 4              # expansion*planes == inplanes -> identity residual
    k_x, k_p = jax.random.split(key)
    x = jax.random.normal(k_x, (B, inplanes, H, W), jnp.float32)
    params = init_params(k_p, inplanes, planes)

    out = jax.jit(bottleneck_forward)(x, params)
    out = jax.block_until_ready(out)

    assert out.shape == (B, planes * 4, H, W), out.shape
    assert bool(jnp.all(out >= 0.0))            # final ReLU
    assert bool(jnp.all(jnp.isfinite(out)))
    print("KERNEL_OK")
</pallas_src>

<mosaic_0001>
module attributes {stable_mosaic.version = 11 : i64} {
  func.func @_matmul_bias_act_kernel(%arg0: i32, %arg1: memref<512x16xf32, #tpu.memory_space<vmem>>, %arg2: memref<16x4xbf16, #tpu.memory_space<vmem>>, %arg3: memref<1x4xf32, #tpu.memory_space<vmem>>, %arg4: memref<512x4xbf16, #tpu.memory_space<vmem>>) attributes {dimension_semantics = [#tpu.dimension_semantics<parallel>], iteration_bounds = array<i64: 1>, scalar_prefetch = 0 : i64, scratch_operands = 0 : i64, tpu.core_type = #tpu.core_type<tc>, window_params = [{transform_indices = @transform_0, window_bounds = array<i64: 512, 16>}, {pipeline_mode = #tpu.pipeline_mode<synchronous>, transform_indices = @transform_1, window_bounds = array<i64: 16, 4>}, {pipeline_mode = #tpu.pipeline_mode<synchronous>, transform_indices = @transform_2, window_bounds = array<i64: 1, 4>}, {transform_indices = @transform_3, window_bounds = array<i64: 512, 4>}]} {
    %c0 = arith.constant 0 : index
    %c0_0 = arith.constant 0 : index
    %0 = vector.load %arg1[%c0, %c0_0] : memref<512x16xf32, #tpu.memory_space<vmem>>, vector<512x16xf32>
    %1 = arith.truncf %0 : vector<512x16xf32> to vector<512x16xbf16>
    %c0_1 = arith.constant 0 : index
    %c0_2 = arith.constant 0 : index
    %2 = vector.load %arg2[%c0_1, %c0_2] : memref<16x4xbf16, #tpu.memory_space<vmem>>, vector<16x4xbf16>
    %cst = arith.constant dense<0.000000e+00> : vector<512x4xf32>
    %3 = tpu.matmul %1, %2, %cst {dimension_numbers = #tpu.dot_dimension_numbers<[1], [0], [0], [1], [0, 0, 1, 1], [], []>} : vector<512x16xbf16>, vector<16x4xbf16>, vector<512x4xf32> -> vector<512x4xf32>
    %c0_3 = arith.constant 0 : index
    %c0_4 = arith.constant 0 : index
    %4 = vector.load %arg3[%c0_3, %c0_4] : memref<1x4xf32, #tpu.memory_space<vmem>>, vector<1x4xf32>
    %5 = vector.broadcast %4 : vector<1x4xf32> to vector<512x4xf32>
    %6 = arith.addf %3, %5 : vector<512x4xf32>
    %cst_5 = arith.constant 0.000000e+00 : f32
    %7 = vector.broadcast %cst_5 : f32 to vector<512x4xf32>
    %8 = arith.maximumf %6, %7 : vector<512x4xf32>
    %9 = arith.truncf %8 : vector<512x4xf32> to vector<512x4xbf16>
    %c0_6 = arith.constant 0 : index
    %c0_7 = arith.constant 0 : index
    %10 = vector.load %arg4[%c0_6, %c0_7] : memref<512x4xbf16, #tpu.memory_space<vmem>>, vector<512x4xbf16>
    tpu.vector_store %arg4[%c0_6, %c0_7], %9 {strides = array<i32>} : memref<512x4xbf16, #tpu.memory_space<vmem>>, vector<512x4xbf16>,
    return
  }
  func.func @transform_0(%arg0: i32) -> (i32, i32) {
    %c0_i32 = arith.constant 0 : i32
    %c0_i32_0 = arith.constant 0 : i32
    return %arg0, %c0_i32 : i32, i32
  }
  func.func @transform_1(%arg0: i32) -> (i32, i32) {
    %c0_i32 = arith.constant 0 : i32
    %c0_i32_0 = arith.constant 0 : i32
    %c0_i32_1 = arith.constant 0 : i32
    return %c0_i32, %c0_i32_0 : i32, i32
  }
  func.func @transform_2(%arg0: i32) -> (i32, i32) {
    %c0_i32 = arith.constant 0 : i32
    %c0_i32_0 = arith.constant 0 : i32
    %c0_i32_1 = arith.constant 0 : i32
    return %c0_i32, %c0_i32_0 : i32, i32
  }
  func.func @transform_3(%arg0: i32) -> (i32, i32) {
    %c0_i32 = arith.constant 0 : i32
    %c0_i32_0 = arith.constant 0 : i32
    return %arg0, %c0_i32 : i32, i32
  }
}

module attributes {stable_mosaic.version = 11 : i64} {
  func.func @_atten_mlp_kernel(%arg0: i32, %arg1: memref<1x1x4xf32, #tpu.memory_space<vmem>>, %arg2: memref<4x32xf32, #tpu.memory_space<vmem>>, %arg3: memref<1x32xf32, #tpu.memory_space<vmem>>, %arg4: memref<32x4xf32, #tpu.memory_space<vmem>>, %arg5: memref<1x4xf32, #tpu.memory_space<vmem>>, %arg6: memref<1x1x4xf32, #tpu.memory_space<vmem>>) attributes {dimension_semantics = [#tpu.dimension_semantics<arbitrary>], iteration_bounds = array<i64: 2>, scalar_prefetch = 0 : i64, scratch_operands = 0 : i64, tpu.core_type = #tpu.core_type<tc>, window_params = [{transform_indices = @transform_0, window_bounds = array<i64: 1, 1, 4>}, {pipeline_mode = #tpu.pipeline_mode<synchronous>, transform_indices = @transform_1, window_bounds = array<i64: 4, 32>}, {pipeline_mode = #tpu.pipeline_mode<synchronous>, transform_indices = @transform_2, window_bounds = array<i64: 1, 32>}, {pipeline_mode = #tpu.pipeline_mode<synchronous>, transform_indices = @transform_3, window_bounds = array<i64: 32, 4>}, {pipeline_mode = #tpu.pipeline_mode<synchronous>, transform_indices = @transform_4, window_bounds = array<i64: 1, 4>}, {transform_indices = @transform_5, window_bounds = array<i64: 1, 1, 4>}]} {
    %c0 = arith.constant 0 : index
    %c0_0 = arith.constant 0 : index
    %c0_1 = arith.constant 0 : index
    %0 = vector.load %arg1[%c0, %c0_0, %c0_1] : memref<1x1x4xf32, #tpu.memory_space<vmem>>, vector<1x1x4xf32>
    %1 = vector.shape_cast %0 : vector<1x1x4xf32> to vector<1x4xf32>
    %c0_2 = arith.constant 0 : index
    %c0_3 = arith.constant 0 : index
    %2 = vector.load %arg2[%c0_2, %c0_3] : memref<4x32xf32, #tpu.memory_space<vmem>>, vector<4x32xf32>
    %cst = arith.constant dense<0.000000e+00> : vector<1x32xf32>
    %3 = tpu.matmul %1, %2, %cst {dimension_numbers = #tpu.dot_dimension_numbers<[1], [0], [0], [1], [0, 0, 1, 1], [], []>} : vector<1x4xf32>, vector<4x32xf32>, vector<1x32xf32> -> vector<1x32xf32>
    %c0_4 = arith.constant 0 : index
    %c0_5 = arith.constant 0 : index
    %4 = vector.load %arg3[%c0_4, %c0_5] : memref<1x32xf32, #tpu.memory_space<vmem>>, vector<1x32xf32>
    %5 = arith.addf %3, %4 : vector<1x32xf32>
    %cst_6 = arith.constant 0.000000e+00 : f32
    %6 = vector.broadcast %cst_6 : f32 to vector<1x32xf32>
    %7 = arith.maximumf %5, %6 : vector<1x32xf32>
    %c0_7 = arith.constant 0 : index
    %c0_8 = arith.constant 0 : index
    %8 = vector.load %arg4[%c0_7, %c0_8] : memref<32x4xf32, #tpu.memory_space<vmem>>, vector<32x4xf32>
    %cst_9 = arith.constant dense<0.000000e+00> : vector<1x4xf32>
    %9 = tpu.matmul %7, %8, %cst_9 {dimension_numbers = #tpu.dot_dimension_numbers<[1], [0], [0], [1], [0, 0, 1, 1], [], []>} : vector<1x32xf32>, vector<32x4xf32>, vector<1x4xf32> -> vector<1x4xf32>
    %c0_10 = arith.constant 0 : index
    %c0_11 = arith.constant 0 : index
    %10 = vector.load %arg5[%c0_10, %c0_11] : memref<1x4xf32, #tpu.memory_space<vmem>>, vector<1x4xf32>
    %11 = arith.addf %9, %10 : vector<1x4xf32>
    %cst_12 = arith.constant 0.000000e+00 : f32
    %12 = vector.broadcast %cst_12 : f32 to vector<1x4xf32>
    %13 = arith.subf %12, %11 : vector<1x4xf32>
    %14 = math.exp %13 : vector<1x4xf32>
    %cst_13 = arith.constant 1.000000e+00 : f32
    %15 = vector.broadcast %cst_13 : f32 to vector<1x4xf32>
    %16 = arith.addf %15, %14 : vector<1x4xf32>
    %17 = tpu.reciprocal %16 {approx = true} : vector<1x4xf32> -> vector<1x4xf32>
    %c0_14 = arith.constant 0 : index
    %c0_15 = arith.constant 0 : index
    %c0_16 = arith.constant 0 : index
    %18 = vector.load %arg6[%c0_14, %c0_15, %c0_16] : memref<1x1x4xf32, #tpu.memory_space<vmem>>, vector<1x1x4xf32>
    %19 = vector.shape_cast %18 : vector<1x1x4xf32> to vector<1x4xf32>
    %20 = vector.shape_cast %17 : vector<1x4xf32> to vector<1x1x4xf32>
    tpu.vector_store %arg6[%c0_14, %c0_15, %c0_16], %20 {strides = array<i32>} : memref<1x1x4xf32, #tpu.memory_space<vmem>>, vector<1x1x4xf32>,
    return
  }
  func.func @transform_0(%arg0: i32) -> (i32, i32, i32) {
    %c0_i32 = arith.constant 0 : i32
    %c0_i32_0 = arith.constant 0 : i32
    %c0_i32_1 = arith.constant 0 : i32
    return %arg0, %c0_i32, %c0_i32_0 : i32, i32, i32
  }
  func.func @transform_1(%arg0: i32) -> (i32, i32) {
    %c0_i32 = arith.constant 0 : i32
    %c0_i32_0 = arith.constant 0 : i32
    %c0_i32_1 = arith.constant 0 : i32
    return %c0_i32, %c0_i32_0 : i32, i32
  }
  func.func @transform_2(%arg0: i32) -> (i32, i32) {
    %c0_i32 = arith.constant 0 : i32
    %c0_i32_0 = arith.constant 0 : i32
    %c0_i32_1 = arith.constant 0 : i32
    return %c0_i32, %c0_i32_0 : i32, i32
  }
  func.func @transform_3(%arg0: i32) -> (i32, i32) {
    %c0_i32 = arith.constant 0 : i32
    %c0_i32_0 = arith.constant 0 : i32
    %c0_i32_1 = arith.constant 0 : i32
    return %c0_i32, %c0_i32_0 : i32, i32
  }
  func.func @transform_4(%arg0: i32) -> (i32, i32) {
    %c0_i32 = arith.constant 0 : i32
    %c0_i32_0 = arith.constant 0 : i32
    %c0_i32_1 = arith.constant 0 : i32
    return %c0_i32, %c0_i32_0 : i32, i32
  }
  func.func @transform_5(%arg0: i32) -> (i32, i32, i32) {
    %c0_i32 = arith.constant 0 : i32
    %c0_i32_0 = arith.constant 0 : i32
    %c0_i32_1 = arith.constant 0 : i32
    return %arg0, %c0_i32, %c0_i32_0 : i32, i32, i32
  }
}

module attributes {stable_mosaic.version = 11 : i64} {
  func.func @_conv3x3_relu_gap_kernel(%arg0: i32, %arg1: i32, %arg2: memref<1x8x16x4xbf16, #tpu.memory_space<vmem>>, %arg3: memref<1x1x16x4xbf16, #tpu.memory_space<vmem>>, %arg4: memref<1x1x16x4xbf16, #tpu.memory_space<vmem>>, %arg5: memref<3x3x4x4xbf16, #tpu.memory_space<vmem>>, %arg6: memref<1x128x4xbf16, #tpu.memory_space<vmem>>, %arg7: memref<1x1x4xf32, #tpu.memory_space<vmem>>, %arg8: memref<10x25x4xf32, #tpu.memory_space<vmem>>, %arg9: memref<1x4xf32, #tpu.memory_space<vmem>>) attributes {dimension_semantics = [#tpu.dimension_semantics<parallel>, #tpu.dimension_semantics<arbitrary>], iteration_bounds = array<i64: 2, 2>, scalar_prefetch = 0 : i64, scratch_operands = 2 : i64, tpu.core_type = #tpu.core_type<tc>, window_params = [{transform_indices = @transform_0, window_bounds = array<i64: 1, 8, 16, 4>}, {transform_indices = @transform_1, window_bounds = array<i64: 1, 1, 16, 4>}, {transform_indices = @transform_2, window_bounds = array<i64: 1, 1, 16, 4>}, {pipeline_mode = #tpu.pipeline_mode<synchronous>, transform_indices = @transform_3, window_bounds = array<i64: 3, 3, 4, 4>}, {transform_indices = @transform_4, window_bounds = array<i64: 1, 128, 4>}, {transform_indices = @transform_5, window_bounds = array<i64: 1, 1, 4>}]} {
    %c0_i32 = arith.constant 0 : i32
    %0 = arith.cmpi eq, %arg1, %c0_i32 : i32
    %1 = arith.extui %0 : i1 to i32
    %c0_i32_0 = arith.constant 0 : i32
    %2 = arith.cmpi ne, %1, %c0_i32_0 : i32
    scf.if %2 {
      %cst_92 = arith.constant 0.000000e+00 : f32
      %97 = vector.broadcast %cst_92 : f32 to vector<10x25x4xf32>
      %c0_93 = arith.constant 0 : index
      %c0_94 = arith.constant 0 : index
      %c0_95 = arith.constant 0 : index
      %98 = vector.load %arg8[%c0_93, %c0_94, %c0_95] : memref<10x25x4xf32, #tpu.memory_space<vmem>>, vector<10x25x4xf32>
      tpu.vector_store %arg8[%c0_93, %c0_94, %c0_95], %97 {strides = array<i32>} : memref<10x25x4xf32, #tpu.memory_space<vmem>>, vector<10x25x4xf32>,
    } else {
    }
    %c1_i32 = arith.constant 1 : i32
    %3 = arith.cmpi eq, %arg1, %c1_i32 : i32
    %4 = arith.extui %3 : i1 to i32
    %c0_i32_1 = arith.constant 0 : i32
    %5 = arith.cmpi ne, %4, %c0_i32_1 : i32
    scf.if %5 {
      %cst_92 = arith.constant 0.000000e+00 : f32
      %97 = vector.broadcast %cst_92 : f32 to vector<1x16x4xf32>
      %c9_93 = arith.constant 9 : index
      %c8_94 = arith.constant 8 : index
      %c0_95 = arith.constant 0 : index
      %98 = vector.load %arg8[%c9_93, %c8_94, %c0_95] : memref<10x25x4xf32, #tpu.memory_space<vmem>>, vector<1x16x4xf32>
      tpu.vector_store %arg8[%c9_93, %c8_94, %c0_95], %97 {strides = array<i32>} : memref<10x25x4xf32, #tpu.memory_space<vmem>>, vector<1x16x4xf32>,
    } else {
    }
    %c0 = arith.constant 0 : index
    %c0_2 = arith.constant 0 : index
    %c0_3 = arith.constant 0 : index
    %c0_4 = arith.constant 0 : index
    %6 = vector.load %arg2[%c0, %c0_2, %c0_3, %c0_4] : memref<1x8x16x4xbf16, #tpu.memory_space<vmem>>, vector<1x8x16x4xbf16>
    %7 = vector.shape_cast %6 : vector<1x8x16x4xbf16> to vector<8x16x4xbf16>
    %8 = arith.extf %7 : vector<8x16x4xbf16> to vector<8x16x4xf32>
    %c1 = arith.constant 1 : index
    %c8 = arith.constant 8 : index
    %c0_5 = arith.constant 0 : index
    %9 = vector.load %arg8[%c1, %c8, %c0_5] : memref<10x25x4xf32, #tpu.memory_space<vmem>>, vector<8x16x4xf32>
    tpu.vector_store %arg8[%c1, %c8, %c0_5], %8 {strides = array<i32>} : memref<10x25x4xf32, #tpu.memory_space<vmem>>, vector<8x16x4xf32>,
    %c0_i32_6 = arith.constant 0 : i32
    %10 = arith.cmpi sgt, %arg1, %c0_i32_6 : i32
    %11 = arith.extui %10 : i1 to i32
    %c0_i32_7 = arith.constant 0 : i32
    %12 = arith.cmpi ne, %11, %c0_i32_7 : i32
    scf.if %12 {
      %c0_92 = arith.constant 0 : index
      %c0_93 = arith.constant 0 : index
      %c0_94 = arith.constant 0 : index
      %c0_95 = arith.constant 0 : index
      %97 = vector.load %arg3[%c0_92, %c0_93, %c0_94, %c0_95] : memref<1x1x16x4xbf16, #tpu.memory_space<vmem>>, vector<1x1x16x4xbf16>
      %98 = vector.shape_cast %97 : vector<1x1x16x4xbf16> to vector<1x16x4xbf16>
      %99 = arith.extf %98 : vector<1x16x4xbf16> to vector<1x16x4xf32>
      %c0_96 = arith.constant 0 : index
      %c8_97 = arith.constant 8 : index
      %c0_98 = arith.constant 0 : index
      %100 = vector.load %arg8[%c0_96, %c8_97, %c0_98] : memref<10x25x4xf32, #tpu.memory_space<vmem>>, vector<1x16x4xf32>
      tpu.vector_store %arg8[%c0_96, %c8_97, %c0_98], %99 {strides = array<i32>} : memref<10x25x4xf32, #tpu.memory_space<vmem>>, vector<1x16x4xf32>,
    } else {
    }
    %c1_i32_8 = arith.constant 1 : i32
    %13 = arith.cmpi slt, %arg1, %c1_i32_8 : i32
    %14 = arith.extui %13 : i1 to i32
    %c0_i32_9 = arith.constant 0 : i32
    %15 = arith.cmpi ne, %14, %c0_i32_9 : i32
    scf.if %15 {
      %c0_92 = arith.constant 0 : index
      %c0_93 = arith.constant 0 : index
      %c0_94 = arith.constant 0 : index
      %c0_95 = arith.constant 0 : index
      %97 = vector.load %arg4[%c0_92, %c0_93, %c0_94, %c0_95] : memref<1x1x16x4xbf16, #tpu.memory_space<vmem>>, vector<1x1x16x4xbf16>
      %98 = vector.shape_cast %97 : vector<1x1x16x4xbf16> to vector<1x16x4xbf16>
      %99 = arith.extf %98 : vector<1x16x4xbf16> to vector<1x16x4xf32>
      %c9_96 = arith.constant 9 : index
      %c8_97 = arith.constant 8 : index
      %c0_98 = arith.constant 0 : index
      %100 = vector.load %arg8[%c9_96, %c8_97, %c0_98] : memref<10x25x4xf32, #tpu.memory_space<vmem>>, vector<1x16x4xf32>
      tpu.vector_store %arg8[%c9_96, %c8_97, %c0_98], %99 {strides = array<i32>} : memref<10x25x4xf32, #tpu.memory_space<vmem>>, vector<1x16x4xf32>,
    } else {
    }
    %cst = arith.constant 0.000000e+00 : f32
    %16 = vector.broadcast %cst : f32 to vector<128x4xf32>
    %c0_10 = arith.constant 0 : index
    %c7 = arith.constant 7 : index
    %c0_11 = arith.constant 0 : index
    %17 = vector.load %arg8[%c0_10, %c7, %c0_11] : memref<10x25x4xf32, #tpu.memory_space<vmem>>, vector<8x16x4xf32>
    %18 = vector.shape_cast %17 : vector<8x16x4xf32> to vector<128x4xf32>
    %19 = arith.truncf %18 : vector<128x4xf32> to vector<128x4xbf16>
    %c0_12 = arith.constant 0 : index
    %c0_13 = arith.constant 0 : index
    %c0_14 = arith.constant 0 : index
    %c0_15 = arith.constant 0 : index
    %20 = vector.load %arg5[%c0_12, %c0_13, %c0_14, %c0_15] : memref<3x3x4x4xbf16, #tpu.memory_space<vmem>>, vector<1x1x4x4xbf16>
    %21 = vector.shape_cast %20 : vector<1x1x4x4xbf16> to vector<4x4xbf16>
    %cst_16 = arith.constant dense<0.000000e+00> : vector<128x4xf32>
    %22 = tpu.matmul %19, %21, %cst_16 {dimension_numbers = #tpu.dot_dimension_numbers<[1], [0], [0], [1], [0, 0, 1, 1], [], []>} : vector<128x4xbf16>, vector<4x4xbf16>, vector<128x4xf32> -> vector<128x4xf32>
    %23 = arith.addf %16, %22 : vector<128x4xf32>
    %c0_17 = arith.constant 0 : index
    %c8_18 = arith.constant 8 : index
    %c0_19 = arith.constant 0 : index
    %24 = vector.load %arg8[%c0_17, %c8_18, %c0_19] : memref<10x25x4xf32, #tpu.memory_space<vmem>>, vector<8x16x4xf32>
    %25 = vector.shape_cast %24 : vector<8x16x4xf32> to vector<128x4xf32>
    %26 = arith.truncf %25 : vector<128x4xf32> to vector<128x4xbf16>
    %c0_20 = arith.constant 0 : index
    %c1_21 = arith.constant 1 : index
    %c0_22 = arith.constant 0 : index
    %c0_23 = arith.constant 0 : index
    %27 = vector.load %arg5[%c0_20, %c1_21, %c0_22, %c0_23] : memref<3x3x4x4xbf16, #tpu.memory_space<vmem>>, vector<1x1x4x4xbf16>
    %28 = vector.shape_cast %27 : vector<1x1x4x4xbf16> to vector<4x4xbf16>
    %cst_24 = arith.constant dense<0.000000e+00> : vector<128x4xf32>
    %29 = tpu.matmul %26, %28, %cst_24 {dimension_numbers = #tpu.dot_dimension_numbers<[1], [0], [0], [1], [0, 0, 1, 1], [], []>} : vector<128x4xbf16>, vector<4x4xbf16>, vector<128x4xf32> -> vector<128x4xf32>
    %30 = arith.addf %23, %29 : vector<128x4xf32>
    %c0_25 = arith.constant 0 : index
    %c9 = arith.constant 9 : index
    %c0_26 = arith.constant 0 : index
    %31 = vector.load %arg8[%c0_25, %c9, %c0_26] : memref<10x25x4xf32, #tpu.memory_space<vmem>>, vector<8x16x4xf32>
    %32 = vector.shape_cast %31 : vector<8x16x4xf32> to vector<128x4xf32>
    %33 = arith.truncf %32 : vector<128x4xf32> to vector<128x4xbf16>
    %c0_27 = arith.constant 0 : index
    %c2 = arith.constant 2 : index
    %c0_28 = arith.constant 0 : index
    %c0_29 = arith.constant 0 : index
    %34 = vector.load %arg5[%c0_27, %c2, %c0_28, %c0_29] : memref<3x3x4x4xbf16, #tpu.memory_space<vmem>>, vector<1x1x4x4xbf16>
    %35 = vector.shape_cast %34 : vector<1x1x4x4xbf16> to vector<4x4xbf16>
    %cst_30 = arith.constant dense<0.000000e+00> : vector<128x4xf32>
    %36 = tpu.matmul %33, %35, %cst_30 {dimension_numbers = #tpu.dot_dimension_numbers<[1], [0], [0], [1], [0, 0, 1, 1], [], []>} : vector<128x4xbf16>, vector<4x4xbf16>, vector<128x4xf32> -> vector<128x4xf32>
    %37 = arith.addf %30, %36 : vector<128x4xf32>
    %c1_31 = arith.constant 1 : index
    %c7_32 = arith.constant 7 : index
    %c0_33 = arith.constant 0 : index
    %38 = vector.load %arg8[%c1_31, %c7_32, %c0_33] : memref<10x25x4xf32, #tpu.memory_space<vmem>>, vector<8x16x4xf32>
    %39 = vector.shape_cast %38 : vector<8x16x4xf32> to vector<128x4xf32>
    %40 = arith.truncf %39 : vector<128x4xf32> to vector<128x4xbf16>
    %c1_34 = arith.constant 1 : index
    %c0_35 = arith.constant 0 : index
    %c0_36 = arith.constant 0 : index
    %c0_37 = arith.constant 0 : index
    %41 = vector.load %arg5[%c1_34, %c0_35, %c0_36, %c0_37] : memref<3x3x4x4xbf16, #tpu.memory_space<vmem>>, vector<1x1x4x4xbf16>
    %42 = vector.shape_cast %41 : vector<1x1x4x4xbf16> to vector<4x4xbf16>
    %cst_38 = arith.constant dense<0.000000e+00> : vector<128x4xf32>
    %43 = tpu.matmul %40, %42, %cst_38 {dimension_numbers = #tpu.dot_dimension_numbers<[1], [0], [0], [1], [0, 0, 1, 1], [], []>} : vector<128x4xbf16>, vector<4x4xbf16>, vector<128x4xf32> -> vector<128x4xf32>
    %44 = arith.addf %37, %43 : vector<128x4xf32>
    %c1_39 = arith.constant 1 : index
    %c8_40 = arith.constant 8 : index
    %c0_41 = arith.constant 0 : index
    %45 = vector.load %arg8[%c1_39, %c8_40, %c0_41] : memref<10x25x4xf32, #tpu.memory_space<vmem>>, vector<8x16x4xf32>
    %46 = vector.shape_cast %45 : vector<8x16x4xf32> to vector<128x4xf32>
    %47 = arith.truncf %46 : vector<128x4xf32> to vector<128x4xbf16>
    %c1_42 = arith.constant 1 : index
    %c1_43 = arith.constant 1 : index
    %c0_44 = arith.constant 0 : index
    %c0_45 = arith.constant 0 : index
    %48 = vector.load %arg5[%c1_42, %c1_43, %c0_44, %c0_45] : memref<3x3x4x4xbf16, #tpu.memory_space<vmem>>, vector<1x1x4x4xbf16>
    %49 = vector.shape_cast %48 : vector<1x1x4x4xbf16> to vector<4x4xbf16>
    %cst_46 = arith.constant dense<0.000000e+00> : vector<128x4xf32>
    %50 = tpu.matmul %47, %49, %cst_46 {dimension_numbers = #tpu.dot_dimension_numbers<[1], [0], [0], [1], [0, 0, 1, 1], [], []>} : vector<128x4xbf16>, vector<4x4xbf16>, vector<128x4xf32> -> vector<128x4xf32>
    %51 = arith.addf %44, %50 : vector<128x4xf32>
    %c1_47 = arith.constant 1 : index
    %c9_48 = arith.constant 9 : index
    %c0_49 = arith.constant 0 : index
    %52 = vector.load %arg8[%c1_47, %c9_48, %c0_49] : memref<10x25x4xf32, #tpu.memory_space<vmem>>, vector<8x16x4xf32>
    %53 = vector.shape_cast %52 : vector<8x16x4xf32> to vector<128x4xf32>
    %54 = arith.truncf %53 : vector<128x4xf32> to vector<128x4xbf16>
    %c1_50 = arith.constant 1 : index
    %c2_51 = arith.constant 2 : index
    %c0_52 = arith.constant 0 : index
    %c0_53 = arith.constant 0 : index
    %55 = vector.load %arg5[%c1_50, %c2_51, %c0_52, %c0_53] : memref<3x3x4x4xbf16, #tpu.memory_space<vmem>>, vector<1x1x4x4xbf16>
    %56 = vector.shape_cast %55 : vector<1x1x4x4xbf16> to vector<4x4xbf16>
    %cst_54 = arith.constant dense<0.000000e+00> : vector<128x4xf32>
    %57 = tpu.matmul %54, %56, %cst_54 {dimension_numbers = #tpu.dot_dimension_numbers<[1], [0], [0], [1], [0, 0, 1, 1], [], []>} : vector<128x4xbf16>, vector<4x4xbf16>, vector<128x4xf32> -> vector<128x4xf32>
    %58 = arith.addf %51, %57 : vector<128x4xf32>
    %c2_55 = arith.constant 2 : index
    %c7_56 = arith.constant 7 : index
    %c0_57 = arith.constant 0 : index
    %59 = vector.load %arg8[%c2_55, %c7_56, %c0_57] : memref<10x25x4xf32, #tpu.memory_space<vmem>>, vector<8x16x4xf32>
    %60 = vector.shape_cast %59 : vector<8x16x4xf32> to vector<128x4xf32>
    %61 = arith.truncf %60 : vector<128x4xf32> to vector<128x4xbf16>
    %c2_58 = arith.constant 2 : index
    %c0_59 = arith.constant 0 : index
    %c0_60 = arith.constant 0 : index
    %c0_61 = arith.constant 0 : index
    %62 = vector.load %arg5[%c2_58, %c0_59, %c0_60, %c0_61] : memref<3x3x4x4xbf16, #tpu.memory_space<vmem>>, vector<1x1x4x4xbf16>
    %63 = vector.shape_cast %62 : vector<1x1x4x4xbf16> to vector<4x4xbf16>
    %cst_62 = arith.constant dense<0.000000e+00> : vector<128x4xf32>
    %64 = tpu.matmul %61, %63, %cst_62 {dimension_numbers = #tpu.dot_dimension_numbers<[1], [0], [0], [1], [0, 0, 1, 1], [], []>} : vector<128x4xbf16>, vector<4x4xbf16>, vector<128x4xf32> -> vector<128x4xf32>
    %65 = arith.addf %58, %64 : vector<128x4xf32>
    %c2_63 = arith.constant 2 : index
    %c8_64 = arith.constant 8 : index
    %c0_65 = arith.constant 0 : index
    %66 = vector.load %arg8[%c2_63, %c8_64, %c0_65] : memref<10x25x4xf32, #tpu.memory_space<vmem>>, vector<8x16x4xf32>
    %67 = vector.shape_cast %66 : vector<8x16x4xf32> to vector<128x4xf32>
    %68 = arith.truncf %67 : vector<128x4xf32> to vector<128x4xbf16>
    %c2_66 = arith.constant 2 : index
    %c1_67 = arith.constant 1 : index
    %c0_68 = arith.constant 0 : index
    %c0_69 = arith.constant 0 : index
    %69 = vector.load %arg5[%c2_66, %c1_67, %c0_68, %c0_69] : memref<3x3x4x4xbf16, #tpu.memory_space<vmem>>, vector<1x1x4x4xbf16>
    %70 = vector.shape_cast %69 : vector<1x1x4x4xbf16> to vector<4x4xbf16>
    %cst_70 = arith.constant dense<0.000000e+00> : vector<128x4xf32>
    %71 = tpu.matmul %68, %70, %cst_70 {dimension_numbers = #tpu.dot_dimension_numbers<[1], [0], [0], [1], [0, 0, 1, 1], [], []>} : vector<128x4xbf16>, vector<4x4xbf16>, vector<128x4xf32> -> vector<128x4xf32>
    %72 = arith.addf %65, %71 : vector<128x4xf32>
    %c2_71 = arith.constant 2 : index
    %c9_72 = arith.constant 9 : index
    %c0_73 = arith.constant 0 : index
    %73 = vector.load %arg8[%c2_71, %c9_72, %c0_73] : memref<10x25x4xf32, #tpu.memory_space<vmem>>, vector<8x16x4xf32>
    %74 = vector.shape_cast %73 : vector<8x16x4xf32> to vector<128x4xf32>
    %75 = arith.truncf %74 : vector<128x4xf32> to vector<128x4xbf16>
    %c2_74 = arith.constant 2 : index
    %c2_75 = arith.constant 2 : index
    %c0_76 = arith.constant 0 : index
    %c0_77 = arith.constant 0 : index
    %76 = vector.load %arg5[%c2_74, %c2_75, %c0_76, %c0_77] : memref<3x3x4x4xbf16, #tpu.memory_space<vmem>>, vector<1x1x4x4xbf16>
    %77 = vector.shape_cast %76 : vector<1x1x4x4xbf16> to vector<4x4xbf16>
    %cst_78 = arith.constant dense<0.000000e+00> : vector<128x4xf32>
    %78 = tpu.matmul %75, %77, %cst_78 {dimension_numbers = #tpu.dot_dimension_numbers<[1], [0], [0], [1], [0, 0, 1, 1], [], []>} : vector<128x4xbf16>, vector<4x4xbf16>, vector<128x4xf32> -> vector<128x4xf32>
    %79 = arith.addf %72, %78 : vector<128x4xf32>
    %cst_79 = arith.constant 0.000000e+00 : f32
    %80 = vector.broadcast %cst_79 : f32 to vector<128x4xf32>
    %81 = arith.maximumf %79, %80 : vector<128x4xf32>
    %82 = arith.truncf %81 : vector<128x4xf32> to vector<128x4xbf16>
    %c0_80 = arith.constant 0 : index
    %c0_81 = arith.constant 0 : index
    %c0_82 = arith.constant 0 : index
    %83 = vector.load %arg6[%c0_80, %c0_81, %c0_82] : memref<1x128x4xbf16, #tpu.memory_space<vmem>>, vector<1x128x4xbf16>
    %84 = vector.shape_cast %83 : vector<1x128x4xbf16> to vector<128x4xbf16>
    %85 = vector.shape_cast %82 : vector<128x4xbf16> to vector<1x128x4xbf16>
    tpu.vector_store %arg6[%c0_80, %c0_81, %c0_82], %85 {strides = array<i32>} : memref<1x128x4xbf16, #tpu.memory_space<vmem>>, vector<1x128x4xbf16>,
    %c0_i32_83 = arith.constant 0 : i32
    %86 = arith.cmpi eq, %arg1, %c0_i32_83 : i32
    %87 = arith.extui %86 : i1 to i32
    %c0_i32_84 = arith.constant 0 : i32
    %88 = arith.cmpi ne, %87, %c0_i32_84 : i32
    scf.if %88 {
      %cst_92 = arith.constant 0.000000e+00 : f32
      %97 = vector.broadcast %cst_92 : f32 to vector<1x4xf32>
      %c0_93 = arith.constant 0 : index
      %c0_94 = arith.constant 0 : index
      %98 = vector.load %arg9[%c0_93, %c0_94] : memref<1x4xf32, #tpu.memory_space<vmem>>, vector<1x4xf32>
      tpu.vector_store %arg9[%c0_93, %c0_94], %97 {strides = array<i32>} : memref<1x4xf32, #tpu.memory_space<vmem>>, vector<1x4xf32>,
    } else {
    }
    %c0_85 = arith.constant 0 : index
    %c0_86 = arith.constant 0 : index
    %89 = vector.load %arg9[%c0_85, %c0_86] : memref<1x4xf32, #tpu.memory_space<vmem>>, vector<1x4xf32>
    %cst_87 = arith.constant dense<0.000000e+00> : vector<4xf32>
    %90 = vector.multi_reduction <add>, %81, %cst_87 [0] : vector<128x4xf32> to vector<4xf32>
    %91 = vector.shape_cast %90 : vector<4xf32> to vector<1x4xf32>
    %92 = arith.addf %89, %91 : vector<1x4xf32>
    %c0_88 = arith.constant 0 : index
    %c0_89 = arith.constant 0 : index
    %93 = vector.load %arg9[%c0_88, %c0_89] : memref<1x4xf32, #tpu.memory_space<vmem>>, vector<1x4xf32>
    tpu.vector_store %arg9[%c0_88, %c0_89], %92 {strides = array<i32>} : memref<1x4xf32, #tpu.memory_space<vmem>>, vector<1x4xf32>,
    %c1_i32_90 = arith.constant 1 : i32
    %94 = arith.cmpi eq, %arg1, %c1_i32_90 : i32
    %95 = arith.extui %94 : i1 to i32
    %c0_i32_91 = arith.constant 0 : i32
    %96 = arith.cmpi ne, %95, %c0_i32_91 : i32
    scf.if %96 {
      %c0_92 = arith.constant 0 : index
      %c0_93 = arith.constant 0 : index
      %97 = vector.load %arg9[%c0_92, %c0_93] : memref<1x4xf32, #tpu.memory_space<vmem>>, vector<1x4xf32>
      %cst_94 = arith.constant 3.906250e-03 : f32
      %98 = vector.broadcast %cst_94 : f32 to vector<1x4xf32>
      %99 = arith.mulf %97, %98 : vector<1x4xf32>
      %c0_95 = arith.constant 0 : index
      %c0_96 = arith.constant 0 : index
      %c0_97 = arith.constant 0 : index
      %100 = vector.load %arg7[%c0_95, %c0_96, %c0_97] : memref<1x1x4xf32, #tpu.memory_space<vmem>>, vector<1x1x4xf32>
      %101 = vector.shape_cast %100 : vector<1x1x4xf32> to vector<1x4xf32>
      %102 = vector.shape_cast %99 : vector<1x4xf32> to vector<1x1x4xf32>
      tpu.vector_store %arg7[%c0_95, %c0_96, %c0_97], %102 {strides = array<i32>} : memref<1x1x4xf32, #tpu.memory_space<vmem>>, vector<1x1x4xf32>,
    } else {
    }
    return
  }
  func.func @transform_0(%arg0: i32, %arg1: i32) -> (i32, i32, i32, i32) {
    %c0_i32 = arith.constant 0 : i32
    %c0_i32_0 = arith.constant 0 : i32
    %c0_i32_1 = arith.constant 0 : i32
    return %arg0, %arg1, %c0_i32, %c0_i32_0 : i32, i32, i32, i32
  }
  func.func @transform_1(%arg0: i32, %arg1: i32) -> (i32, i32, i32, i32) {
    %c8_i32 = arith.constant 8 : i32
    %0 = arith.muli %arg1, %c8_i32 : i32
    %c1_i32 = arith.constant 1 : i32
    %1 = arith.subi %0, %c1_i32 : i32
    %c0_i32 = arith.constant 0 : i32
    %2 = arith.maxsi %1, %c0_i32 : i32
    %c0_i32_0 = arith.constant 0 : i32
    %c0_i32_1 = arith.constant 0 : i32
    %c0_i32_2 = arith.constant 0 : i32
    return %arg0, %2, %c0_i32_0, %c0_i32_1 : i32, i32, i32, i32
  }
  func.func @transform_2(%arg0: i32, %arg1: i32) -> (i32, i32, i32, i32) {
    %c1_i32 = arith.constant 1 : i32
    %0 = arith.addi %arg1, %c1_i32 : i32
    %c8_i32 = arith.constant 8 : i32
    %1 = arith.muli %0, %c8_i32 : i32
    %c15_i32 = arith.constant 15 : i32
    %2 = arith.minsi %1, %c15_i32 : i32
    %c0_i32 = arith.constant 0 : i32
    %c0_i32_0 = arith.constant 0 : i32
    %c0_i32_1 = arith.constant 0 : i32
    return %arg0, %2, %c0_i32, %c0_i32_0 : i32, i32, i32, i32
  }
  func.func @transform_3(%arg0: i32, %arg1: i32) -> (i32, i32, i32, i32) {
    %c0_i32 = arith.constant 0 : i32
    %c0_i32_0 = arith.constant 0 : i32
    %c0_i32_1 = arith.constant 0 : i32
    %c0_i32_2 = arith.constant 0 : i32
    %c0_i32_3 = arith.constant 0 : i32
    return %c0_i32, %c0_i32_0, %c0_i32_1, %c0_i32_2 : i32, i32, i32, i32
  }
  func.func @transform_4(%arg0: i32, %arg1: i32) -> (i32, i32, i32) {
    %c0_i32 = arith.constant 0 : i32
    %c0_i32_0 = arith.constant 0 : i32
    return %arg0, %arg1, %c0_i32 : i32, i32, i32
  }
  func.func @transform_5(%arg0: i32, %arg1: i32) -> (i32, i32, i32) {
    %c0_i32 = arith.constant 0 : i32
    %c0_i32_0 = arith.constant 0 : i32
    %c0_i32_1 = arith.constant 0 : i32
    return %arg0, %c0_i32, %c0_i32_0 : i32, i32, i32
  }
}

module attributes {stable_mosaic.version = 11 : i64} {
  func.func @_scale_conv_res_relu_kernel(%arg0: i32, %arg1: i32, %arg2: memref<1x128x4xbf16, #tpu.memory_space<vmem>>, %arg3: memref<1x1x4xf32, #tpu.memory_space<vmem>>, %arg4: memref<4x16xbf16, #tpu.memory_space<vmem>>, %arg5: memref<1x16xf32, #tpu.memory_space<vmem>>, %arg6: memref<1x128x16xf32, #tpu.memory_space<vmem>>, %arg7: memref<1x128x16xf32, #tpu.memory_space<vmem>>) attributes {dimension_semantics = [#tpu.dimension_semantics<parallel>, #tpu.dimension_semantics<parallel>], iteration_bounds = array<i64: 2, 2>, scalar_prefetch = 0 : i64, scratch_operands = 0 : i64, tpu.core_type = #tpu.core_type<tc>, window_params = [{transform_indices = @transform_0, window_bounds = array<i64: 1, 128, 4>}, {transform_indices = @transform_1, window_bounds = array<i64: 1, 1, 4>}, {pipeline_mode = #tpu.pipeline_mode<synchronous>, transform_indices = @transform_2, window_bounds = array<i64: 4, 16>}, {pipeline_mode = #tpu.pipeline_mode<synchronous>, transform_indices = @transform_3, window_bounds = array<i64: 1, 16>}, {transform_indices = @transform_4, window_bounds = array<i64: 1, 128, 16>}, {transform_indices = @transform_5, window_bounds = array<i64: 1, 128, 16>}]} {
    %c0 = arith.constant 0 : index
    %c0_0 = arith.constant 0 : index
    %c0_1 = arith.constant 0 : index
    %0 = vector.load %arg2[%c0, %c0_0, %c0_1] : memref<1x128x4xbf16, #tpu.memory_space<vmem>>, vector<1x128x4xbf16>
    %1 = vector.shape_cast %0 : vector<1x128x4xbf16> to vector<128x4xbf16>
    %2 = arith.extf %1 : vector<128x4xbf16> to vector<128x4xf32>
    %c0_2 = arith.constant 0 : index
    %c0_3 = arith.constant 0 : index
    %c0_4 = arith.constant 0 : index
    %3 = vector.load %arg3[%c0_2, %c0_3, %c0_4] : memref<1x1x4xf32, #tpu.memory_space<vmem>>, vector<1x1x4xf32>
    %4 = vector.shape_cast %3 : vector<1x1x4xf32> to vector<1x4xf32>
    %5 = vector.broadcast %4 : vector<1x4xf32> to vector<128x4xf32>
    %6 = arith.mulf %2, %5 : vector<128x4xf32>
    %7 = arith.truncf %6 : vector<128x4xf32> to vector<128x4xbf16>
    %c0_5 = arith.constant 0 : index
    %c0_6 = arith.constant 0 : index
    %8 = vector.load %arg4[%c0_5, %c0_6] : memref<4x16xbf16, #tpu.memory_space<vmem>>, vector<4x16xbf16>
    %cst = arith.constant dense<0.000000e+00> : vector<128x16xf32>
    %9 = tpu.matmul %7, %8, %cst {dimension_numbers = #tpu.dot_dimension_numbers<[1], [0], [0], [1], [0, 0, 1, 1], [], []>} : vector<128x4xbf16>, vector<4x16xbf16>, vector<128x16xf32> -> vector<128x16xf32>
    %c0_7 = arith.constant 0 : index
    %c0_8 = arith.constant 0 : index
    %10 = vector.load %arg5[%c0_7, %c0_8] : memref<1x16xf32, #tpu.memory_space<vmem>>, vector<1x16xf32>
    %11 = vector.broadcast %10 : vector<1x16xf32> to vector<128x16xf32>
    %12 = arith.addf %9, %11 : vector<128x16xf32>
    %c0_9 = arith.constant 0 : index
    %c0_10 = arith.constant 0 : index
    %c0_11 = arith.constant 0 : index
    %13 = vector.load %arg6[%c0_9, %c0_10, %c0_11] : memref<1x128x16xf32, #tpu.memory_space<vmem>>, vector<1x128x16xf32>
    %14 = vector.shape_cast %13 : vector<1x128x16xf32> to vector<128x16xf32>
    %15 = arith.addf %12, %14 : vector<128x16xf32>
    %cst_12 = arith.constant 0.000000e+00 : f32
    %16 = vector.broadcast %cst_12 : f32 to vector<128x16xf32>
    %17 = arith.maximumf %15, %16 : vector<128x16xf32>
    %c0_13 = arith.constant 0 : index
    %c0_14 = arith.constant 0 : index
    %c0_15 = arith.constant 0 : index
    %18 = vector.load %arg7[%c0_13, %c0_14, %c0_15] : memref<1x128x16xf32, #tpu.memory_space<vmem>>, vector<1x128x16xf32>
    %19 = vector.shape_cast %18 : vector<1x128x16xf32> to vector<128x16xf32>
    %20 = vector.shape_cast %17 : vector<128x16xf32> to vector<1x128x16xf32>
    tpu.vector_store %arg7[%c0_13, %c0_14, %c0_15], %20 {strides = array<i32>} : memref<1x128x16xf32, #tpu.memory_space<vmem>>, vector<1x128x16xf32>,
    return
  }
  func.func @transform_0(%arg0: i32, %arg1: i32) -> (i32, i32, i32) {
    %c0_i32 = arith.constant 0 : i32
    %c0_i32_0 = arith.constant 0 : i32
    return %arg0, %arg1, %c0_i32 : i32, i32, i32
  }
  func.func @transform_1(%arg0: i32, %arg1: i32) -> (i32, i32, i32) {
    %c0_i32 = arith.constant 0 : i32
    %c0_i32_0 = arith.constant 0 : i32
    %c0_i32_1 = arith.constant 0 : i32
    return %arg0, %c0_i32, %c0_i32_0 : i32, i32, i32
  }
  func.func @transform_2(%arg0: i32, %arg1: i32) -> (i32, i32) {
    %c0_i32 = arith.constant 0 : i32
    %c0_i32_0 = arith.constant 0 : i32
    %c0_i32_1 = arith.constant 0 : i32
    return %c0_i32, %c0_i32_0 : i32, i32
  }
  func.func @transform_3(%arg0: i32, %arg1: i32) -> (i32, i32) {
    %c0_i32 = arith.constant 0 : i32
    %c0_i32_0 = arith.constant 0 : i32
    %c0_i32_1 = arith.constant 0 : i32
    return %c0_i32, %c0_i32_0 : i32, i32
  }
  func.func @transform_4(%arg0: i32, %arg1: i32) -> (i32, i32, i32) {
    %c0_i32 = arith.constant 0 : i32
    %c0_i32_0 = arith.constant 0 : i32
    return %arg0, %arg1, %c0_i32 : i32, i32, i32
  }
  func.func @transform_5(%arg0: i32, %arg1: i32) -> (i32, i32, i32) {
    %c0_i32 = arith.constant 0 : i32
    %c0_i32_0 = arith.constant 0 : i32
    return %arg0, %arg1, %c0_i32 : i32, i32, i32
  }
}

</mosaic_0001>

<llo_original>
// kernel: bottleneck_forward.6
$region0: #{bottleneck_forward.6}
  #allocation0 [shape = 'u32[]', space=smem, size = 0x4, offset = 0x4, fixed_abs, tag = 'smem constant byte address 0x4 - core index']
  #allocation1 [shape = 'u32[144,128]{1,0:T(1,128)}', space=vmem, size = 0x12000, scoped, tag = 'internal scratch']
  %s0 = inlined_call_operand.vmem [shape: f32[2,1,4], index: 0, kind: input, shape index: {}]
  %s1 = inlined_call_operand.vmem [shape: f32[4,32], index: 1, kind: input, shape index: {}]
  %s2 = inlined_call_operand.vmem [shape: f32[1,32], index: 2, kind: input, shape index: {}]
  %s3 = inlined_call_operand.vmem [shape: f32[32,4], index: 3, kind: input, shape index: {}]
  %s4 = inlined_call_operand.vmem [shape: f32[1,4], index: 4, kind: input, shape index: {}]
  %s5 = inlined_call_operand.vmem [shape: f32[2,1,4], index: 5, kind: output, shape index: {}]
  %s6 = sld [smem:[#allocation0]]
  $region53: #{bottleneck_forward.6} parent=0
    _
  %s8 = ssub.s32 1, %s6
  %s9 = scalar_select 0, %s8, %s6
  loop: start=0, step=1, limit=4
  $region2: #{bottleneck_forward.6} parent=0 // loop_pre_header
    _
  $region3: #{bottleneck_forward.6} parent=0 // loop_header
    %s11 = sphi 0, %s15
    %p12 = scmp.ge.s32.totalorder %s11, 4
    %s21 = sphi 0, %s23
    %s24 = sphi 0, %s21
    %s25 = sphi 0, %s24
    %s41 = sphi 0, %s25
    %s45 = sphi 0, %s45
    %s47 = sphi 0, %s45
    %s48 = sphi 0, %s47
    %s62 = sphi 0, %s48
    %s66 = sphi 0, %s66
    %s68 = sphi 0, %s66
    %s69 = sphi 0, %s68
    %s83 = sphi 0, %s69
    %s87 = sphi 0, %s87
    %s89 = sphi 0, %s87
    %s90 = sphi 0, %s89
    %s104 = sphi 0, %s90
    %s108 = sphi 0, %s108
    %s110 = sphi 0, %s108
    %s111 = sphi 0, %s110
    %s125 = sphi 0, %s111
    %s131 = sphi 0, %s133
    %s134 = sphi 0, %s131
    %s135 = sphi 0, %s134
    %s151 = sphi 0, %s135
  $region4: #{bottleneck_forward.6} parent=0 // loop_header_branch
    %14 = sbr.rel (%p12) target = $region8
  $region5: #{bottleneck_forward.6} parent=0 // loop_body
    %s16 = ssub.s32 %s11, 1
    %s17 = ssub.s32 %s11, 2
    %s18 = sadd.s32 %s11, 1
    %s19 = ssub.s32 %s11, %s18
    %p20 = scmp.eq.s32.totalorder %s19, 0
    %s22 = sadd.s32 %s21, 1
    %s23 = scalar_select %p20, %s21, %s22
    %p26 = pneg %p20
    %p27 = scmp.eq.s32.totalorder %s11, 1
    %p28 = por %p26, %p27
    %p29 = scmp.ne.s32.totalorder %s21, %s24
    %p30 = scmp.eq.s32.totalorder %s11, 0
    %p31 = por %p29, %p30
    %p32 = scmp.ne.s32.totalorder %s21, %s24
    %p33 = scmp.eq.s32.totalorder %s16, 1
    %p34 = por %p32, %p33
    %p35 = scmp.ne.s32.totalorder %s24, %s25
    %p36 = scmp.eq.s32.totalorder %s16, 0
    %p37 = por %p35, %p36
    %p38 = scmp.ne.s32.totalorder %s24, %s25
    %p39 = scmp.eq.s32.totalorder %s17, 1
    %p40 = por %p38, %p39
    %p42 = scmp.ne.s32.totalorder %s25, %s41
    %p43 = scmp.eq.s32.totalorder %s17, 0
    %p44 = por %p42, %p43
    %s46 = sadd.s32 %s45, 1
    %p49 = scmp.eq.s32.totalorder %s11, 1
    %p50 = scmp.ne.s32.totalorder %s45, %s47
    %p51 = scmp.eq.s32.totalorder %s11, 0
    %p52 = por %p50, %p51
    %p53 = scmp.ne.s32.totalorder %s45, %s47
    %p54 = scmp.eq.s32.totalorder %s16, 1
    %p55 = por %p53, %p54
    %p56 = scmp.ne.s32.totalorder %s47, %s48
    %p57 = scmp.eq.s32.totalorder %s16, 0
    %p58 = por %p56, %p57
    %p59 = scmp.ne.s32.totalorder %s47, %s48
    %p60 = scmp.eq.s32.totalorder %s17, 1
    %p61 = por %p59, %p60
    %p63 = scmp.ne.s32.totalorder %s48, %s62
    %p64 = scmp.eq.s32.totalorder %s17, 0
    %p65 = por %p63, %p64
    %s67 = sadd.s32 %s66, 1
    %p70 = scmp.eq.s32.totalorder %s11, 1
    %p71 = scmp.ne.s32.totalorder %s66, %s68
    %p72 = scmp.eq.s32.totalorder %s11, 0
    %p73 = por %p71, %p72
    %p74 = scmp.ne.s32.totalorder %s66, %s68
    %p75 = scmp.eq.s32.totalorder %s16, 1
    %p76 = por %p74, %p75
    %p77 = scmp.ne.s32.totalorder %s68, %s69
    %p78 = scmp.eq.s32.totalorder %s16, 0
    %p79 = por %p77, %p78
    %p80 = scmp.ne.s32.totalorder %s68, %s69
    %p81 = scmp.eq.s32.totalorder %s17, 1
    %p82 = por %p80, %p81
    %p84 = scmp.ne.s32.totalorder %s69, %s83
    %p85 = scmp.eq.s32.totalorder %s17, 0
    %p86 = por %p84, %p85
    %s88 = sadd.s32 %s87, 1
    %p91 = scmp.eq.s32.totalorder %s11, 1
    %p92 = scmp.ne.s32.totalorder %s87, %s89
    %p93 = scmp.eq.s32.totalorder %s11, 0
    %p94 = por %p92, %p93
    %p95 = scmp.ne.s32.totalorder %s87, %s89
    %p96 = scmp.eq.s32.totalorder %s16, 1
    %p97 = por %p95, %p96
    %p98 = scmp.ne.s32.totalorder %s89, %s90
    %p99 = scmp.eq.s32.totalorder %s16, 0
    %p100 = por %p98, %p99
    %p101 = scmp.ne.s32.totalorder %s89, %s90
    %p102 = scmp.eq.s32.totalorder %s17, 1
    %p103 = por %p101, %p102
    %p105 = scmp.ne.s32.totalorder %s90, %s104
    %p106 = scmp.eq.s32.totalorder %s17, 0
    %p107 = por %p105, %p106
    %s109 = sadd.s32 %s108, 1
    %p112 = scmp.eq.s32.totalorder %s11, 1
    %p113 = scmp.ne.s32.totalorder %s108, %s110
    %p114 = scmp.eq.s32.totalorder %s11, 0
    %p115 = por %p113, %p114
    %p116 = scmp.ne.s32.totalorder %s108, %s110
    %p117 = scmp.eq.s32.totalorder %s16, 1
    %p118 = por %p116, %p117
    %p119 = scmp.ne.s32.totalorder %s110, %s111
    %p120 = scmp.eq.s32.totalorder %s16, 0
    %p121 = por %p119, %p120
    %p122 = scmp.ne.s32.totalorder %s110, %s111
    %p123 = scmp.eq.s32.totalorder %s17, 1
    %p124 = por %p122, %p123
    %p126 = scmp.ne.s32.totalorder %s111, %s125
    %p127 = scmp.eq.s32.totalorder %s17, 0
    %p128 = por %p126, %p127
    %s129 = ssub.s32 %s11, %s18
    %p130 = scmp.eq.s32.totalorder %s129, 0
    %s132 = sadd.s32 %s131, 1
    %s133 = scalar_select %p130, %s131, %s132
    %p136 = pneg %p130
    %p137 = scmp.eq.s32.totalorder %s11, 1
    %p138 = por %p136, %p137
    %p139 = scmp.ne.s32.totalorder %s131, %s134
    %p140 = scmp.eq.s32.totalorder %s11, 0
    %p141 = por %p139, %p140
    %p142 = scmp.ne.s32.totalorder %s131, %s134
    %p143 = scmp.eq.s32.totalorder %s16, 1
    %p144 = por %p142, %p143
    %p145 = scmp.ne.s32.totalorder %s134, %s135
    %p146 = scmp.eq.s32.totalorder %s16, 0
    %p147 = por %p145, %p146
    %p148 = scmp.ne.s32.totalorder %s134, %s135
    %p149 = scmp.eq.s32.totalorder %s17, 1
    %p150 = por %p148, %p149
    %p152 = scmp.ne.s32.totalorder %s135, %s151
    %p153 = scmp.eq.s32.totalorder %s17, 0
    %p154 = por %p152, %p153
    %p155 = scmp.le.s32.totalorder 1, %s11
    %p156 = scmp.lt.s32.totalorder %s11, 3
    %p157 = pnand %p155, %p156
    %p158 = pneg %p157
    // Predicated region
    $region9: #{bottleneck_forward.6} parent=5 // pred_check
      _
    $region10: #{bottleneck_forward.6} parent=5 // pred_check_branch
      %160 = sbr.rel (%p157) target = $region12
    $region11: #{bottleneck_forward.6} parent=5 // pred_region
      %s161 = ssub.s32 %s11, 1
      // Predicated region
      $region13: #{bottleneck_forward.6} parent=11 // pred_check
        %p162 = pneg %p58
      $region14: #{bottleneck_forward.6} parent=11 // pred_check_branch
        %164 = sbr.rel (%p162) target = $region16
      $region15: #{bottleneck_forward.6} parent=11 // pred_region
        _
      $region16: #{bottleneck_forward.6} parent=11 // pred_fallthru
        _
      // Predicated region
      $region17: #{bottleneck_forward.6} parent=11 // pred_check
        %p165 = pneg %p79
      $region18: #{bottleneck_forward.6} parent=11 // pred_check_branch
        %167 = sbr.rel (%p165) target = $region20
      $region19: #{bottleneck_forward.6} parent=11 // pred_region
        _
      $region20: #{bottleneck_forward.6} parent=11 // pred_fallthru
        _
      // Predicated region
      $region21: #{bottleneck_forward.6} parent=11 // pred_check
        %p168 = pneg %p100
      $region22: #{bottleneck_forward.6} parent=11 // pred_check_branch
        %170 = sbr.rel (%p168) target = $region24
      $region23: #{bottleneck_forward.6} parent=11 // pred_region
        _
      $region24: #{bottleneck_forward.6} parent=11 // pred_fallthru
        _
      // Predicated region
      $region25: #{bottleneck_forward.6} parent=11 // pred_check
        %p171 = pneg %p121
      $region26: #{bottleneck_forward.6} parent=11 // pred_check_branch
        %173 = sbr.rel (%p171) target = $region28
      $region27: #{bottleneck_forward.6} parent=11 // pred_region
        _
      $region28: #{bottleneck_forward.6} parent=11 // pred_fallthru
        _
    $region12: #{bottleneck_forward.6} parent=5 // pred_fallthru
      _
    %p174 = scmp.lt.s32.totalorder %s11, 2
    // Predicated region
    $region29: #{bottleneck_forward.6} parent=5 // pred_check
      %p175 = pneg %p174
    $region30: #{bottleneck_forward.6} parent=5 // pred_check_branch
      %177 = sbr.rel (%p175) target = $region32
    $region31: #{bottleneck_forward.6} parent=5 // pred_region
      // Predicated region
      $region33: #{bottleneck_forward.6} parent=31 // pred_check
        %p178 = pneg %p31
      $region34: #{bottleneck_forward.6} parent=31 // pred_check_branch
        %180 = sbr.rel (%p178) target = $region36
      $region35: #{bottleneck_forward.6} parent=31 // pred_region
        %p181 = scmp.lt.s32.totalorder %s11, 1
        %s182 = scalar_select %p181, %s11, 1
        %s183 = scalar_lea.vmem %s0, %s182
      $region36: #{bottleneck_forward.6} parent=31 // pred_fallthru
        _
    $region32: #{bottleneck_forward.6} parent=5 // pred_fallthru
      _
    %p184 = scmp.le.s32.totalorder 1, %s11
    %p185 = scmp.lt.s32.totalorder %s11, 3
    %p186 = pnand %p184, %p185
    %p187 = pneg %p186
    // Predicated region
    $region37: #{bottleneck_forward.6} parent=5 // pred_check
      _
    $region38: #{bottleneck_forward.6} parent=5 // pred_check_branch
      %189 = sbr.rel (%p186) target = $region40
    $region39: #{bottleneck_forward.6} parent=5 // pred_region
      %s190 = ssub.s32 %s11, 1
      %p191 = scmp.lt.s32.totalorder %s16, 1
      %s192 = scalar_select %p191, %s16, 1
      %s193 = scalar_lea.vmem %s0, %s192
      %p194 = pneg %p37
      %p195 = pneg %p34
      %p196 = pneg %p58
      %p197 = pneg %p55
      %p198 = pneg %p79
      %p199 = pneg %p76
      %p200 = pneg %p100
      %p201 = pneg %p97
      %p202 = pneg %p121
      %p203 = pneg %p118
      %p204 = pneg %p147
      %p205 = pneg %p144
      %p206 = scmp.lt.s32.totalorder %s16, 1
      %s207 = scalar_select %p206, %s16, 1
      %s208 = scalar_lea.vmem %s5, %s207
      %p209 = scmp.lt.s32.totalorder %s16, 1
      %s210 = scalar_select %p209, %s16, 1
      %s211 = scalar_lea.vmem %s0, %s210
      %p212 = scmp.lt.s32.totalorder %s16, 1
      %s213 = scalar_select %p212, %s16, 1
      %s214 = scalar_lea.vmem %s5, %s213
      %v215 = vld [vmem:[%s211] sm:$0x1]
      %v216 = vld [vmem:[%s1] sm:$0xf]
      %v217 = vld [vmem:[%s2] sm:$0x1]
      %vm218 = vcmask 31744
      %v220 = vsel %vm218, %v215, 0
      %vm222 = vcmask 1043456
      %v224 = vsel %vm222, %v216, 0
      %226 = vmatprep.subr.mxu0 0.0
      %227 = vmatpush1.msra.mxu0 %v224
      %228 = vmatprep.subr.mxu0 0.0
      %229 = vmatpush1.msra.mxu0 0.0
      %230 = vmatprep.subr.mxu0 0.0
      %231 = vmatpush1.msra.mxu0 0.0
      %232 = vmatprep.subr.mxu0 0.0
      %233 = vmatpush1.msra.mxu0 0.0
      %234 = vmatprep.subr.mxu0 0.0
      %235 = vmatpush1.msra.mxu0 0.0
      %236 = vmatprep.subr.mxu0 0.0
      %237 = vmatpush1.msra.mxu0 0.0
      %238 = vmatprep.subr.mxu0 0.0
      %239 = vmatpush1.msra.mxu0 0.0
      %240 = vmatprep.subr.mxu0 0.0
      %241 = vmatpush1.msra.mxu0 0.0
      %242 = vmatprep.subr.mxu0 0.0
      %243 = vmatpush1.msra.mxu0 0.0
      %244 = vmatprep.subr.mxu0 0.0
      %245 = vmatpush1.msra.mxu0 0.0
      %246 = vmatprep.subr.mxu0 0.0
      %247 = vmatpush1.msra.mxu0 0.0
      %248 = vmatprep.subr.mxu0 0.0
      %249 = vmatpush1.msra.mxu0 0.0
      %250 = vmatprep.subr.mxu0 0.0
      %251 = vmatpush1.msra.mxu0 0.0
      %252 = vmatprep.subr.mxu0 0.0
      %253 = vmatpush1.msra.mxu0 0.0
      %254 = vmatprep.subr.mxu0 0.0
      %255 = vmatpush1.msra.mxu0 0.0
      %256 = vmatprep.subr.mxu0 0.0
      %257 = vmatpush1.msra.mxu0 0.0
      %258 = vmatprep.subr.mxu0 0.0
      %259 = vmatpush1.msra.mxu0 0.0
      %260 = vmatprep.subr.mxu0 0.0
      %261 = vmatpush1.msra.mxu0 0.0
      %262 = vmatprep.subr.mxu0 0.0
      %263 = vmatpush1.msra.mxu0 0.0
      %264 = vmatprep.subr.mxu0 0.0
      %265 = vmatpush1.msra.mxu0 0.0
      %266 = vmatprep.subr.mxu0 0.0
      %267 = vmatpush1.msra.mxu0 0.0
      %268 = vmatprep.subr.mxu0 0.0
      %269 = vmatpush1.msra.mxu0 0.0
      %270 = vmatprep.subr.mxu0 0.0
      %271 = vmatpush1.msra.mxu0 0.0
      %272 = vmatprep.subr.mxu0 0.0
      %273 = vmatpush1.msra.mxu0 0.0
      %274 = vmatprep.subr.mxu0 0.0
      %275 = vmatpush1.msra.mxu0 0.0
      %276 = vmatprep.subr.mxu0 0.0
      %277 = vmatpush1.msra.mxu0 0.0
      %278 = vmatprep.subr.mxu0 0.0
      %279 = vmatpush1.msra.mxu0 0.0
      %280 = vmatprep.subr.mxu0 0.0
      %281 = vmatpush1.msra.mxu0 0.0
      %282 = vmatprep.subr.mxu0 0.0
      %283 = vmatpush1.msra.mxu0 0.0
      %284 = vmatprep.subr.mxu0 0.0
      %285 = vmatpush1.msra.mxu0 0.0
      %286 = vmatprep.subr.mxu0 0.0
      %287 = vmatpush1.msra.mxu0 0.0
      %288 = vmatprep.subr.mxu0 0.0
      %289 = vmatpush1.msra.mxu0 0.0
      %290 = vmatprep.mubr.f32.mxu0 0.0
      %291 = vmatmul.mubr.f32.gmra.mrb[0].mxu0 %v220
      %v292 = vpop.f32.mrb[0].mxu0
      %v293 = vadd.f32 %v217, %v292
      %v294 = vpop.f32.mrb[0].mxu0
      %295 = vdwg.mxu0
      %v296 = vmax.f32 %v293, 0.0
      %v297 = vld [vmem:[%s3] sm:$0xff]
      %v298 = vld [vmem:[%s3 + $0x8] sm:$0xff]
      %v299 = vld [vmem:[%s3 + $0x10] sm:$0xff]
      %v300 = vld [vmem:[%s3 + $0x18] sm:$0xff]
      %v301 = vld [vmem:[%s4] sm:$0x1]
      %vm302 = vcmask 261120
      %v304 = vsel %vm302, %v296, 0
      %306 = vmatprep.subr.mxu0 0.0
      %307 = vmatpush1.msra.mxu0 %v297
      %308 = vmatprep.subr.mxu0 0.0
      %309 = vmatpush1.msra.mxu0 %v298
      %310 = vmatprep.subr.mxu0 0.0
      %311 = vmatpush1.msra.mxu0 %v299
      %312 = vmatprep.subr.mxu0 0.0
      %313 = vmatpush1.msra.mxu0 %v300
      %314 = vmatprep.subr.mxu0 0.0
      %315 = vmatpush1.msra.mxu0 0.0
      %316 = vmatprep.subr.mxu0 0.0
      %317 = vmatpush1.msra.mxu0 0.0
      %318 = vmatprep.subr.mxu0 0.0
      %319 = vmatpush1.msra.mxu0 0.0
      %320 = vmatprep.subr.mxu0 0.0
      %321 = vmatpush1.msra.mxu0 0.0
      %322 = vmatprep.subr.mxu0 0.0
      %323 = vmatpush1.msra.mxu0 0.0
      %324 = vmatprep.subr.mxu0 0.0
      %325 = vmatpush1.msra.mxu0 0.0
      %326 = vmatprep.subr.mxu0 0.0
      %327 = vmatpush1.msra.mxu0 0.0
      %328 = vmatprep.subr.mxu0 0.0
      %329 = vmatpush1.msra.mxu0 0.0
      %330 = vmatprep.subr.mxu0 0.0
      %331 = vmatpush1.msra.mxu0 0.0
      %332 = vmatprep.subr.mxu0 0.0
      %333 = vmatpush1.msra.mxu0 0.0
      %334 = vmatprep.subr.mxu0 0.0
      %335 = vmatpush1.msra.mxu0 0.0
      %336 = vmatprep.subr.mxu0 0.0
      %337 = vmatpush1.msra.mxu0 0.0
      %338 = vmatprep.subr.mxu0 0.0
      %339 = vmatpush1.msra.mxu0 0.0
      %340 = vmatprep.subr.mxu0 0.0
      %341 = vmatpush1.msra.mxu0 0.0
      %342 = vmatprep.subr.mxu0 0.0
      %343 = vmatpush1.msra.mxu0 0.0
      %344 = vmatprep.subr.mxu0 0.0
      %345 = vmatpush1.msra.mxu0 0.0
      %346 = vmatprep.subr.mxu0 0.0
      %347 = vmatpush1.msra.mxu0 0.0
      %348 = vmatprep.subr.mxu0 0.0
      %349 = vmatpush1.msra.mxu0 0.0
      %350 = vmatprep.subr.mxu0 0.0
      %351 = vmatpush1.msra.mxu0 0.0
      %352 = vmatprep.subr.mxu0 0.0
      %353 = vmatpush1.msra.mxu0 0.0
      %354 = vmatprep.subr.mxu0 0.0
      %355 = vmatpush1.msra.mxu0 0.0
      %356 = vmatprep.subr.mxu0 0.0
      %357 = vmatpush1.msra.mxu0 0.0
      %358 = vmatprep.subr.mxu0 0.0
      %359 = vmatpush1.msra.mxu0 0.0
      %360 = vmatprep.subr.mxu0 0.0
      %361 = vmatpush1.msra.mxu0 0.0
      %362 = vmatprep.subr.mxu0 0.0
      %363 = vmatpush1.msra.mxu0 0.0
      %364 = vmatprep.subr.mxu0 0.0
      %365 = vmatpush1.msra.mxu0 0.0
      %366 = vmatprep.subr.mxu0 0.0
      %367 = vmatpush1.msra.mxu0 0.0
      %368 = vmatprep.subr.mxu0 0.0
      %369 = vmatpush1.msra.mxu0 0.0
      %370 = vmatprep.mubr.f32.mxu0 0.0
      %371 = vmatmul.mubr.f32.gmra.mrb[0].mxu0 %v304
      %v372 = vpop.f32.mrb[0].mxu0
      %v373 = vadd.f32 %v301, %v372
      %v374 = vpop.f32.mrb[0].mxu0
      %375 = vdwg.mxu0
      %v376 = vsub.f32 0.0, %v373
      %v377 = vmul.f32 %v376, 1.442695
      %v378 = vpow.pop %v377
      %v379 = vadd.f32 %v378, 1.0
      %v380 = vrcp.pop %v379
      %vm381 = vcmask 24576
      %382 = vst.msk [vmem:[%s214] sm:$0x1] %vm381, %v380
      %p383 = scmp.lt.s32.totalorder %s16, 1
      %s384 = scalar_select %p383, %s16, 1
      %s385 = scalar_lea.vmem %s5, %s384
      // Predicated region
      $region41: #{bottleneck_forward.6} parent=39 // pred_check
        %p386 = pneg %p144
      $region42: #{bottleneck_forward.6} parent=39 // pred_check_branch
        %388 = sbr.rel (%p386) target = $region44
      $region43: #{bottleneck_forward.6} parent=39 // pred_region
        _
      $region44: #{bottleneck_forward.6} parent=39 // pred_fallthru
        _
    $region40: #{bottleneck_forward.6} parent=5 // pred_fallthru
      _
    %p389 = scmp.le.s32.totalorder 2, %s11
    // Predicated region
    $region45: #{bottleneck_forward.6} parent=5 // pred_check
      %p390 = pneg %p389
    $region46: #{bottleneck_forward.6} parent=5 // pred_check_branch
      %392 = sbr.rel (%p390) target = $region48
    $region47: #{bottleneck_forward.6} parent=5 // pred_region
      %s393 = ssub.s32 %s11, 2
      // Predicated region
      $region49: #{bottleneck_forward.6} parent=47 // pred_check
        %p394 = pneg %p150
      $region50: #{bottleneck_forward.6} parent=47 // pred_check_branch
        %396 = sbr.rel (%p394) target = $region52
      $region51: #{bottleneck_forward.6} parent=47 // pred_region
        %p397 = scmp.lt.s32.totalorder %s17, 1
        %s398 = scalar_select %p397, %s17, 1
        %s399 = scalar_lea.vmem %s5, %s398
      $region52: #{bottleneck_forward.6} parent=47 // pred_fallthru
        _
    $region48: #{bottleneck_forward.6} parent=5 // pred_fallthru
      _
  $region6: #{bottleneck_forward.6} parent=0 // loop_footer
    %s15 = sadd.s32 1, %s11
  $region7: #{bottleneck_forward.6} parent=0 // loop_footer_branch
    %10 = sbr.rel target = $region3
  $region8: #{bottleneck_forward.6} parent=0 // loop_exit
    _

// kernel: bottleneck_forward.4
$region0: #{bottleneck_forward.4}
  #allocation0 [shape = 'u32[]', space=smem, size = 0x4, offset = 0x4, fixed_abs, tag = 'smem constant byte address 0x4 - core index']
  #allocation1 [shape = 'u32[144,128]{1,0:T(1,128)}', space=vmem, size = 0x12000, scoped, tag = 'internal scratch']
  %s0 = inlined_call_operand.vmem [shape: f32[512,16], index: 0, kind: input, shape index: {}]
  %s1 = inlined_call_operand.vmem [shape: bf16[16,4], index: 1, kind: input, shape index: {}]
  %s2 = inlined_call_operand.vmem [shape: f32[1,4], index: 2, kind: input, shape index: {}]
  %s3 = inlined_call_operand.vmem [shape: bf16[512,4], index: 3, kind: output, shape index: {}]
  %s4 = sld [smem:[#allocation0]]
  $region22: #{bottleneck_forward.4} parent=0
    _
  %s6 = ssub.s32 1, %s4
  %s7 = scalar_select 0, %s6, %s4
  // Predicated region
  $region2: #{bottleneck_forward.4} parent=0 // pred_check
    _
  $region3: #{bottleneck_forward.4} parent=0 // pred_check_branch
    %9 = sbr.rel (0) target = $region5
  $region4: #{bottleneck_forward.4} parent=0 // pred_region
    _
  $region5: #{bottleneck_forward.4} parent=0 // pred_fallthru
    _
  // Predicated region
  $region6: #{bottleneck_forward.4} parent=0 // pred_check
    _
  $region7: #{bottleneck_forward.4} parent=0 // pred_check_branch
    %11 = sbr.rel (0) target = $region9
  $region8: #{bottleneck_forward.4} parent=0 // pred_region
    _
  $region9: #{bottleneck_forward.4} parent=0 // pred_fallthru
    _
  // Predicated region
  $region10: #{bottleneck_forward.4} parent=0 // pred_check
    _
  $region11: #{bottleneck_forward.4} parent=0 // pred_check_branch
    %13 = sbr.rel (0) target = $region13
  $region12: #{bottleneck_forward.4} parent=0 // pred_region
    _
  $region13: #{bottleneck_forward.4} parent=0 // pred_fallthru
    _
  %v15 = vld [vmem:[%s0] sm:$0xff]
  %v16 = vld [vmem:[%s0 + $0x8] sm:$0xff]
  %v17 = vld [vmem:[%s0 + $0x10] sm:$0xff]
  %v18 = vld [vmem:[%s0 + $0x18] sm:$0xff]
  %v19 = vld [vmem:[%s0 + $0x20] sm:$0xff]
  %v20 = vld [vmem:[%s0 + $0x28] sm:$0xff]
  %v21 = vld [vmem:[%s0 + $0x30] sm:$0xff]
  %v22 = vld [vmem:[%s0 + $0x38] sm:$0xff]
  %v23 = vld [vmem:[%s0 + $0x40] sm:$0xff]
  %v24 = vld [vmem:[%s0 + $0x48] sm:$0xff]
  %v25 = vld [vmem:[%s0 + $0x50] sm:$0xff]
  %v26 = vld [vmem:[%s0 + $0x58] sm:$0xff]
  %v27 = vld [vmem:[%s0 + $0x60] sm:$0xff]
  %v28 = vld [vmem:[%s0 + $0x68] sm:$0xff]
  %v29 = vld [vmem:[%s0 + $0x70] sm:$0xff]
  %v30 = vld [vmem:[%s0 + $0x78] sm:$0xff]
  %v31 = vld [vmem:[%s0 + $0x80] sm:$0xff]
  %v32 = vld [vmem:[%s0 + $0x88] sm:$0xff]
  %v33 = vld [vmem:[%s0 + $0x90] sm:$0xff]
  %v34 = vld [vmem:[%s0 + $0x98] sm:$0xff]
  %v35 = vld [vmem:[%s0 + $0xa0] sm:$0xff]
  %v36 = vld [vmem:[%s0 + $0xa8] sm:$0xff]
  %v37 = vld [vmem:[%s0 + $0xb0] sm:$0xff]
  %v38 = vld [vmem:[%s0 + $0xb8] sm:$0xff]
  %v39 = vld [vmem:[%s0 + $0xc0] sm:$0xff]
  %v40 = vld [vmem:[%s0 + $0xc8] sm:$0xff]
  %v41 = vld [vmem:[%s0 + $0xd0] sm:$0xff]
  %v42 = vld [vmem:[%s0 + $0xd8] sm:$0xff]
  %v43 = vld [vmem:[%s0 + $0xe0] sm:$0xff]
  %v44 = vld [vmem:[%s0 + $0xe8] sm:$0xff]
  %v45 = vld [vmem:[%s0 + $0xf0] sm:$0xff]
  %v46 = vld [vmem:[%s0 + $0xf8] sm:$0xff]
  %v47 = vld [vmem:[%s0 + $0x100] sm:$0xff]
  %v48 = vld [vmem:[%s0 + $0x108] sm:$0xff]
  %v49 = vld [vmem:[%s0 + $0x110] sm:$0xff]
  %v50 = vld [vmem:[%s0 + $0x118] sm:$0xff]
  %v51 = vld [vmem:[%s0 + $0x120] sm:$0xff]
  %v52 = vld [vmem:[%s0 + $0x128] sm:$0xff]
  %v53 = vld [vmem:[%s0 + $0x130] sm:$0xff]
  %v54 = vld [vmem:[%s0 + $0x138] sm:$0xff]
  %v55 = vld [vmem:[%s0 + $0x140] sm:$0xff]
  %v56 = vld [vmem:[%s0 + $0x148] sm:$0xff]
  %v57 = vld [vmem:[%s0 + $0x150] sm:$0xff]
  %v58 = vld [vmem:[%s0 + $0x158] sm:$0xff]
  %v59 = vld [vmem:[%s0 + $0x160] sm:$0xff]
  %v60 = vld [vmem:[%s0 + $0x168] sm:$0xff]
  %v61 = vld [vmem:[%s0 + $0x170] sm:$0xff]
  %v62 = vld [vmem:[%s0 + $0x178] sm:$0xff]
  %v63 = vld [vmem:[%s0 + $0x180] sm:$0xff]
  %v64 = vld [vmem:[%s0 + $0x188] sm:$0xff]
  %v65 = vld [vmem:[%s0 + $0x190] sm:$0xff]
  %v66 = vld [vmem:[%s0 + $0x198] sm:$0xff]
  %v67 = vld [vmem:[%s0 + $0x1a0] sm:$0xff]
  %v68 = vld [vmem:[%s0 + $0x1a8] sm:$0xff]
  %v69 = vld [vmem:[%s0 + $0x1b0] sm:$0xff]
  %v70 = vld [vmem:[%s0 + $0x1b8] sm:$0xff]
  %v71 = vld [vmem:[%s0 + $0x1c0] sm:$0xff]
  %v72 = vld [vmem:[%s0 + $0x1c8] sm:$0xff]
  %v73 = vld [vmem:[%s0 + $0x1d0] sm:$0xff]
  %v74 = vld [vmem:[%s0 + $0x1d8] sm:$0xff]
  %v75 = vld [vmem:[%s0 + $0x1e0] sm:$0xff]
  %v76 = vld [vmem:[%s0 + $0x1e8] sm:$0xff]
  %v77 = vld [vmem:[%s0 + $0x1f0] sm:$0xff]
  %v78 = vld [vmem:[%s0 + $0x1f8] sm:$0xff]
  %v79 = vpack.c.bf16 %v16, %v15
  %v80 = vpack.c.bf16 %v18, %v17
  %v81 = vpack.c.bf16 %v20, %v19
  %v82 = vpack.c.bf16 %v22, %v21
  %v83 = vpack.c.bf16 %v24, %v23
  %v84 = vpack.c.bf16 %v26, %v25
  %v85 = vpack.c.bf16 %v28, %v27
  %v86 = vpack.c.bf16 %v30, %v29
  %v87 = vpack.c.bf16 %v32, %v31
  %v88 = vpack.c.bf16 %v34, %v33
  %v89 = vpack.c.bf16 %v36, %v35
  %v90 = vpack.c.bf16 %v38, %v37
  %v91 = vpack.c.bf16 %v40, %v39
  %v92 = vpack.c.bf16 %v42, %v41
  %v93 = vpack.c.bf16 %v44, %v43
  %v94 = vpack.c.bf16 %v46, %v45
  %v95 = vpack.c.bf16 %v48, %v47
  %v96 = vpack.c.bf16 %v50, %v49
  %v97 = vpack.c.bf16 %v52, %v51
  %v98 = vpack.c.bf16 %v54, %v53
  %v99 = vpack.c.bf16 %v56, %v55
  %v100 = vpack.c.bf16 %v58, %v57
  %v101 = vpack.c.bf16 %v60, %v59
  %v102 = vpack.c.bf16 %v62, %v61
  %v103 = vpack.c.bf16 %v64, %v63
  %v104 = vpack.c.bf16 %v66, %v65
  %v105 = vpack.c.bf16 %v68, %v67
  %v106 = vpack.c.bf16 %v70, %v69
  %v107 = vpack.c.bf16 %v72, %v71
  %v108 = vpack.c.bf16 %v74, %v73
  %v109 = vpack.c.bf16 %v76, %v75
  %v110 = vpack.c.bf16 %v78, %v77
  %v111 = vld [vmem:[%s1] sm:$0xf]
  %v112 = vld [vmem:[%s1 + $0x4] sm:$0xf]
  %v113 = vld [vmem:[%s2] sm:$0x1]
  %v115 = vlaneseq
  %v116 = vshrl.u32 %v115, 7
  %v117 = vsub.s32 0, %v116
  %v118 = vrot.slane %v113, %v117
  %v122 = vunpack.c.l.b16 %v111
  %v123 = vunpack.c.l.b16 %v112
  %v124 = vpack.c.b16 %v123, %v122
  %vm126 = vcmask 130048
  %v128 = vsel %vm126, %v79, 0
  %v131 = vsel %vm126, %v80, 0
  %v134 = vsel %vm126, %v81, 0
  %v137 = vsel %vm126, %v82, 0
  %v140 = vsel %vm126, %v83, 0
  %v143 = vsel %vm126, %v84, 0
  %v146 = vsel %vm126, %v85, 0
  %v149 = vsel %vm126, %v86, 0
  %v152 = vsel %vm126, %v87, 0
  %v155 = vsel %vm126, %v88, 0
  %v158 = vsel %vm126, %v89, 0
  %v161 = vsel %vm126, %v90, 0
  %v164 = vsel %vm126, %v91, 0
  %v167 = vsel %vm126, %v92, 0
  %v170 = vsel %vm126, %v93, 0
  %v173 = vsel %vm126, %v94, 0
  %v176 = vsel %vm126, %v95, 0
  %v179 = vsel %vm126, %v96, 0
  %v182 = vsel %vm126, %v97, 0
  %v185 = vsel %vm126, %v98, 0
  %v188 = vsel %vm126, %v99, 0
  %v191 = vsel %vm126, %v100, 0
  %v194 = vsel %vm126, %v101, 0
  %v197 = vsel %vm126, %v102, 0
  %v200 = vsel %vm126, %v103, 0
  %v203 = vsel %vm126, %v104, 0
  %v206 = vsel %vm126, %v105, 0
  %v209 = vsel %vm126, %v106, 0
  %v212 = vsel %vm126, %v107, 0
  %v215 = vsel %vm126, %v108, 0
  %v218 = vsel %vm126, %v109, 0
  %v221 = vsel %vm126, %v110, 0
  %223 = vmatprep.subr.bf16.mxu0 0
  %224 = vmatpush1.bf16.msra.mxu0 %v124
  %225 = vmatprep.subr.bf16.mxu0 0
  %226 = vmatpush1.bf16.msra.mxu0 0
  %227 = vmatprep.subr.bf16.mxu0 0
  %228 = vmatpush1.bf16.msra.mxu0 0
  %229 = vmatprep.subr.bf16.mxu0 0
  %230 = vmatpush1.bf16.msra.mxu0 0
  %231 = vmatprep.subr.bf16.mxu0 0
  %232 = vmatpush1.bf16.msra.mxu0 0
  %233 = vmatprep.subr.bf16.mxu0 0
  %234 = vmatpush1.bf16.msra.mxu0 0
  %235 = vmatprep.subr.bf16.mxu0 0
  %236 = vmatpush1.bf16.msra.mxu0 0
  %237 = vmatprep.subr.bf16.mxu0 0
  %238 = vmatpush1.bf16.msra.mxu0 0
  %239 = vmatprep.subr.bf16.mxu0 0
  %240 = vmatpush1.bf16.msra.mxu0 0
  %241 = vmatprep.subr.bf16.mxu0 0
  %242 = vmatpush1.bf16.msra.mxu0 0
  %243 = vmatprep.subr.bf16.mxu0 0
  %244 = vmatpush1.bf16.msra.mxu0 0
  %245 = vmatprep.subr.bf16.mxu0 0
  %246 = vmatpush1.bf16.msra.mxu0 0
  %247 = vmatprep.subr.bf16.mxu0 0
  %248 = vmatpush1.bf16.msra.mxu0 0
  %249 = vmatprep.subr.bf16.mxu0 0
  %250 = vmatpush1.bf16.msra.mxu0 0
  %251 = vmatprep.subr.bf16.mxu0 0
  %252 = vmatpush1.bf16.msra.mxu0 0
  %253 = vmatprep.subr.bf16.mxu0 0
  %254 = vmatpush1.bf16.msra.mxu0 0
  %255 = vmatprep.mubr.bf16.mxu0 0
  %256 = vmatmul.mubr.bf16.gmra.mrb[0].mxu0 %v128
  %v257 = vpop.f32.mrb[0].mxu0
  %v258 = vadd.f32 %v118, %v257
  %v259 = vpop.f32.mrb[0].mxu0
  %v260 = vpop.f32.mrb[0].mxu0
  %v261 = vadd.f32 %v118, %v260
  %v262 = vpop.f32.mrb[0].mxu0
  %263 = vmatprep.mubr.bf16.mxu0 0
  %264 = vmatmul.mubr.bf16.gmra.mrb[0].mxu0 %v131
  %v265 = vpop.f32.mrb[0].mxu0
  %v266 = vadd.f32 %v118, %v265
  %v267 = vpop.f32.mrb[0].mxu0
  %v268 = vpop.f32.mrb[0].mxu0
  %v269 = vadd.f32 %v118, %v268
  %v270 = vpop.f32.mrb[0].mxu0
  %271 = vmatprep.mubr.bf16.mxu0 0
  %272 = vmatmul.mubr.bf16.gmra.mrb[0].mxu0 %v134
  %v273 = vpop.f32.mrb[0].mxu0
  %v274 = vadd.f32 %v118, %v273
  %v275 = vpop.f32.mrb[0].mxu0
  %v276 = vpop.f32.mrb[0].mxu0
  %v277 = vadd.f32 %v118, %v276
  %v278 = vpop.f32.mrb[0].mxu0
  %279 = vmatprep.mubr.bf16.mxu0 0
  %280 = vmatmul.mubr.bf16.gmra.mrb[0].mxu0 %v137
  %v281 = vpop.f32.mrb[0].mxu0
  %v282 = vadd.f32 %v118, %v281
  %v283 = vpop.f32.mrb[0].mxu0
  %v284 = vpop.f32.mrb[0].mxu0
  %v285 = vadd.f32 %v118, %v284
  %v286 = vpop.f32.mrb[0].mxu0
  %287 = vmatprep.mubr.bf16.mxu0 0
  %288 = vmatmul.mubr.bf16.gmra.mrb[0].mxu0 %v140
  %v289 = vpop.f32.mrb[0].mxu0
  %v290 = vadd.f32 %v118, %v289
  %v291 = vpop.f32.mrb[0].mxu0
  %v292 = vpop.f32.mrb[0].mxu0
  %v293 = vadd.f32 %v118, %v292
  %v294 = vpop.f32.mrb[0].mxu0
  %295 = vmatprep.mubr.bf16.mxu0 0
  %296 = vmatmul.mubr.bf16.gmra.mrb[0].mxu0 %v143
  %v297 = vpop.f32.mrb[0].mxu0
  %v298 = vadd.f32 %v118, %v297
  %v299 = vpop.f32.mrb[0].mxu0
  %v300 = vpop.f32.mrb[0].mxu0
  %v301 = vadd.f32 %v118, %v300
  %v302 = vpop.f32.mrb[0].mxu0
  %303 = vmatprep.mubr.bf16.mxu0 0
  %304 = vmatmul.mubr.bf16.gmra.mrb[0].mxu0 %v146
  %v305 = vpop.f32.mrb[0].mxu0
  %v306 = vadd.f32 %v118, %v305
  %v307 = vpop.f32.mrb[0].mxu0
  %v308 = vpop.f32.mrb[0].mxu0
  %v309 = vadd.f32 %v118, %v308
  %v310 = vpop.f32.mrb[0].mxu0
  %311 = vmatprep.mubr.bf16.mxu0 0
  %312 = vmatmul.mubr.bf16.gmra.mrb[0].mxu0 %v149
  %v313 = vpop.f32.mrb[0].mxu0
  %v314 = vadd.f32 %v118, %v313
  %v315 = vpop.f32.mrb[0].mxu0
  %v316 = vpop.f32.mrb[0].mxu0
  %v317 = vadd.f32 %v118, %v316
  %v318 = vpop.f32.mrb[0].mxu0
  %319 = vmatprep.mubr.bf16.mxu0 0
  %320 = vmatmul.mubr.bf16.gmra.mrb[0].mxu0 %v152
  %v321 = vpop.f32.mrb[0].mxu0
  %v322 = vadd.f32 %v118, %v321
  %v323 = vpop.f32.mrb[0].mxu0
  %v324 = vpop.f32.mrb[0].mxu0
  %v325 = vadd.f32 %v118, %v324
  %v326 = vpop.f32.mrb[0].mxu0
  %327 = vmatprep.mubr.bf16.mxu0 0
  %328 = vmatmul.mubr.bf16.gmra.mrb[0].mxu0 %v155
  %v329 = vpop.f32.mrb[0].mxu0
  %v330 = vadd.f32 %v118, %v329
  %v331 = vpop.f32.mrb[0].mxu0
  %v332 = vpop.f32.mrb[0].mxu0
  %v333 = vadd.f32 %v118, %v332
  %v334 = vpop.f32.mrb[0].mxu0
  %335 = vmatprep.mubr.bf16.mxu0 0
  %336 = vmatmul.mubr.bf16.gmra.mrb[0].mxu0 %v158
  %v337 = vpop.f32.mrb[0].mxu0
  %v338 = vadd.f32 %v118, %v337
  %v339 = vpop.f32.mrb[0].mxu0
  %v340 = vpop.f32.mrb[0].mxu0
  %v341 = vadd.f32 %v118, %v340
  %v342 = vpop.f32.mrb[0].mxu0
  %343 = vmatprep.mubr.bf16.mxu0 0
  %344 = vmatmul.mubr.bf16.gmra.mrb[0].mxu0 %v161
  %v345 = vpop.f32.mrb[0].mxu0
  %v346 = vadd.f32 %v118, %v345
  %v347 = vpop.f32.mrb[0].mxu0
  %v348 = vpop.f32.mrb[0].mxu0
  %v349 = vadd.f32 %v118, %v348
  %v350 = vpop.f32.mrb[0].mxu0
  %351 = vmatprep.mubr.bf16.mxu0 0
  %352 = vmatmul.mubr.bf16.gmra.mrb[0].mxu0 %v164
  %v353 = vpop.f32.mrb[0].mxu0
  %v354 = vadd.f32 %v118, %v353
  %v355 = vpop.f32.mrb[0].mxu0
  %v356 = vpop.f32.mrb[0].mxu0
  %v357 = vadd.f32 %v118, %v356
  %v358 = vpop.f32.mrb[0].mxu0
  %359 = vmatprep.mubr.bf16.mxu0 0
  %360 = vmatmul.mubr.bf16.gmra.mrb[0].mxu0 %v167
  %v361 = vpop.f32.mrb[0].mxu0
  %v362 = vadd.f32 %v118, %v361
  %v363 = vpop.f32.mrb[0].mxu0
  %v364 = vpop.f32.mrb[0].mxu0
  %v365 = vadd.f32 %v118, %v364
  %v366 = vpop.f32.mrb[0].mxu0
  %367 = vmatprep.mubr.bf16.mxu0 0
  %368 = vmatmul.mubr.bf16.gmra.mrb[0].mxu0 %v170
  %v369 = vpop.f32.mrb[0].mxu0
  %v370 = vadd.f32 %v118, %v369
  %v371 = vpop.f32.mrb[0].mxu0
  %v372 = vpop.f32.mrb[0].mxu0
  %v373 = vadd.f32 %v118, %v372
  %v374 = vpop.f32.mrb[0].mxu0
  %375 = vmatprep.mubr.bf16.mxu0 0
  %376 = vmatmul.mubr.bf16.gmra.mrb[0].mxu0 %v173
  %v377 = vpop.f32.mrb[0].mxu0
  %v378 = vadd.f32 %v118, %v377
  %v379 = vpop.f32.mrb[0].mxu0
  %v380 = vpop.f32.mrb[0].mxu0
  %v381 = vadd.f32 %v118, %v380
  %v382 = vpop.f32.mrb[0].mxu0
  %383 = vmatprep.mubr.bf16.mxu0 0
  %384 = vmatmul.mubr.bf16.gmra.mrb[0].mxu0 %v176
  %v385 = vpop.f32.mrb[0].mxu0
  %v386 = vadd.f32 %v118, %v385
  %v387 = vpop.f32.mrb[0].mxu0
  %v388 = vpop.f32.mrb[0].mxu0
  %v389 = vadd.f32 %v118, %v388
  %v390 = vpop.f32.mrb[0].mxu0
  %391 = vmatprep.mubr.bf16.mxu0 0
  %392 = vmatmul.mubr.bf16.gmra.mrb[0].mxu0 %v179
  %v393 = vpop.f32.mrb[0].mxu0
  %v394 = vadd.f32 %v118, %v393
  %v395 = vpop.f32.mrb[0].mxu0
  %v396 = vpop.f32.mrb[0].mxu0
  %v397 = vadd.f32 %v118, %v396
  %v398 = vpop.f32.mrb[0].mxu0
  %399 = vmatprep.mubr.bf16.mxu0 0
  %400 = vmatmul.mubr.bf16.gmra.mrb[0].mxu0 %v182
  %v401 = vpop.f32.mrb[0].mxu0
  %v402 = vadd.f32 %v118, %v401
  %v403 = vpop.f32.mrb[0].mxu0
  %v404 = vpop.f32.mrb[0].mxu0
  %v405 = vadd.f32 %v118, %v404
  %v406 = vpop.f32.mrb[0].mxu0
  %407 = vmatprep.mubr.bf16.mxu0 0
  %408 = vmatmul.mubr.bf16.gmra.mrb[0].mxu0 %v185
  %v409 = vpop.f32.mrb[0].mxu0
  %v410 = vadd.f32 %v118, %v409
  %v411 = vpop.f32.mrb[0].mxu0
  %v412 = vpop.f32.mrb[0].mxu0
  %v413 = vadd.f32 %v118, %v412
  %v414 = vpop.f32.mrb[0].mxu0
  %415 = vmatprep.mubr.bf16.mxu0 0
  %416 = vmatmul.mubr.bf16.gmra.mrb[0].mxu0 %v188
  %v417 = vpop.f32.mrb[0].mxu0
  %v418 = vadd.f32 %v118, %v417
  %v419 = vpop.f32.mrb[0].mxu0
  %v420 = vpop.f32.mrb[0].mxu0
  %v421 = vadd.f32 %v118, %v420
  %v422 = vpop.f32.mrb[0].mxu0
  %423 = vmatprep.mubr.bf16.mxu0 0
  %424 = vmatmul.mubr.bf16.gmra.mrb[0].mxu0 %v191
  %v425 = vpop.f32.mrb[0].mxu0
  %v426 = vadd.f32 %v118, %v425
  %v427 = vpop.f32.mrb[0].mxu0
  %v428 = vpop.f32.mrb[0].mxu0
  %v429 = vadd.f32 %v118, %v428
  %v430 = vpop.f32.mrb[0].mxu0
  %431 = vmatprep.mubr.bf16.mxu0 0
  %432 = vmatmul.mubr.bf16.gmra.mrb[0].mxu0 %v194
  %v433 = vpop.f32.mrb[0].mxu0
  %v434 = vadd.f32 %v118, %v433
  %v435 = vpop.f32.mrb[0].mxu0
  %v436 = vpop.f32.mrb[0].mxu0
  %v437 = vadd.f32 %v118, %v436
  %v438 = vpop.f32.mrb[0].mxu0
  %439 = vmatprep.mubr.bf16.mxu0 0
  %440 = vmatmul.mubr.bf16.gmra.mrb[0].mxu0 %v197
  %v441 = vpop.f32.mrb[0].mxu0
  %v442 = vadd.f32 %v118, %v441
  %v443 = vpop.f32.mrb[0].mxu0
  %v444 = vpop.f32.mrb[0].mxu0
  %v445 = vadd.f32 %v118, %v444
  %v446 = vpop.f32.mrb[0].mxu0
  %447 = vmatprep.mubr.bf16.mxu0 0
  %448 = vmatmul.mubr.bf16.gmra.mrb[0].mxu0 %v200
  %v449 = vpop.f32.mrb[0].mxu0
  %v450 = vadd.f32 %v118, %v449
  %v451 = vpop.f32.mrb[0].mxu0
  %v452 = vpop.f32.mrb[0].mxu0
  %v453 = vadd.f32 %v118, %v452
  %v454 = vpop.f32.mrb[0].mxu0
  %455 = vmatprep.mubr.bf16.mxu0 0
  %456 = vmatmul.mubr.bf16.gmra.mrb[0].mxu0 %v203
  %v457 = vpop.f32.mrb[0].mxu0
  %v458 = vadd.f32 %v118, %v457
  %v459 = vpop.f32.mrb[0].mxu0
  %v460 = vpop.f32.mrb[0].mxu0
  %v461 = vadd.f32 %v118, %v460
  %v462 = vpop.f32.mrb[0].mxu0
  %463 = vmatprep.mubr.bf16.mxu0 0
  %464 = vmatmul.mubr.bf16.gmra.mrb[0].mxu0 %v206
  %v465 = vpop.f32.mrb[0].mxu0
  %v466 = vadd.f32 %v118, %v465
  %v467 = vpop.f32.mrb[0].mxu0
  %v468 = vpop.f32.mrb[0].mxu0
  %v469 = vadd.f32 %v118, %v468
  %v470 = vpop.f32.mrb[0].mxu0
  %471 = vmatprep.mubr.bf16.mxu0 0
  %472 = vmatmul.mubr.bf16.gmra.mrb[0].mxu0 %v209
  %v473 = vpop.f32.mrb[0].mxu0
  %v474 = vadd.f32 %v118, %v473
  %v475 = vpop.f32.mrb[0].mxu0
  %v476 = vpop.f32.mrb[0].mxu0
  %v477 = vadd.f32 %v118, %v476
  %v478 = vpop.f32.mrb[0].mxu0
  %479 = vmatprep.mubr.bf16.mxu0 0
  %480 = vmatmul.mubr.bf16.gmra.mrb[0].mxu0 %v212
  %v481 = vpop.f32.mrb[0].mxu0
  %v482 = vadd.f32 %v118, %v481
  %v483 = vpop.f32.mrb[0].mxu0
  %v484 = vpop.f32.mrb[0].mxu0
  %v485 = vadd.f32 %v118, %v484
  %v486 = vpop.f32.mrb[0].mxu0
  %487 = vmatprep.mubr.bf16.mxu0 0
  %488 = vmatmul.mubr.bf16.gmra.mrb[0].mxu0 %v215
  %v489 = vpop.f32.mrb[0].mxu0
  %v490 = vadd.f32 %v118, %v489
  %v491 = vpop.f32.mrb[0].mxu0
  %v492 = vpop.f32.mrb[0].mxu0
  %v493 = vadd.f32 %v118, %v492
  %v494 = vpop.f32.mrb[0].mxu0
  %495 = vmatprep.mubr.bf16.mxu0 0
  %496 = vmatmul.mubr.bf16.gmra.mrb[0].mxu0 %v218
  %v497 = vpop.f32.mrb[0].mxu0
  %v498 = vadd.f32 %v118, %v497
  %v499 = vpop.f32.mrb[0].mxu0
  %v500 = vpop.f32.mrb[0].mxu0
  %v501 = vadd.f32 %v118, %v500
  %v502 = vpop.f32.mrb[0].mxu0
  %503 = vmatprep.mubr.bf16.mxu0 0
  %504 = vmatmul.mubr.bf16.gmra.mrb[0].mxu0 %v221
  %v505 = vpop.f32.mrb[0].mxu0
  %v506 = vadd.f32 %v118, %v505
  %v507 = vpop.f32.mrb[0].mxu0
  %v508 = vpop.f32.mrb[0].mxu0
  %v509 = vadd.f32 %v118, %v508
  %v510 = vpop.f32.mrb[0].mxu0
  %511 = vdwg.mxu0
  %v512 = vmax.f32 %v258, 0.0
  %v513 = vmax.f32 %v261, 0.0
  %v514 = vmax.f32 %v266, 0.0
  %v515 = vmax.f32 %v269, 0.0
  %v516 = vmax.f32 %v274, 0.0
  %v517 = vmax.f32 %v277, 0.0
  %v518 = vmax.f32 %v282, 0.0
  %v519 = vmax.f32 %v285, 0.0
  %v520 = vmax.f32 %v290, 0.0
  %v521 = vmax.f32 %v293, 0.0
  %v522 = vmax.f32 %v298, 0.0
  %v523 = vmax.f32 %v301, 0.0
  %v524 = vmax.f32 %v306, 0.0
  %v525 = vmax.f32 %v309, 0.0
  %v526 = vmax.f32 %v314, 0.0
  %v527 = vmax.f32 %v317, 0.0
  %v528 = vmax.f32 %v322, 0.0
  %v529 = vmax.f32 %v325, 0.0
  %v530 = vmax.f32 %v330, 0.0
  %v531 = vmax.f32 %v333, 0.0
  %v532 = vmax.f32 %v338, 0.0
  %v533 = vmax.f32 %v341, 0.0
  %v534 = vmax.f32 %v346, 0.0
  %v535 = vmax.f32 %v349, 0.0
  %v536 = vmax.f32 %v354, 0.0
  %v537 = vmax.f32 %v357, 0.0
  %v538 = vmax.f32 %v362, 0.0
  %v539 = vmax.f32 %v365, 0.0
  %v540 = vmax.f32 %v370, 0.0
  %v541 = vmax.f32 %v373, 0.0
  %v542 = vmax.f32 %v378, 0.0
  %v543 = vmax.f32 %v381, 0.0
  %v544 = vmax.f32 %v386, 0.0
  %v545 = vmax.f32 %v389, 0.0
  %v546 = vmax.f32 %v394, 0.0
  %v547 = vmax.f32 %v397, 0.0
  %v548 = vmax.f32 %v402, 0.0
  %v549 = vmax.f32 %v405, 0.0
  %v550 = vmax.f32 %v410, 0.0
  %v551 = vmax.f32 %v413, 0.0
  %v552 = vmax.f32 %v418, 0.0
  %v553 = vmax.f32 %v421, 0.0
  %v554 = vmax.f32 %v426, 0.0
  %v555 = vmax.f32 %v429, 0.0
  %v556 = vmax.f32 %v434, 0.0
  %v557 = vmax.f32 %v437, 0.0
  %v558 = vmax.f32 %v442, 0.0
  %v559 = vmax.f32 %v445, 0.0
  %v560 = vmax.f32 %v450, 0.0
  %v561 = vmax.f32 %v453, 0.0
  %v562 = vmax.f32 %v458, 0.0
  %v563 = vmax.f32 %v461, 0.0
  %v564 = vmax.f32 %v466, 0.0
  %v565 = vmax.f32 %v469, 0.0
  %v566 = vmax.f32 %v474, 0.0
  %v567 = vmax.f32 %v477, 0.0
  %v568 = vmax.f32 %v482, 0.0
  %v569 = vmax.f32 %v485, 0.0
  %v570 = vmax.f32 %v490, 0.0
  %v571 = vmax.f32 %v493, 0.0
  %v572 = vmax.f32 %v498, 0.0
  %v573 = vmax.f32 %v501, 0.0
  %v574 = vmax.f32 %v506, 0.0
  %v575 = vmax.f32 %v509, 0.0
  %v576 = vpack.c.bf16 %v513, %v512
  %v577 = vpack.c.bf16 %v515, %v514
  %v578 = vpack.c.bf16 %v517, %v516
  %v579 = vpack.c.bf16 %v519, %v518
  %v580 = vpack.c.bf16 %v521, %v520
  %v581 = vpack.c.bf16 %v523, %v522
  %v582 = vpack.c.bf16 %v525, %v524
  %v583 = vpack.c.bf16 %v527, %v526
  %v584 = vpack.c.bf16 %v529, %v528
  %v585 = vpack.c.bf16 %v531, %v530
  %v586 = vpack.c.bf16 %v533, %v532
  %v587 = vpack.c.bf16 %v535, %v534
  %v588 = vpack.c.bf16 %v537, %v536
  %v589 = vpack.c.bf16 %v539, %v538
  %v590 = vpack.c.bf16 %v541, %v540
  %v591 = vpack.c.bf16 %v543, %v542
  %v592 = vpack.c.bf16 %v545, %v544
  %v593 = vpack.c.bf16 %v547, %v546
  %v594 = vpack.c.bf16 %v549, %v548
  %v595 = vpack.c.bf16 %v551, %v550
  %v596 = vpack.c.bf16 %v553, %v552
  %v597 = vpack.c.bf16 %v555, %v554
  %v598 = vpack.c.bf16 %v557, %v556
  %v599 = vpack.c.bf16 %v559, %v558
  %v600 = vpack.c.bf16 %v561, %v560
  %v601 = vpack.c.bf16 %v563, %v562
  %v602 = vpack.c.bf16 %v565, %v564
  %v603 = vpack.c.bf16 %v567, %v566
  %v604 = vpack.c.bf16 %v569, %v568
  %v605 = vpack.c.bf16 %v571, %v570
  %v606 = vpack.c.bf16 %v573, %v572
  %v607 = vpack.c.bf16 %v575, %v574
  %v640 = vunpack.c.l.b16 %v576
  %v641 = vunpack.c.h.b16 %v576
  %v642 = vunpack.c.l.b16 %v577
  %v643 = vunpack.c.h.b16 %v577
  %v644 = vunpack.c.l.b16 %v578
  %v645 = vunpack.c.h.b16 %v578
  %v646 = vunpack.c.l.b16 %v579
  %v647 = vunpack.c.h.b16 %v579
  %v648 = vunpack.c.l.b16 %v580
  %v649 = vunpack.c.h.b16 %v580
  %v650 = vunpack.c.l.b16 %v581
  %v651 = vunpack.c.h.b16 %v581
  %v652 = vunpack.c.l.b16 %v582
  %v653 = vunpack.c.h.b16 %v582
  %v654 = vunpack.c.l.b16 %v583
  %v655 = vunpack.c.h.b16 %v583
  %v656 = vunpack.c.l.b16 %v584
  %v657 = vunpack.c.h.b16 %v584
  %v658 = vunpack.c.l.b16 %v585
  %v659 = vunpack.c.h.b16 %v585
  %v660 = vunpack.c.l.b16 %v586
  %v661 = vunpack.c.h.b16 %v586
  %v662 = vunpack.c.l.b16 %v587
  %v663 = vunpack.c.h.b16 %v587
  %v664 = vunpack.c.l.b16 %v588
  %v665 = vunpack.c.h.b16 %v588
  %v666 = vunpack.c.l.b16 %v589
  %v667 = vunpack.c.h.b16 %v589
  %v668 = vunpack.c.l.b16 %v590
  %v669 = vunpack.c.h.b16 %v590
  %v670 = vunpack.c.l.b16 %v591
  %v671 = vunpack.c.h.b16 %v591
  %v672 = vunpack.c.l.b16 %v592
  %v673 = vunpack.c.h.b16 %v592
  %v674 = vunpack.c.l.b16 %v593
  %v675 = vunpack.c.h.b16 %v593
  %v676 = vunpack.c.l.b16 %v594
  %v677 = vunpack.c.h.b16 %v594
  %v678 = vunpack.c.l.b16 %v595
  %v679 = vunpack.c.h.b16 %v595
  %v680 = vunpack.c.l.b16 %v596
  %v681 = vunpack.c.h.b16 %v596
  %v682 = vunpack.c.l.b16 %v597
  %v683 = vunpack.c.h.b16 %v597
  %v684 = vunpack.c.l.b16 %v598
  %v685 = vunpack.c.h.b16 %v598
  %v686 = vunpack.c.l.b16 %v599
  %v687 = vunpack.c.h.b16 %v599
  %v688 = vunpack.c.l.b16 %v600
  %v689 = vunpack.c.h.b16 %v600
  %v690 = vunpack.c.l.b16 %v601
  %v691 = vunpack.c.h.b16 %v601
  %v692 = vunpack.c.l.b16 %v602
  %v693 = vunpack.c.h.b16 %v602
  %v694 = vunpack.c.l.b16 %v603
  %v695 = vunpack.c.h.b16 %v603
  %v696 = vunpack.c.l.b16 %v604
  %v697 = vunpack.c.h.b16 %v604
  %v698 = vunpack.c.l.b16 %v605
  %v699 = vunpack.c.h.b16 %v605
  %v700 = vunpack.c.l.b16 %v606
  %v701 = vunpack.c.h.b16 %v606
  %v702 = vunpack.c.l.b16 %v607
  %v703 = vunpack.c.h.b16 %v607
  %v704 = vpack.c.b16 %v640, %v640
  %v705 = vpack.c.b16 %v641, %v641
  %v706 = vpack.c.b16 %v642, %v642
  %v707 = vpack.c.b16 %v643, %v643
  %v708 = vpack.c.b16 %v644, %v644
  %v709 = vpack.c.b16 %v645, %v645
  %v710 = vpack.c.b16 %v646, %v646
  %v711 = vpack.c.b16 %v647, %v647
  %v712 = vpack.c.b16 %v648, %v648
  %v713 = vpack.c.b16 %v649, %v649
  %v714 = vpack.c.b16 %v650, %v650
  %v715 = vpack.c.b16 %v651, %v651
  %v716 = vpack.c.b16 %v652, %v652
  %v717 = vpack.c.b16 %v653, %v653
  %v718 = vpack.c.b16 %v654, %v654
  %v719 = vpack.c.b16 %v655, %v655
  %v720 = vpack.c.b16 %v656, %v656
  %v721 = vpack.c.b16 %v657, %v657
  %v722 = vpack.c.b16 %v658, %v658
  %v723 = vpack.c.b16 %v659, %v659
  %v724 = vpack.c.b16 %v660, %v660
  %v725 = vpack.c.b16 %v661, %v661
  %v726 = vpack.c.b16 %v662, %v662
  %v727 = vpack.c.b16 %v663, %v663
  %v728 = vpack.c.b16 %v664, %v664
  %v729 = vpack.c.b16 %v665, %v665
  %v730 = vpack.c.b16 %v666, %v666
  %v731 = vpack.c.b16 %v667, %v667
  %v732 = vpack.c.b16 %v668, %v668
  %v733 = vpack.c.b16 %v669, %v669
  %v734 = vpack.c.b16 %v670, %v670
  %v735 = vpack.c.b16 %v671, %v671
  %v736 = vpack.c.b16 %v672, %v672
  %v737 = vpack.c.b16 %v673, %v673
  %v738 = vpack.c.b16 %v674, %v674
  %v739 = vpack.c.b16 %v675, %v675
  %v740 = vpack.c.b16 %v676, %v676
  %v741 = vpack.c.b16 %v677, %v677
  %v742 = vpack.c.b16 %v678, %v678
  %v743 = vpack.c.b16 %v679, %v679
  %v744 = vpack.c.b16 %v680, %v680
  %v745 = vpack.c.b16 %v681, %v681
  %v746 = vpack.c.b16 %v682, %v682
  %v747 = vpack.c.b16 %v683, %v683
  %v748 = vpack.c.b16 %v684, %v684
  %v749 = vpack.c.b16 %v685, %v685
  %v750 = vpack.c.b16 %v686, %v686
  %v751 = vpack.c.b16 %v687, %v687
  %v752 = vpack.c.b16 %v688, %v688
  %v753 = vpack.c.b16 %v689, %v689
  %v754 = vpack.c.b16 %v690, %v690
  %v755 = vpack.c.b16 %v691, %v691
  %v756 = vpack.c.b16 %v692, %v692
  %v757 = vpack.c.b16 %v693, %v693
  %v758 = vpack.c.b16 %v694, %v694
  %v759 = vpack.c.b16 %v695, %v695
  %v760 = vpack.c.b16 %v696, %v696
  %v761 = vpack.c.b16 %v697, %v697
  %v762 = vpack.c.b16 %v698, %v698
  %v763 = vpack.c.b16 %v699, %v699
  %v764 = vpack.c.b16 %v700, %v700
  %v765 = vpack.c.b16 %v701, %v701
  %v766 = vpack.c.b16 %v702, %v702
  %v767 = vpack.c.b16 %v703, %v703
  %vm832 = vcmask 27648
  %833 = vst.msk [vmem:[%s3] sm:$0xf] %vm832, %v704
  %834 = vst.msk [vmem:[%s3 + $0x4] sm:$0xf] %vm832, %v705
  %835 = vst.msk [vmem:[%s3 + $0x8] sm:$0xf] %vm832, %v706
  %836 = vst.msk [vmem:[%s3 + $0xc] sm:$0xf] %vm832, %v707
  %837 = vst.msk [vmem:[%s3 + $0x10] sm:$0xf] %vm832, %v708
  %838 = vst.msk [vmem:[%s3 + $0x14] sm:$0xf] %vm832, %v709
  %839 = vst.msk [vmem:[%s3 + $0x18] sm:$0xf] %vm832, %v710
  %840 = vst.msk [vmem:[%s3 + $0x1c] sm:$0xf] %vm832, %v711
  %841 = vst.msk [vmem:[%s3 + $0x20] sm:$0xf] %vm832, %v712
  %842 = vst.msk [vmem:[%s3 + $0x24] sm:$0xf] %vm832, %v713
  %843 = vst.msk [vmem:[%s3 + $0x28] sm:$0xf] %vm832, %v714
  %844 = vst.msk [vmem:[%s3 + $0x2c] sm:$0xf] %vm832, %v715
  %845 = vst.msk [vmem:[%s3 + $0x30] sm:$0xf] %vm832, %v716
  %846 = vst.msk [vmem:[%s3 + $0x34] sm:$0xf] %vm832, %v717
  %847 = vst.msk [vmem:[%s3 + $0x38] sm:$0xf] %vm832, %v718
  %848 = vst.msk [vmem:[%s3 + $0x3c] sm:$0xf] %vm832, %v719
  %849 = vst.msk [vmem:[%s3 + $0x40] sm:$0xf] %vm832, %v720
  %850 = vst.msk [vmem:[%s3 + $0x44] sm:$0xf] %vm832, %v721
  %851 = vst.msk [vmem:[%s3 + $0x48] sm:$0xf] %vm832, %v722
  %852 = vst.msk [vmem:[%s3 + $0x4c] sm:$0xf] %vm832, %v723
  %853 = vst.msk [vmem:[%s3 + $0x50] sm:$0xf] %vm832, %v724
  %854 = vst.msk [vmem:[%s3 + $0x54] sm:$0xf] %vm832, %v725
  %855 = vst.msk [vmem:[%s3 + $0x58] sm:$0xf] %vm832, %v726
  %856 = vst.msk [vmem:[%s3 + $0x5c] sm:$0xf] %vm832, %v727
  %857 = vst.msk [vmem:[%s3 + $0x60] sm:$0xf] %vm832, %v728
  %858 = vst.msk [vmem:[%s3 + $0x64] sm:$0xf] %vm832, %v729
  %859 = vst.msk [vmem:[%s3 + $0x68] sm:$0xf] %vm832, %v730
  %860 = vst.msk [vmem:[%s3 + $0x6c] sm:$0xf] %vm832, %v731
  %861 = vst.msk [vmem:[%s3 + $0x70] sm:$0xf] %vm832, %v732
  %862 = vst.msk [vmem:[%s3 + $0x74] sm:$0xf] %vm832, %v733
  %863 = vst.msk [vmem:[%s3 + $0x78] sm:$0xf] %vm832, %v734
  %864 = vst.msk [vmem:[%s3 + $0x7c] sm:$0xf] %vm832, %v735
  %865 = vst.msk [vmem:[%s3 + $0x80] sm:$0xf] %vm832, %v736
  %866 = vst.msk [vmem:[%s3 + $0x84] sm:$0xf] %vm832, %v737
  %867 = vst.msk [vmem:[%s3 + $0x88] sm:$0xf] %vm832, %v738
  %868 = vst.msk [vmem:[%s3 + $0x8c] sm:$0xf] %vm832, %v739
  %869 = vst.msk [vmem:[%s3 + $0x90] sm:$0xf] %vm832, %v740
  %870 = vst.msk [vmem:[%s3 + $0x94] sm:$0xf] %vm832, %v741
  %871 = vst.msk [vmem:[%s3 + $0x98] sm:$0xf] %vm832, %v742
  %872 = vst.msk [vmem:[%s3 + $0x9c] sm:$0xf] %vm832, %v743
  %873 = vst.msk [vmem:[%s3 + $0xa0] sm:$0xf] %vm832, %v744
  %874 = vst.msk [vmem:[%s3 + $0xa4] sm:$0xf] %vm832, %v745
  %875 = vst.msk [vmem:[%s3 + $0xa8] sm:$0xf] %vm832, %v746
  %876 = vst.msk [vmem:[%s3 + $0xac] sm:$0xf] %vm832, %v747
  %877 = vst.msk [vmem:[%s3 + $0xb0] sm:$0xf] %vm832, %v748
  %878 = vst.msk [vmem:[%s3 + $0xb4] sm:$0xf] %vm832, %v749
  %879 = vst.msk [vmem:[%s3 + $0xb8] sm:$0xf] %vm832, %v750
  %880 = vst.msk [vmem:[%s3 + $0xbc] sm:$0xf] %vm832, %v751
  %881 = vst.msk [vmem:[%s3 + $0xc0] sm:$0xf] %vm832, %v752
  %882 = vst.msk [vmem:[%s3 + $0xc4] sm:$0xf] %vm832, %v753
  %883 = vst.msk [vmem:[%s3 + $0xc8] sm:$0xf] %vm832, %v754
  %884 = vst.msk [vmem:[%s3 + $0xcc] sm:$0xf] %vm832, %v755
  %885 = vst.msk [vmem:[%s3 + $0xd0] sm:$0xf] %vm832, %v756
  %886 = vst.msk [vmem:[%s3 + $0xd4] sm:$0xf] %vm832, %v757
  %887 = vst.msk [vmem:[%s3 + $0xd8] sm:$0xf] %vm832, %v758
  %888 = vst.msk [vmem:[%s3 + $0xdc] sm:$0xf] %vm832, %v759
  %889 = vst.msk [vmem:[%s3 + $0xe0] sm:$0xf] %vm832, %v760
  %890 = vst.msk [vmem:[%s3 + $0xe4] sm:$0xf] %vm832, %v761
  %891 = vst.msk [vmem:[%s3 + $0xe8] sm:$0xf] %vm832, %v762
  %892 = vst.msk [vmem:[%s3 + $0xec] sm:$0xf] %vm832, %v763
  %893 = vst.msk [vmem:[%s3 + $0xf0] sm:$0xf] %vm832, %v764
  %894 = vst.msk [vmem:[%s3 + $0xf4] sm:$0xf] %vm832, %v765
  %895 = vst.msk [vmem:[%s3 + $0xf8] sm:$0xf] %vm832, %v766
  %896 = vst.msk [vmem:[%s3 + $0xfc] sm:$0xf] %vm832, %v767
  // Predicated region
  $region14: #{bottleneck_forward.4} parent=0 // pred_check
    _
  $region15: #{bottleneck_forward.4} parent=0 // pred_check_branch
    %898 = sbr.rel (0) target = $region17
  $region16: #{bottleneck_forward.4} parent=0 // pred_region
    _
  $region17: #{bottleneck_forward.4} parent=0 // pred_fallthru
    _
  // Predicated region
  $region18: #{bottleneck_forward.4} parent=0 // pred_check
    _
  $region19: #{bottleneck_forward.4} parent=0 // pred_check_branch
    %900 = sbr.rel (0) target = $region21
  $region20: #{bottleneck_forward.4} parent=0 // pred_region
    _
  $region21: #{bottleneck_forward.4} parent=0 // pred_fallthru
    _

// kernel: bottleneck_forward.7
$region0: #{bottleneck_forward.7}
  #allocation0 [shape = 'u32[]', space=smem, size = 0x4, offset = 0x4, fixed_abs, tag = 'smem constant byte address 0x4 - core index']
  #allocation1 [shape = 'u32[144,128]{1,0:T(1,128)}', space=vmem, size = 0x12000, scoped, tag = 'internal scratch']
  %s0 = inlined_call_operand.vmem [shape: bf16[2,256,4], index: 0, kind: input, shape index: {}]
  %s1 = inlined_call_operand.vmem [shape: f32[2,1,4], index: 1, kind: input, shape index: {}]
  %s2 = inlined_call_operand.vmem [shape: bf16[4,16], index: 2, kind: input, shape index: {}]
  %s3 = inlined_call_operand.vmem [shape: f32[1,16], index: 3, kind: input, shape index: {}]
  %s4 = inlined_call_operand.vmem [shape: f32[2,256,16], index: 4, kind: input, shape index: {}]
  %s5 = inlined_call_operand.vmem [shape: f32[2,256,16], index: 5, kind: output, shape index: {}]
  %s6 = sld [smem:[#allocation0]]
  $region53: #{bottleneck_forward.7} parent=0
    _
  %s8 = ssub.s32 1, %s6
  %s9 = scalar_select 0, %s8, %s6
  loop: start=0, step=1, limit=6
  $region2: #{bottleneck_forward.7} parent=0 // loop_pre_header
    _
  $region3: #{bottleneck_forward.7} parent=0 // loop_header
    %s11 = sphi 0, %s15
    %p12 = scmp.ge.s32.totalorder %s11, 6
    %s18 = sphi 0, %s30
    %s19 = sphi 0, %s26
    %s20 = sphi 0, %s18
    %s21 = sphi 0, %s19
    %s22 = sphi 0, %s20
    %s23 = sphi 0, %s21
    %s35 = sphi 0, %s37
    %s38 = sphi 0, %s35
    %s39 = sphi 0, %s38
    %s55 = sphi 0, %s39
    %s61 = sphi 0, %s63
    %s64 = sphi 0, %s61
    %s65 = sphi 0, %s64
    %s81 = sphi 0, %s65
    %s85 = sphi 0, %s85
    %s87 = sphi 0, %s85
    %s88 = sphi 0, %s87
    %s102 = sphi 0, %s88
    %s106 = sphi 0, %s106
    %s108 = sphi 0, %s106
    %s109 = sphi 0, %s108
    %s123 = sphi 0, %s109
    %s131 = sphi 0, %s133
    %s134 = sphi 0, %s131
    %s135 = sphi 0, %s134
    %s151 = sphi 0, %s135
    %s159 = sphi 0, %s161
    %s162 = sphi 0, %s159
    %s163 = sphi 0, %s162
    %s179 = sphi 0, %s163
  $region4: #{bottleneck_forward.7} parent=0 // loop_header_branch
    %14 = sbr.rel (%p12) target = $region8
  $region5: #{bottleneck_forward.7} parent=0 // loop_body
    %s16 = ssub.s32 %s11, 1
    %s17 = ssub.s32 %s11, 2
    %s24 = sadd.s32 1, %s19
    %p25 = scmp.ge.s32.totalorder %s24, 2
    %s26 = scalar_select %p25, 0, %s24
    %s27 = sadd.s32 1, %s18
    %s28 = scalar_select %p25, %s27, %s18
    %p29 = scmp.ge.s32.totalorder %s28, 2
    %s30 = scalar_select %p29, 0, %s28
    %s31 = ssub.s32 %s18, %s30
    %s32 = ssub.s32 %s19, %s26
    %s33 = sor.u32 %s31, %s32
    %p34 = scmp.eq.s32.totalorder %s33, 0
    %s36 = sadd.s32 %s35, 1
    %s37 = scalar_select %p34, %s35, %s36
    %p40 = pneg %p34
    %p41 = scmp.eq.s32.totalorder %s11, 3
    %p42 = por %p40, %p41
    %p43 = scmp.ne.s32.totalorder %s35, %s38
    %p44 = scmp.eq.s32.totalorder %s11, 0
    %p45 = por %p43, %p44
    %p46 = scmp.ne.s32.totalorder %s35, %s38
    %p47 = scmp.eq.s32.totalorder %s16, 3
    %p48 = por %p46, %p47
    %p49 = scmp.ne.s32.totalorder %s38, %s39
    %p50 = scmp.eq.s32.totalorder %s16, 0
    %p51 = por %p49, %p50
    %p52 = scmp.ne.s32.totalorder %s38, %s39
    %p53 = scmp.eq.s32.totalorder %s17, 3
    %p54 = por %p52, %p53
    %p56 = scmp.ne.s32.totalorder %s39, %s55
    %p57 = scmp.eq.s32.totalorder %s17, 0
    %p58 = por %p56, %p57
    %s59 = ssub.s32 %s18, %s30
    %p60 = scmp.eq.s32.totalorder %s59, 0
    %s62 = sadd.s32 %s61, 1
    %s63 = scalar_select %p60, %s61, %s62
    %p66 = pneg %p60
    %p67 = scmp.eq.s32.totalorder %s11, 3
    %p68 = por %p66, %p67
    %p69 = scmp.ne.s32.totalorder %s61, %s64
    %p70 = scmp.eq.s32.totalorder %s11, 0
    %p71 = por %p69, %p70
    %p72 = scmp.ne.s32.totalorder %s61, %s64
    %p73 = scmp.eq.s32.totalorder %s16, 3
    %p74 = por %p72, %p73
    %p75 = scmp.ne.s32.totalorder %s64, %s65
    %p76 = scmp.eq.s32.totalorder %s16, 0
    %p77 = por %p75, %p76
    %p78 = scmp.ne.s32.totalorder %s64, %s65
    %p79 = scmp.eq.s32.totalorder %s17, 3
    %p80 = por %p78, %p79
    %p82 = scmp.ne.s32.totalorder %s65, %s81
    %p83 = scmp.eq.s32.totalorder %s17, 0
    %p84 = por %p82, %p83
    %s86 = sadd.s32 %s85, 1
    %p89 = scmp.eq.s32.totalorder %s11, 3
    %p90 = scmp.ne.s32.totalorder %s85, %s87
    %p91 = scmp.eq.s32.totalorder %s11, 0
    %p92 = por %p90, %p91
    %p93 = scmp.ne.s32.totalorder %s85, %s87
    %p94 = scmp.eq.s32.totalorder %s16, 3
    %p95 = por %p93, %p94
    %p96 = scmp.ne.s32.totalorder %s87, %s88
    %p97 = scmp.eq.s32.totalorder %s16, 0
    %p98 = por %p96, %p97
    %p99 = scmp.ne.s32.totalorder %s87, %s88
    %p100 = scmp.eq.s32.totalorder %s17, 3
    %p101 = por %p99, %p100
    %p103 = scmp.ne.s32.totalorder %s88, %s102
    %p104 = scmp.eq.s32.totalorder %s17, 0
    %p105 = por %p103, %p104
    %s107 = sadd.s32 %s106, 1
    %p110 = scmp.eq.s32.totalorder %s11, 3
    %p111 = scmp.ne.s32.totalorder %s106, %s108
    %p112 = scmp.eq.s32.totalorder %s11, 0
    %p113 = por %p111, %p112
    %p114 = scmp.ne.s32.totalorder %s106, %s108
    %p115 = scmp.eq.s32.totalorder %s16, 3
    %p116 = por %p114, %p115
    %p117 = scmp.ne.s32.totalorder %s108, %s109
    %p118 = scmp.eq.s32.totalorder %s16, 0
    %p119 = por %p117, %p118
    %p120 = scmp.ne.s32.totalorder %s108, %s109
    %p121 = scmp.eq.s32.totalorder %s17, 3
    %p122 = por %p120, %p121
    %p124 = scmp.ne.s32.totalorder %s109, %s123
    %p125 = scmp.eq.s32.totalorder %s17, 0
    %p126 = por %p124, %p125
    %s127 = ssub.s32 %s18, %s30
    %s128 = ssub.s32 %s19, %s26
    %s129 = sor.u32 %s127, %s128
    %p130 = scmp.eq.s32.totalorder %s129, 0
    %s132 = sadd.s32 %s131, 1
    %s133 = scalar_select %p130, %s131, %s132
    %p136 = pneg %p130
    %p137 = scmp.eq.s32.totalorder %s11, 3
    %p138 = por %p136, %p137
    %p139 = scmp.ne.s32.totalorder %s131, %s134
    %p140 = scmp.eq.s32.totalorder %s11, 0
    %p141 = por %p139, %p140
    %p142 = scmp.ne.s32.totalorder %s131, %s134
    %p143 = scmp.eq.s32.totalorder %s16, 3
    %p144 = por %p142, %p143
    %p145 = scmp.ne.s32.totalorder %s134, %s135
    %p146 = scmp.eq.s32.totalorder %s16, 0
    %p147 = por %p145, %p146
    %p148 = scmp.ne.s32.totalorder %s134, %s135
    %p149 = scmp.eq.s32.totalorder %s17, 3
    %p150 = por %p148, %p149
    %p152 = scmp.ne.s32.totalorder %s135, %s151
    %p153 = scmp.eq.s32.totalorder %s17, 0
    %p154 = por %p152, %p153
    %s155 = ssub.s32 %s18, %s30
    %s156 = ssub.s32 %s19, %s26
    %s157 = sor.u32 %s155, %s156
    %p158 = scmp.eq.s32.totalorder %s157, 0
    %s160 = sadd.s32 %s159, 1
    %s161 = scalar_select %p158, %s159, %s160
    %p164 = pneg %p158
    %p165 = scmp.eq.s32.totalorder %s11, 3
    %p166 = por %p164, %p165
    %p167 = scmp.ne.s32.totalorder %s159, %s162
    %p168 = scmp.eq.s32.totalorder %s11, 0
    %p169 = por %p167, %p168
    %p170 = scmp.ne.s32.totalorder %s159, %s162
    %p171 = scmp.eq.s32.totalorder %s16, 3
    %p172 = por %p170, %p171
    %p173 = scmp.ne.s32.totalorder %s162, %s163
    %p174 = scmp.eq.s32.totalorder %s16, 0
    %p175 = por %p173, %p174
    %p176 = scmp.ne.s32.totalorder %s162, %s163
    %p177 = scmp.eq.s32.totalorder %s17, 3
    %p178 = por %p176, %p177
    %p180 = scmp.ne.s32.totalorder %s163, %s179
    %p181 = scmp.eq.s32.totalorder %s17, 0
    %p182 = por %p180, %p181
    %p183 = scmp.le.s32.totalorder 1, %s11
    %p184 = scmp.lt.s32.totalorder %s11, 5
    %p185 = pnand %p183, %p184
    %p186 = pneg %p185
    // Predicated region
    $region9: #{bottleneck_forward.7} parent=5 // pred_check
      _
    $region10: #{bottleneck_forward.7} parent=5 // pred_check_branch
      %188 = sbr.rel (%p185) target = $region12
    $region11: #{bottleneck_forward.7} parent=5 // pred_region
      %s189 = ssub.s32 %s11, 1
      // Predicated region
      $region13: #{bottleneck_forward.7} parent=11 // pred_check
        %p190 = pneg %p98
      $region14: #{bottleneck_forward.7} parent=11 // pred_check_branch
        %192 = sbr.rel (%p190) target = $region16
      $region15: #{bottleneck_forward.7} parent=11 // pred_region
        _
      $region16: #{bottleneck_forward.7} parent=11 // pred_fallthru
        _
      // Predicated region
      $region17: #{bottleneck_forward.7} parent=11 // pred_check
        %p193 = pneg %p119
      $region18: #{bottleneck_forward.7} parent=11 // pred_check_branch
        %195 = sbr.rel (%p193) target = $region20
      $region19: #{bottleneck_forward.7} parent=11 // pred_region
        _
      $region20: #{bottleneck_forward.7} parent=11 // pred_fallthru
        _
    $region12: #{bottleneck_forward.7} parent=5 // pred_fallthru
      _
    %p196 = scmp.lt.s32.totalorder %s11, 4
    // Predicated region
    $region21: #{bottleneck_forward.7} parent=5 // pred_check
      %p197 = pneg %p196
    $region22: #{bottleneck_forward.7} parent=5 // pred_check_branch
      %199 = sbr.rel (%p197) target = $region24
    $region23: #{bottleneck_forward.7} parent=5 // pred_region
      // Predicated region
      $region25: #{bottleneck_forward.7} parent=23 // pred_check
        %p200 = pneg %p45
      $region26: #{bottleneck_forward.7} parent=23 // pred_check_branch
        %202 = sbr.rel (%p200) target = $region28
      $region27: #{bottleneck_forward.7} parent=23 // pred_region
        %s203 = smul.u32 16, %s19
        %p204 = scmp.lt.s32.totalorder %s18, 1
        %s205 = scalar_select %p204, %s18, 1
        %p206 = scmp.lt.s32.totalorder %s203, 31
        %s207 = scalar_select %p206, %s203, 31
        %s208 = smul.addr %s205, 32
        %s209 = sadd.s32 %s207, %s208
        %s210 = smul.addr %s209, 4
        %s211 = scalar_lea.vmem %s0, %s210
        %s212 = smul.u32 16, %s19
      $region28: #{bottleneck_forward.7} parent=23 // pred_fallthru
        _
      // Predicated region
      $region29: #{bottleneck_forward.7} parent=23 // pred_check
        %p213 = pneg %p71
      $region30: #{bottleneck_forward.7} parent=23 // pred_check_branch
        %215 = sbr.rel (%p213) target = $region32
      $region31: #{bottleneck_forward.7} parent=23 // pred_region
        %p216 = scmp.lt.s32.totalorder %s18, 1
        %s217 = scalar_select %p216, %s18, 1
        %s218 = scalar_lea.vmem %s1, %s217
      $region32: #{bottleneck_forward.7} parent=23 // pred_fallthru
        _
      // Predicated region
      $region33: #{bottleneck_forward.7} parent=23 // pred_check
        %p219 = pneg %p141
      $region34: #{bottleneck_forward.7} parent=23 // pred_check_branch
        %221 = sbr.rel (%p219) target = $region36
      $region35: #{bottleneck_forward.7} parent=23 // pred_region
        %s222 = smul.u32 16, %s19
        %p223 = scmp.lt.s32.totalorder %s18, 1
        %s224 = scalar_select %p223, %s18, 1
        %p225 = scmp.lt.s32.totalorder %s222, 31
        %s226 = scalar_select %p225, %s222, 31
        %s227 = smul.addr %s224, 32
        %s228 = sadd.s32 %s226, %s227
        %s229 = smul.addr %s228, 8
        %s230 = scalar_lea.vmem %s4, %s229
        %s231 = smul.u32 16, %s19
      $region36: #{bottleneck_forward.7} parent=23 // pred_fallthru
        _
    $region24: #{bottleneck_forward.7} parent=5 // pred_fallthru
      _
    %p232 = scmp.le.s32.totalorder 1, %s11
    %p233 = scmp.lt.s32.totalorder %s11, 5
    %p234 = pnand %p232, %p233
    %p235 = pneg %p234
    // Predicated region
    $region37: #{bottleneck_forward.7} parent=5 // pred_check
      _
    $region38: #{bottleneck_forward.7} parent=5 // pred_check_branch
      %237 = sbr.rel (%p234) target = $region40
    $region39: #{bottleneck_forward.7} parent=5 // pred_region
      %s238 = ssub.s32 %s11, 1
      %s239 = smul.u32 16, %s21
      %p240 = scmp.lt.s32.totalorder %s20, 1
      %s241 = scalar_select %p240, %s20, 1
      %p242 = scmp.lt.s32.totalorder %s239, 31
      %s243 = scalar_select %p242, %s239, 31
      %s244 = smul.addr %s241, 32
      %s245 = sadd.s32 %s243, %s244
      %s246 = smul.addr %s245, 4
      %s247 = scalar_lea.vmem %s0, %s246
      %p248 = pneg %p51
      %p249 = pneg %p48
      %p250 = scmp.lt.s32.totalorder %s20, 1
      %s251 = scalar_select %p250, %s20, 1
      %s252 = scalar_lea.vmem %s1, %s251
      %p253 = pneg %p77
      %p254 = pneg %p74
      %p255 = pneg %p98
      %p256 = pneg %p95
      %p257 = pneg %p119
      %p258 = pneg %p116
      %s259 = smul.u32 16, %s21
      %p260 = scmp.lt.s32.totalorder %s20, 1
      %s261 = scalar_select %p260, %s20, 1
      %p262 = scmp.lt.s32.totalorder %s259, 31
      %s263 = scalar_select %p262, %s259, 31
      %s264 = smul.addr %s261, 32
      %s265 = sadd.s32 %s263, %s264
      %s266 = smul.addr %s265, 8
      %s267 = scalar_lea.vmem %s4, %s266
      %p268 = pneg %p147
      %p269 = pneg %p144
      %p270 = pneg %p175
      %p271 = pneg %p172
      %s272 = smul.u32 16, %s21
      %p273 = scmp.lt.s32.totalorder %s20, 1
      %s274 = scalar_select %p273, %s20, 1
      %p275 = scmp.lt.s32.totalorder %s272, 31
      %s276 = scalar_select %p275, %s272, 31
      %s277 = smul.addr %s274, 32
      %s278 = sadd.s32 %s276, %s277
      %s279 = smul.addr %s278, 8
      %s280 = scalar_lea.vmem %s5, %s279
      %s281 = smul.u32 16, %s21
      %p282 = scmp.lt.s32.totalorder %s20, 1
      %s283 = scalar_select %p282, %s20, 1
      %p284 = scmp.lt.s32.totalorder %s281, 31
      %s285 = scalar_select %p284, %s281, 31
      %s286 = smul.addr %s283, 32
      %s287 = sadd.s32 %s285, %s286
      %s288 = smul.addr %s287, 4
      %s289 = scalar_lea.vmem %s0, %s288
      %s290 = smul.u32 16, %s21
      %p291 = scmp.lt.s32.totalorder %s20, 1
      %s292 = scalar_select %p291, %s20, 1
      %s293 = scalar_lea.vmem %s1, %s292
      %s294 = smul.u32 16, %s21
      %p295 = scmp.lt.s32.totalorder %s20, 1
      %s296 = scalar_select %p295, %s20, 1
      %p297 = scmp.lt.s32.totalorder %s294, 31
      %s298 = scalar_select %p297, %s294, 31
      %s299 = smul.addr %s296, 32
      %s300 = sadd.s32 %s298, %s299
      %s301 = smul.addr %s300, 8
      %s302 = scalar_lea.vmem %s4, %s301
      %s303 = smul.u32 16, %s21
      %s304 = smul.u32 16, %s21
      %p305 = scmp.lt.s32.totalorder %s20, 1
      %s306 = scalar_select %p305, %s20, 1
      %p307 = scmp.lt.s32.totalorder %s304, 31
      %s308 = scalar_select %p307, %s304, 31
      %s309 = smul.addr %s306, 32
      %s310 = sadd.s32 %s308, %s309
      %s311 = smul.addr %s310, 8
      %s312 = scalar_lea.vmem %s5, %s311
      %s313 = smul.u32 16, %s21
      %v315 = vld [vmem:[%s289] sm:$0xf]
      %v316 = vld [vmem:[%s289 + $0x4] sm:$0xf]
      %v317 = vld [vmem:[%s289 + $0x8] sm:$0xf]
      %v318 = vld [vmem:[%s289 + $0xc] sm:$0xf]
      %v319 = vld [vmem:[%s289 + $0x10] sm:$0xf]
      %v320 = vld [vmem:[%s289 + $0x14] sm:$0xf]
      %v321 = vld [vmem:[%s289 + $0x18] sm:$0xf]
      %v322 = vld [vmem:[%s289 + $0x1c] sm:$0xf]
      %v323 = vld [vmem:[%s289 + $0x20] sm:$0xf]
      %v324 = vld [vmem:[%s289 + $0x24] sm:$0xf]
      %v325 = vld [vmem:[%s289 + $0x28] sm:$0xf]
      %v326 = vld [vmem:[%s289 + $0x2c] sm:$0xf]
      %v327 = vld [vmem:[%s289 + $0x30] sm:$0xf]
      %v328 = vld [vmem:[%s289 + $0x34] sm:$0xf]
      %v329 = vld [vmem:[%s289 + $0x38] sm:$0xf]
      %v330 = vld [vmem:[%s289 + $0x3c] sm:$0xf]
      %v331 = vunpack.c.l.bf16 %v315
      %v332 = vunpack.c.l.bf16 %v316
      %v333 = vunpack.c.l.bf16 %v317
      %v334 = vunpack.c.l.bf16 %v318
      %v335 = vunpack.c.l.bf16 %v319
      %v336 = vunpack.c.l.bf16 %v320
      %v337 = vunpack.c.l.bf16 %v321
      %v338 = vunpack.c.l.bf16 %v322
      %v339 = vunpack.c.l.bf16 %v323
      %v340 = vunpack.c.l.bf16 %v324
      %v341 = vunpack.c.l.bf16 %v325
      %v342 = vunpack.c.l.bf16 %v326
      %v343 = vunpack.c.l.bf16 %v327
      %v344 = vunpack.c.l.bf16 %v328
      %v345 = vunpack.c.l.bf16 %v329
      %v346 = vunpack.c.l.bf16 %v330
      %v347 = vld [vmem:[%s293] sm:$0x1]
      %v349 = vlaneseq
      %v350 = vshrl.u32 %v349, 7
      %v351 = vsub.s32 0, %v350
      %v352 = vrot.slane %v347, %v351
      %v354 = vmul.f32 %v331, %v352
      %v355 = vmul.f32 %v332, %v352
      %v356 = vmul.f32 %v333, %v352
      %v357 = vmul.f32 %v334, %v352
      %v358 = vmul.f32 %v335, %v352
      %v359 = vmul.f32 %v336, %v352
      %v360 = vmul.f32 %v337, %v352
      %v361 = vmul.f32 %v338, %v352
      %v362 = vmul.f32 %v339, %v352
      %v363 = vmul.f32 %v340, %v352
      %v364 = vmul.f32 %v341, %v352
      %v365 = vmul.f32 %v342, %v352
      %v366 = vmul.f32 %v343, %v352
      %v367 = vmul.f32 %v344, %v352
      %v368 = vmul.f32 %v345, %v352
      %v369 = vmul.f32 %v346, %v352
      %v370 = vpack.c.bf16 %v355, %v354
      %v371 = vpack.c.bf16 %v357, %v356
      %v372 = vpack.c.bf16 %v359, %v358
      %v373 = vpack.c.bf16 %v361, %v360
      %v374 = vpack.c.bf16 %v363, %v362
      %v375 = vpack.c.bf16 %v365, %v364
      %v376 = vpack.c.bf16 %v367, %v366
      %v377 = vpack.c.bf16 %v369, %v368
      %v378 = vld [vmem:[%s2] sm:$0x3]
      %v379 = vld [vmem:[%s3] sm:$0x1]
      %v381 = vlaneseq
      %v382 = vshrl.u32 %v381, 7
      %v383 = vsub.s32 0, %v382
      %v384 = vrot.slane %v379, %v383
      %vm386 = vcmask 31744
      %v388 = vsel %vm386, %v370, 0
      %v391 = vsel %vm386, %v371, 0
      %v394 = vsel %vm386, %v372, 0
      %v397 = vsel %vm386, %v373, 0
      %v400 = vsel %vm386, %v374, 0
      %v403 = vsel %vm386, %v375, 0
      %v406 = vsel %vm386, %v376, 0
      %v409 = vsel %vm386, %v377, 0
      %vm411 = vcmask 1041408
      %v413 = vsel %vm411, %v378, 0
      %415 = vmatprep.subr.bf16.mxu0 0
      %416 = vmatpush1.bf16.msra.mxu0 %v413
      %417 = vmatprep.subr.bf16.mxu0 0
      %418 = vmatpush1.bf16.msra.mxu0 0
      %419 = vmatprep.subr.bf16.mxu0 0
      %420 = vmatpush1.bf16.msra.mxu0 0
      %421 = vmatprep.subr.bf16.mxu0 0
      %422 = vmatpush1.bf16.msra.mxu0 0
      %423 = vmatprep.subr.bf16.mxu0 0
      %424 = vmatpush1.bf16.msra.mxu0 0
      %425 = vmatprep.subr.bf16.mxu0 0
      %426 = vmatpush1.bf16.msra.mxu0 0
      %427 = vmatprep.subr.bf16.mxu0 0
      %428 = vmatpush1.bf16.msra.mxu0 0
      %429 = vmatprep.subr.bf16.mxu0 0
      %430 = vmatpush1.bf16.msra.mxu0 0
      %431 = vmatprep.subr.bf16.mxu0 0
      %432 = vmatpush1.bf16.msra.mxu0 0
      %433 = vmatprep.subr.bf16.mxu0 0
      %434 = vmatpush1.bf16.msra.mxu0 0
      %435 = vmatprep.subr.bf16.mxu0 0
      %436 = vmatpush1.bf16.msra.mxu0 0
      %437 = vmatprep.subr.bf16.mxu0 0
      %438 = vmatpush1.bf16.msra.mxu0 0
      %439 = vmatprep.subr.bf16.mxu0 0
      %440 = vmatpush1.bf16.msra.mxu0 0
      %441 = vmatprep.subr.bf16.mxu0 0
      %442 = vmatpush1.bf16.msra.mxu0 0
      %443 = vmatprep.subr.bf16.mxu0 0
      %444 = vmatpush1.bf16.msra.mxu0 0
      %445 = vmatprep.subr.bf16.mxu0 0
      %446 = vmatpush1.bf16.msra.mxu0 0
      %447 = vmatprep.mubr.bf16.mxu0 0
      %448 = vmatmul.mubr.bf16.gmra.mrb[0].mxu0 %v388
      %v449 = vpop.f32.mrb[0].mxu0
      %v450 = vadd.f32 %v384, %v449
      %v451 = vpop.f32.mrb[0].mxu0
      %v452 = vpop.f32.mrb[0].mxu0
      %v453 = vadd.f32 %v384, %v452
      %v454 = vpop.f32.mrb[0].mxu0
      %455 = vmatprep.mubr.bf16.mxu0 0
      %456 = vmatmul.mubr.bf16.gmra.mrb[0].mxu0 %v391
      %v457 = vpop.f32.mrb[0].mxu0
      %v458 = vadd.f32 %v384, %v457
      %v459 = vpop.f32.mrb[0].mxu0
      %v460 = vpop.f32.mrb[0].mxu0
      %v461 = vadd.f32 %v384, %v460
      %v462 = vpop.f32.mrb[0].mxu0
      %463 = vmatprep.mubr.bf16.mxu0 0
      %464 = vmatmul.mubr.bf16.gmra.mrb[0].mxu0 %v394
      %v465 = vpop.f32.mrb[0].mxu0
      %v466 = vadd.f32 %v384, %v465
      %v467 = vpop.f32.mrb[0].mxu0
      %v468 = vpop.f32.mrb[0].mxu0
      %v469 = vadd.f32 %v384, %v468
      %v470 = vpop.f32.mrb[0].mxu0
      %471 = vmatprep.mubr.bf16.mxu0 0
      %472 = vmatmul.mubr.bf16.gmra.mrb[0].mxu0 %v397
      %v473 = vpop.f32.mrb[0].mxu0
      %v474 = vadd.f32 %v384, %v473
      %v475 = vpop.f32.mrb[0].mxu0
      %v476 = vpop.f32.mrb[0].mxu0
      %v477 = vadd.f32 %v384, %v476
      %v478 = vpop.f32.mrb[0].mxu0
      %479 = vmatprep.mubr.bf16.mxu0 0
      %480 = vmatmul.mubr.bf16.gmra.mrb[0].mxu0 %v400
      %v481 = vpop.f32.mrb[0].mxu0
      %v482 = vadd.f32 %v384, %v481
      %v483 = vpop.f32.mrb[0].mxu0
      %v484 = vpop.f32.mrb[0].mxu0
      %v485 = vadd.f32 %v384, %v484
      %v486 = vpop.f32.mrb[0].mxu0
      %487 = vmatprep.mubr.bf16.mxu0 0
      %488 = vmatmul.mubr.bf16.gmra.mrb[0].mxu0 %v403
      %v489 = vpop.f32.mrb[0].mxu0
      %v490 = vadd.f32 %v384, %v489
      %v491 = vpop.f32.mrb[0].mxu0
      %v492 = vpop.f32.mrb[0].mxu0
      %v493 = vadd.f32 %v384, %v492
      %v494 = vpop.f32.mrb[0].mxu0
      %495 = vmatprep.mubr.bf16.mxu0 0
      %496 = vmatmul.mubr.bf16.gmra.mrb[0].mxu0 %v406
      %v497 = vpop.f32.mrb[0].mxu0
      %v498 = vadd.f32 %v384, %v497
      %v499 = vpop.f32.mrb[0].mxu0
      %v500 = vpop.f32.mrb[0].mxu0
      %v501 = vadd.f32 %v384, %v500
      %v502 = vpop.f32.mrb[0].mxu0
      %503 = vmatprep.mubr.bf16.mxu0 0
      %504 = vmatmul.mubr.bf16.gmra.mrb[0].mxu0 %v409
      %v505 = vpop.f32.mrb[0].mxu0
      %v506 = vadd.f32 %v384, %v505
      %v507 = vpop.f32.mrb[0].mxu0
      %v508 = vpop.f32.mrb[0].mxu0
      %v509 = vadd.f32 %v384, %v508
      %v510 = vpop.f32.mrb[0].mxu0
      %511 = vdwg.mxu0
      %v512 = vld [vmem:[%s302] sm:$0xff]
      %v513 = vld [vmem:[%s302 + $0x8] sm:$0xff]
      %v514 = vld [vmem:[%s302 + $0x10] sm:$0xff]
      %v515 = vld [vmem:[%s302 + $0x18] sm:$0xff]
      %v516 = vld [vmem:[%s302 + $0x20] sm:$0xff]
      %v517 = vld [vmem:[%s302 + $0x28] sm:$0xff]
      %v518 = vld [vmem:[%s302 + $0x30] sm:$0xff]
      %v519 = vld [vmem:[%s302 + $0x38] sm:$0xff]
      %v520 = vld [vmem:[%s302 + $0x40] sm:$0xff]
      %v521 = vld [vmem:[%s302 + $0x48] sm:$0xff]
      %v522 = vld [vmem:[%s302 + $0x50] sm:$0xff]
      %v523 = vld [vmem:[%s302 + $0x58] sm:$0xff]
      %v524 = vld [vmem:[%s302 + $0x60] sm:$0xff]
      %v525 = vld [vmem:[%s302 + $0x68] sm:$0xff]
      %v526 = vld [vmem:[%s302 + $0x70] sm:$0xff]
      %v527 = vld [vmem:[%s302 + $0x78] sm:$0xff]
      %v528 = vadd.f32 %v450, %v512
      %v529 = vadd.f32 %v453, %v513
      %v530 = vadd.f32 %v458, %v514
      %v531 = vadd.f32 %v461, %v515
      %v532 = vadd.f32 %v466, %v516
      %v533 = vadd.f32 %v469, %v517
      %v534 = vadd.f32 %v474, %v518
      %v535 = vadd.f32 %v477, %v519
      %v536 = vadd.f32 %v482, %v520
      %v537 = vadd.f32 %v485, %v521
      %v538 = vadd.f32 %v490, %v522
      %v539 = vadd.f32 %v493, %v523
      %v540 = vadd.f32 %v498, %v524
      %v541 = vadd.f32 %v501, %v525
      %v542 = vadd.f32 %v506, %v526
      %v543 = vadd.f32 %v509, %v527
      %v544 = vmax.f32 %v528, 0.0
      %v545 = vmax.f32 %v529, 0.0
      %v546 = vmax.f32 %v530, 0.0
      %v547 = vmax.f32 %v531, 0.0
      %v548 = vmax.f32 %v532, 0.0
      %v549 = vmax.f32 %v533, 0.0
      %v550 = vmax.f32 %v534, 0.0
      %v551 = vmax.f32 %v535, 0.0
      %v552 = vmax.f32 %v536, 0.0
      %v553 = vmax.f32 %v537, 0.0
      %v554 = vmax.f32 %v538, 0.0
      %v555 = vmax.f32 %v539, 0.0
      %v556 = vmax.f32 %v540, 0.0
      %v557 = vmax.f32 %v541, 0.0
      %v558 = vmax.f32 %v542, 0.0
      %v559 = vmax.f32 %v543, 0.0
      %vm560 = vcmask 130048
      %561 = vst.msk [vmem:[%s312] sm:$0xff] %vm560, %v544
      %562 = vst.msk [vmem:[%s312 + $0x8] sm:$0xff] %vm560, %v545
      %563 = vst.msk [vmem:[%s312 + $0x10] sm:$0xff] %vm560, %v546
      %564 = vst.msk [vmem:[%s312 + $0x18] sm:$0xff] %vm560, %v547
      %565 = vst.msk [vmem:[%s312 + $0x20] sm:$0xff] %vm560, %v548
      %566 = vst.msk [vmem:[%s312 + $0x28] sm:$0xff] %vm560, %v549
      %567 = vst.msk [vmem:[%s312 + $0x30] sm:$0xff] %vm560, %v550
      %568 = vst.msk [vmem:[%s312 + $0x38] sm:$0xff] %vm560, %v551
      %569 = vst.msk [vmem:[%s312 + $0x40] sm:$0xff] %vm560, %v552
      %570 = vst.msk [vmem:[%s312 + $0x48] sm:$0xff] %vm560, %v553
      %571 = vst.msk [vmem:[%s312 + $0x50] sm:$0xff] %vm560, %v554
      %572 = vst.msk [vmem:[%s312 + $0x58] sm:$0xff] %vm560, %v555
      %573 = vst.msk [vmem:[%s312 + $0x60] sm:$0xff] %vm560, %v556
      %574 = vst.msk [vmem:[%s312 + $0x68] sm:$0xff] %vm560, %v557
      %575 = vst.msk [vmem:[%s312 + $0x70] sm:$0xff] %vm560, %v558
      %576 = vst.msk [vmem:[%s312 + $0x78] sm:$0xff] %vm560, %v559
      %s577 = smul.u32 16, %s21
      %p578 = scmp.lt.s32.totalorder %s20, 1
      %s579 = scalar_select %p578, %s20, 1
      %p580 = scmp.lt.s32.totalorder %s577, 31
      %s581 = scalar_select %p580, %s577, 31
      %s582 = smul.addr %s579, 32
      %s583 = sadd.s32 %s581, %s582
      %s584 = smul.addr %s583, 8
      %s585 = scalar_lea.vmem %s5, %s584
      // Predicated region
      $region41: #{bottleneck_forward.7} parent=39 // pred_check
        %p586 = pneg %p172
      $region42: #{bottleneck_forward.7} parent=39 // pred_check_branch
        %588 = sbr.rel (%p586) target = $region44
      $region43: #{bottleneck_forward.7} parent=39 // pred_region
        %s589 = smul.u32 16, %s21
      $region44: #{bottleneck_forward.7} parent=39 // pred_fallthru
        _
    $region40: #{bottleneck_forward.7} parent=5 // pred_fallthru
      _
    %p590 = scmp.le.s32.totalorder 2, %s11
    // Predicated region
    $region45: #{bottleneck_forward.7} parent=5 // pred_check
      %p591 = pneg %p590
    $region46: #{bottleneck_forward.7} parent=5 // pred_check_branch
      %593 = sbr.rel (%p591) target = $region48
    $region47: #{bottleneck_forward.7} parent=5 // pred_region
      %s594 = ssub.s32 %s11, 2
      // Predicated region
      $region49: #{bottleneck_forward.7} parent=47 // pred_check
        %p595 = pneg %p178
      $region50: #{bottleneck_forward.7} parent=47 // pred_check_branch
        %597 = sbr.rel (%p595) target = $region52
      $region51: #{bottleneck_forward.7} parent=47 // pred_region
        %s598 = smul.u32 16, %s23
        %p599 = scmp.lt.s32.totalorder %s22, 1
        %s600 = scalar_select %p599, %s22, 1
        %p601 = scmp.lt.s32.totalorder %s598, 31
        %s602 = scalar_select %p601, %s598, 31
        %s603 = smul.addr %s600, 32
        %s604 = sadd.s32 %s602, %s603
        %s605 = smul.addr %s604, 8
        %s606 = scalar_lea.vmem %s5, %s605
      $region52: #{bottleneck_forward.7} parent=47 // pred_fallthru
        _
    $region48: #{bottleneck_forward.7} parent=5 // pred_fallthru
      _
  $region6: #{bottleneck_forward.7} parent=0 // loop_footer
    %s15 = sadd.s32 1, %s11
  $region7: #{bottleneck_forward.7} parent=0 // loop_footer_branch
    %10 = sbr.rel target = $region3
  $region8: #{bottleneck_forward.7} parent=0 // loop_exit
    _

// kernel: bottleneck_forward.5
$region0: #{bottleneck_forward.5}
  #allocation0 [shape = 'u32[]', space=smem, size = 0x4, offset = 0x4, fixed_abs, tag = 'smem constant byte address 0x4 - core index']
  #allocation1 [shape = 'u32[144,128]{1,0:T(1,128)}', space=vmem, size = 0x12000, scoped, tag = 'internal scratch']
  #allocation2 [shape = 'f32[10,25,4]{2,1,0:T(8,128)}', space=vmem, size = 0x28000, scoped, tag = 'scratch operand']
  #allocation3 [shape = 'f32[1,4]{1,0:T(1,128)}', space=vmem, size = 0x200, scoped, tag = 'scratch operand']
  %s0 = inlined_call_operand.vmem [shape: bf16[2,16,16,4], index: 0, kind: input, shape index: {}, may-alias: {0,1,2}]
  %s1 = inlined_call_operand.vmem [shape: bf16[2,16,16,4], index: 1, kind: input, shape index: {}, may-alias: {0,1,2}]
  %s2 = inlined_call_operand.vmem [shape: bf16[2,16,16,4], index: 2, kind: input, shape index: {}, may-alias: {0,1,2}]
  %s3 = inlined_call_operand.vmem [shape: bf16[3,3,4,4], index: 3, kind: input, shape index: {}]
  %s4 = inlined_call_operand.vmem [shape: bf16[2,256,4], index: 4, kind: output, shape index: {0}]
  %s5 = inlined_call_operand.vmem [shape: f32[2,1,4], index: 5, kind: output, shape index: {1}]
  %6 = xla_tuple %s4, %s5
  %s7 = sld [smem:[#allocation0]]
  $region81: #{bottleneck_forward.5} parent=0
    _
  %s9 = ssub.s32 1, %s7
  %s10 = scalar_select 0, %s9, %s7
  loop: start=0, step=1, limit=6
  $region2: #{bottleneck_forward.5} parent=0 // loop_pre_header
    _
  $region3: #{bottleneck_forward.5} parent=0 // loop_header
    %s12 = sphi 0, %s16
    %p13 = scmp.ge.s32.totalorder %s12, 6
    %s19 = sphi 0, %s31
    %s20 = sphi 0, %s27
    %s21 = sphi 0, %s19
    %s22 = sphi 0, %s20
    %s23 = sphi 0, %s21
    %s24 = sphi 0, %s22
    %s36 = sphi 0, %s38
    %s39 = sphi 0, %s36
    %s40 = sphi 0, %s39
    %s56 = sphi 0, %s40
    %s72 = sphi 0, %s74
    %s75 = sphi 0, %s72
    %s76 = sphi 0, %s75
    %s92 = sphi 0, %s76
    %s108 = sphi 0, %s110
    %s111 = sphi 0, %s108
    %s112 = sphi 0, %s111
    %s128 = sphi 0, %s112
    %s132 = sphi 0, %s132
    %s134 = sphi 0, %s132
    %s135 = sphi 0, %s134
    %s149 = sphi 0, %s135
    %s157 = sphi 0, %s159
    %s160 = sphi 0, %s157
    %s161 = sphi 0, %s160
    %s177 = sphi 0, %s161
    %s183 = sphi 0, %s185
    %s186 = sphi 0, %s183
    %s187 = sphi 0, %s186
    %s203 = sphi 0, %s187
  $region4: #{bottleneck_forward.5} parent=0 // loop_header_branch
    %15 = sbr.rel (%p13) target = $region8
  $region5: #{bottleneck_forward.5} parent=0 // loop_body
    %s17 = ssub.s32 %s12, 1
    %s18 = ssub.s32 %s12, 2
    %s25 = sadd.s32 1, %s20
    %p26 = scmp.ge.s32.totalorder %s25, 2
    %s27 = scalar_select %p26, 0, %s25
    %s28 = sadd.s32 1, %s19
    %s29 = scalar_select %p26, %s28, %s19
    %p30 = scmp.ge.s32.totalorder %s29, 2
    %s31 = scalar_select %p30, 0, %s29
    %s32 = ssub.s32 %s19, %s31
    %s33 = ssub.s32 %s20, %s27
    %s34 = sor.u32 %s32, %s33
    %p35 = scmp.eq.s32.totalorder %s34, 0
    %s37 = sadd.s32 %s36, 1
    %s38 = scalar_select %p35, %s36, %s37
    %p41 = pneg %p35
    %p42 = scmp.eq.s32.totalorder %s12, 3
    %p43 = por %p41, %p42
    %p44 = scmp.ne.s32.totalorder %s36, %s39
    %p45 = scmp.eq.s32.totalorder %s12, 0
    %p46 = por %p44, %p45
    %p47 = scmp.ne.s32.totalorder %s36, %s39
    %p48 = scmp.eq.s32.totalorder %s17, 3
    %p49 = por %p47, %p48
    %p50 = scmp.ne.s32.totalorder %s39, %s40
    %p51 = scmp.eq.s32.totalorder %s17, 0
    %p52 = por %p50, %p51
    %p53 = scmp.ne.s32.totalorder %s39, %s40
    %p54 = scmp.eq.s32.totalorder %s18, 3
    %p55 = por %p53, %p54
    %p57 = scmp.ne.s32.totalorder %s40, %s56
    %p58 = scmp.eq.s32.totalorder %s18, 0
    %p59 = por %p57, %p58
    %s60 = smul.u32 %s20, 8
    %s61 = ssub.s32 %s60, 1
    %p62 = scmp.gt.s32.totalorder %s61, 0
    %s63 = scalar_select %p62, %s61, 0
    %s64 = smul.u32 %s27, 8
    %s65 = ssub.s32 %s64, 1
    %p66 = scmp.gt.s32.totalorder %s65, 0
    %s67 = scalar_select %p66, %s65, 0
    %s68 = ssub.s32 %s19, %s31
    %s69 = ssub.s32 %s63, %s67
    %s70 = sor.u32 %s68, %s69
    %p71 = scmp.eq.s32.totalorder %s70, 0
    %s73 = sadd.s32 %s72, 1
    %s74 = scalar_select %p71, %s72, %s73
    %p77 = pneg %p71
    %p78 = scmp.eq.s32.totalorder %s12, 3
    %p79 = por %p77, %p78
    %p80 = scmp.ne.s32.totalorder %s72, %s75
    %p81 = scmp.eq.s32.totalorder %s12, 0
    %p82 = por %p80, %p81
    %p83 = scmp.ne.s32.totalorder %s72, %s75
    %p84 = scmp.eq.s32.totalorder %s17, 3
    %p85 = por %p83, %p84
    %p86 = scmp.ne.s32.totalorder %s75, %s76
    %p87 = scmp.eq.s32.totalorder %s17, 0
    %p88 = por %p86, %p87
    %p89 = scmp.ne.s32.totalorder %s75, %s76
    %p90 = scmp.eq.s32.totalorder %s18, 3
    %p91 = por %p89, %p90
    %p93 = scmp.ne.s32.totalorder %s76, %s92
    %p94 = scmp.eq.s32.totalorder %s18, 0
    %p95 = por %p93, %p94
    %s96 = sadd.s32 %s20, 1
    %s97 = smul.u32 %s96, 8
    %p98 = scmp.lt.s32.totalorder %s97, 15
    %s99 = scalar_select %p98, %s97, 15
    %s100 = sadd.s32 %s27, 1
    %s101 = smul.u32 %s100, 8
    %p102 = scmp.lt.s32.totalorder %s101, 15
    %s103 = scalar_select %p102, %s101, 15
    %s104 = ssub.s32 %s19, %s31
    %s105 = ssub.s32 %s99, %s103
    %s106 = sor.u32 %s104, %s105
    %p107 = scmp.eq.s32.totalorder %s106, 0
    %s109 = sadd.s32 %s108, 1
    %s110 = scalar_select %p107, %s108, %s109
    %p113 = pneg %p107
    %p114 = scmp.eq.s32.totalorder %s12, 3
    %p115 = por %p113, %p114
    %p116 = scmp.ne.s32.totalorder %s108, %s111
    %p117 = scmp.eq.s32.totalorder %s12, 0
    %p118 = por %p116, %p117
    %p119 = scmp.ne.s32.totalorder %s108, %s111
    %p120 = scmp.eq.s32.totalorder %s17, 3
    %p121 = por %p119, %p120
    %p122 = scmp.ne.s32.totalorder %s111, %s112
    %p123 = scmp.eq.s32.totalorder %s17, 0
    %p124 = por %p122, %p123
    %p125 = scmp.ne.s32.totalorder %s111, %s112
    %p126 = scmp.eq.s32.totalorder %s18, 3
    %p127 = por %p125, %p126
    %p129 = scmp.ne.s32.totalorder %s112, %s128
    %p130 = scmp.eq.s32.totalorder %s18, 0
    %p131 = por %p129, %p130
    %s133 = sadd.s32 %s132, 1
    %p136 = scmp.eq.s32.totalorder %s12, 3
    %p137 = scmp.ne.s32.totalorder %s132, %s134
    %p138 = scmp.eq.s32.totalorder %s12, 0
    %p139 = por %p137, %p138
    %p140 = scmp.ne.s32.totalorder %s132, %s134
    %p141 = scmp.eq.s32.totalorder %s17, 3
    %p142 = por %p140, %p141
    %p143 = scmp.ne.s32.totalorder %s134, %s135
    %p144 = scmp.eq.s32.totalorder %s17, 0
    %p145 = por %p143, %p144
    %p146 = scmp.ne.s32.totalorder %s134, %s135
    %p147 = scmp.eq.s32.totalorder %s18, 3
    %p148 = por %p146, %p147
    %p150 = scmp.ne.s32.totalorder %s135, %s149
    %p151 = scmp.eq.s32.totalorder %s18, 0
    %p152 = por %p150, %p151
    %s153 = ssub.s32 %s19, %s31
    %s154 = ssub.s32 %s20, %s27
    %s155 = sor.u32 %s153, %s154
    %p156 = scmp.eq.s32.totalorder %s155, 0
    %s158 = sadd.s32 %s157, 1
    %s159 = scalar_select %p156, %s157, %s158
    %p162 = pneg %p156
    %p163 = scmp.eq.s32.totalorder %s12, 3
    %p164 = por %p162, %p163
    %p165 = scmp.ne.s32.totalorder %s157, %s160
    %p166 = scmp.eq.s32.totalorder %s12, 0
    %p167 = por %p165, %p166
    %p168 = scmp.ne.s32.totalorder %s157, %s160
    %p169 = scmp.eq.s32.totalorder %s17, 3
    %p170 = por %p168, %p169
    %p171 = scmp.ne.s32.totalorder %s160, %s161
    %p172 = scmp.eq.s32.totalorder %s17, 0
    %p173 = por %p171, %p172
    %p174 = scmp.ne.s32.totalorder %s160, %s161
    %p175 = scmp.eq.s32.totalorder %s18, 3
    %p176 = por %p174, %p175
    %p178 = scmp.ne.s32.totalorder %s161, %s177
    %p179 = scmp.eq.s32.totalorder %s18, 0
    %p180 = por %p178, %p179
    %s181 = ssub.s32 %s19, %s31
    %p182 = scmp.eq.s32.totalorder %s181, 0
    %s184 = sadd.s32 %s183, 1
    %s185 = scalar_select %p182, %s183, %s184
    %p188 = pneg %p182
    %p189 = scmp.eq.s32.totalorder %s12, 3
    %p190 = por %p188, %p189
    %p191 = scmp.ne.s32.totalorder %s183, %s186
    %p192 = scmp.eq.s32.totalorder %s12, 0
    %p193 = por %p191, %p192
    %p194 = scmp.ne.s32.totalorder %s183, %s186
    %p195 = scmp.eq.s32.totalorder %s17, 3
    %p196 = por %p194, %p195
    %p197 = scmp.ne.s32.totalorder %s186, %s187
    %p198 = scmp.eq.s32.totalorder %s17, 0
    %p199 = por %p197, %p198
    %p200 = scmp.ne.s32.totalorder %s186, %s187
    %p201 = scmp.eq.s32.totalorder %s18, 3
    %p202 = por %p200, %p201
    %p204 = scmp.ne.s32.totalorder %s187, %s203
    %p205 = scmp.eq.s32.totalorder %s18, 0
    %p206 = por %p204, %p205
    %p207 = scmp.le.s32.totalorder 1, %s12
    %p208 = scmp.lt.s32.totalorder %s12, 5
    %p209 = pnand %p207, %p208
    %p210 = pneg %p209
    // Predicated region
    $region9: #{bottleneck_forward.5} parent=5 // pred_check
      _
    $region10: #{bottleneck_forward.5} parent=5 // pred_check_branch
      %212 = sbr.rel (%p209) target = $region12
    $region11: #{bottleneck_forward.5} parent=5 // pred_region
      %s213 = ssub.s32 %s12, 1
      // Predicated region
      $region13: #{bottleneck_forward.5} parent=11 // pred_check
        %p214 = pneg %p145
      $region14: #{bottleneck_forward.5} parent=11 // pred_check_branch
        %216 = sbr.rel (%p214) target = $region16
      $region15: #{bottleneck_forward.5} parent=11 // pred_region
        _
      $region16: #{bottleneck_forward.5} parent=11 // pred_fallthru
        _
    $region12: #{bottleneck_forward.5} parent=5 // pred_fallthru
      _
    %p217 = scmp.lt.s32.totalorder %s12, 4
    // Predicated region
    $region17: #{bottleneck_forward.5} parent=5 // pred_check
      %p218 = pneg %p217
    $region18: #{bottleneck_forward.5} parent=5 // pred_check_branch
      %220 = sbr.rel (%p218) target = $region20
    $region19: #{bottleneck_forward.5} parent=5 // pred_region
      // Predicated region
      $region21: #{bottleneck_forward.5} parent=19 // pred_check
        %p221 = pneg %p46
      $region22: #{bottleneck_forward.5} parent=19 // pred_check_branch
        %223 = sbr.rel (%p221) target = $region24
      $region23: #{bottleneck_forward.5} parent=19 // pred_region
        %s224 = smul.u32 8, %s20
        %p225 = scmp.lt.s32.totalorder %s19, 1
        %s226 = scalar_select %p225, %s19, 1
        %p227 = scmp.lt.s32.totalorder %s224, 15
        %s228 = scalar_select %p227, %s224, 15
        %s229 = smul.addr %s228, 2
        %s230 = smul.addr %s226, 32
        %s231 = sadd.s32 %s229, %s230
        %s232 = smul.addr %s231, 4
        %s233 = scalar_lea.vmem %s0, %s232
        %s234 = smul.u32 8, %s20
      $region24: #{bottleneck_forward.5} parent=19 // pred_fallthru
        _
      // Predicated region
      $region25: #{bottleneck_forward.5} parent=19 // pred_check
        %p235 = pneg %p82
      $region26: #{bottleneck_forward.5} parent=19 // pred_check_branch
        %237 = sbr.rel (%p235) target = $region28
      $region27: #{bottleneck_forward.5} parent=19 // pred_region
        %s238 = smul.u32 %s20, 8
        %s239 = ssub.s32 %s238, 1
        %p240 = scmp.gt.s32.totalorder %s239, 0
        %s241 = scalar_select %p240, %s239, 0
        %p242 = scmp.lt.s32.totalorder %s19, 1
        %s243 = scalar_select %p242, %s19, 1
        %p244 = scmp.lt.s32.totalorder %s241, 15
        %s245 = scalar_select %p244, %s241, 15
        %s246 = smul.addr %s245, 2
        %s247 = smul.addr %s243, 32
        %s248 = sadd.s32 %s246, %s247
        %s249 = smul.addr %s248, 4
        %s250 = scalar_lea.vmem %s1, %s249
        %s251 = smul.u32 %s20, 8
        %s252 = ssub.s32 %s251, 1
        %p253 = scmp.gt.s32.totalorder %s252, 0
        %s254 = scalar_select %p253, %s252, 0
      $region28: #{bottleneck_forward.5} parent=19 // pred_fallthru
        _
      // Predicated region
      $region29: #{bottleneck_forward.5} parent=19 // pred_check
        %p255 = pneg %p118
      $region30: #{bottleneck_forward.5} parent=19 // pred_check_branch
        %257 = sbr.rel (%p255) target = $region32
      $region31: #{bottleneck_forward.5} parent=19 // pred_region
        %s258 = sadd.s32 %s20, 1
        %s259 = smul.u32 %s258, 8
        %p260 = scmp.lt.s32.totalorder %s259, 15
        %s261 = scalar_select %p260, %s259, 15
        %p262 = scmp.lt.s32.totalorder %s19, 1
        %s263 = scalar_select %p262, %s19, 1
        %p264 = scmp.lt.s32.totalorder %s261, 15
        %s265 = scalar_select %p264, %s261, 15
        %s266 = smul.addr %s265, 2
        %s267 = smul.addr %s263, 32
        %s268 = sadd.s32 %s266, %s267
        %s269 = smul.addr %s268, 4
        %s270 = scalar_lea.vmem %s2, %s269
        %s271 = sadd.s32 %s20, 1
        %s272 = smul.u32 %s271, 8
        %p273 = scmp.lt.s32.totalorder %s272, 15
        %s274 = scalar_select %p273, %s272, 15
      $region32: #{bottleneck_forward.5} parent=19 // pred_fallthru
        _
    $region20: #{bottleneck_forward.5} parent=5 // pred_fallthru
      _
    %p275 = scmp.le.s32.totalorder 1, %s12
    %p276 = scmp.lt.s32.totalorder %s12, 5
    %p277 = pnand %p275, %p276
    %p278 = pneg %p277
    // Predicated region
    $region33: #{bottleneck_forward.5} parent=5 // pred_check
      _
    $region34: #{bottleneck_forward.5} parent=5 // pred_check_branch
      %280 = sbr.rel (%p277) target = $region36
    $region35: #{bottleneck_forward.5} parent=5 // pred_region
      %s281 = ssub.s32 %s12, 1
      %s282 = smul.u32 8, %s22
      %p283 = scmp.lt.s32.totalorder %s21, 1
      %s284 = scalar_select %p283, %s21, 1
      %p285 = scmp.lt.s32.totalorder %s282, 15
      %s286 = scalar_select %p285, %s282, 15
      %s287 = smul.addr %s286, 2
      %s288 = smul.addr %s284, 32
      %s289 = sadd.s32 %s287, %s288
      %s290 = smul.addr %s289, 4
      %s291 = scalar_lea.vmem %s0, %s290
      %p292 = pneg %p52
      %p293 = pneg %p49
      %s294 = smul.u32 %s22, 8
      %s295 = ssub.s32 %s294, 1
      %p296 = scmp.gt.s32.totalorder %s295, 0
      %s297 = scalar_select %p296, %s295, 0
      %p298 = scmp.lt.s32.totalorder %s21, 1
      %s299 = scalar_select %p298, %s21, 1
      %p300 = scmp.lt.s32.totalorder %s297, 15
      %s301 = scalar_select %p300, %s297, 15
      %s302 = smul.addr %s301, 2
      %s303 = smul.addr %s299, 32
      %s304 = sadd.s32 %s302, %s303
      %s305 = smul.addr %s304, 4
      %s306 = scalar_lea.vmem %s1, %s305
      %p307 = pneg %p88
      %p308 = pneg %p85
      %s309 = sadd.s32 %s22, 1
      %s310 = smul.u32 %s309, 8
      %p311 = scmp.lt.s32.totalorder %s310, 15
      %s312 = scalar_select %p311, %s310, 15
      %p313 = scmp.lt.s32.totalorder %s21, 1
      %s314 = scalar_select %p313, %s21, 1
      %p315 = scmp.lt.s32.totalorder %s312, 15
      %s316 = scalar_select %p315, %s312, 15
      %s317 = smul.addr %s316, 2
      %s318 = smul.addr %s314, 32
      %s319 = sadd.s32 %s317, %s318
      %s320 = smul.addr %s319, 4
      %s321 = scalar_lea.vmem %s2, %s320
      %p322 = pneg %p124
      %p323 = pneg %p121
      %p324 = pneg %p145
      %p325 = pneg %p142
      %p326 = pneg %p173
      %p327 = pneg %p170
      %s328 = smul.u32 16, %s22
      %p329 = scmp.lt.s32.totalorder %s21, 1
      %s330 = scalar_select %p329, %s21, 1
      %p331 = scmp.lt.s32.totalorder %s328, 31
      %s332 = scalar_select %p331, %s328, 31
      %s333 = smul.addr %s330, 32
      %s334 = sadd.s32 %s332, %s333
      %s335 = smul.addr %s334, 4
      %s336 = scalar_lea.vmem %s4, %s335
      %p337 = pneg %p199
      %p338 = pneg %p196
      %p339 = scmp.lt.s32.totalorder %s21, 1
      %s340 = scalar_select %p339, %s21, 1
      %s341 = scalar_lea.vmem %s5, %s340
      %s342 = smul.u32 8, %s22
      %p343 = scmp.lt.s32.totalorder %s21, 1
      %s344 = scalar_select %p343, %s21, 1
      %p345 = scmp.lt.s32.totalorder %s342, 15
      %s346 = scalar_select %p345, %s342, 15
      %s347 = smul.addr %s346, 2
      %s348 = smul.addr %s344, 32
      %s349 = sadd.s32 %s347, %s348
      %s350 = smul.addr %s349, 4
      %s351 = scalar_lea.vmem %s0, %s350
      %s352 = smul.u32 8, %s22
      %s353 = smul.u32 %s22, 8
      %s354 = ssub.s32 %s353, 1
      %p355 = scmp.gt.s32.totalorder %s354, 0
      %s356 = scalar_select %p355, %s354, 0
      %p357 = scmp.lt.s32.totalorder %s21, 1
      %s358 = scalar_select %p357, %s21, 1
      %p359 = scmp.lt.s32.totalorder %s356, 15
      %s360 = scalar_select %p359, %s356, 15
      %s361 = smul.addr %s360, 2
      %s362 = smul.addr %s358, 32
      %s363 = sadd.s32 %s361, %s362
      %s364 = smul.addr %s363, 4
      %s365 = scalar_lea.vmem %s1, %s364
      %s366 = smul.u32 %s22, 8
      %s367 = ssub.s32 %s366, 1
      %p368 = scmp.gt.s32.totalorder %s367, 0
      %s369 = scalar_select %p368, %s367, 0
      %s370 = sadd.s32 %s22, 1
      %s371 = smul.u32 %s370, 8
      %p372 = scmp.lt.s32.totalorder %s371, 15
      %s373 = scalar_select %p372, %s371, 15
      %p374 = scmp.lt.s32.totalorder %s21, 1
      %s375 = scalar_select %p374, %s21, 1
      %p376 = scmp.lt.s32.totalorder %s373, 15
      %s377 = scalar_select %p376, %s373, 15
      %s378 = smul.addr %s377, 2
      %s379 = smul.addr %s375, 32
      %s380 = sadd.s32 %s378, %s379
      %s381 = smul.addr %s380, 4
      %s382 = scalar_lea.vmem %s2, %s381
      %s383 = sadd.s32 %s22, 1
      %s384 = smul.u32 %s383, 8
      %p385 = scmp.lt.s32.totalorder %s384, 15
      %s386 = scalar_select %p385, %s384, 15
      %s387 = smul.u32 16, %s22
      %p388 = scmp.lt.s32.totalorder %s21, 1
      %s389 = scalar_select %p388, %s21, 1
      %p390 = scmp.lt.s32.totalorder %s387, 31
      %s391 = scalar_select %p390, %s387, 31
      %s392 = smul.addr %s389, 32
      %s393 = sadd.s32 %s391, %s392
      %s394 = smul.addr %s393, 4
      %s395 = scalar_lea.vmem %s4, %s394
      %s396 = smul.u32 16, %s22
      %p397 = scmp.lt.s32.totalorder %s21, 1
      %s398 = scalar_select %p397, %s21, 1
      %s399 = scalar_lea.vmem %s5, %s398
      %p401 = scmp.eq.s32.totalorder %s22, 0
      // Predicated region
      $region37: #{bottleneck_forward.5} parent=35 // pred_check
        %p402 = pneg %p401
      $region38: #{bottleneck_forward.5} parent=35 // pred_check_branch
        %404 = sbr.rel (%p402) target = $region40
      $region39: #{bottleneck_forward.5} parent=35 // pred_region
        %vm405 = vcmask 31744
        %406 = vst.msk [vmem:[#allocation2] sm:$0xff] %vm405, 0.0
        %407 = vst.msk [vmem:[#allocation2 + $0x8] sm:$0xff] %vm405, 0.0
        %408 = vst.msk [vmem:[#allocation2 + $0x10] sm:$0xff] %vm405, 0.0
        %vm409 = vcmask 24576
        %410 = vst.msk [vmem:[#allocation2 + $0x18] sm:$0x1] %vm409, 0.0
        %411 = vst.msk [vmem:[#allocation2 + $0x20] sm:$0xff] %vm405, 0.0
        %412 = vst.msk [vmem:[#allocation2 + $0x28] sm:$0xff] %vm405, 0.0
        %413 = vst.msk [vmem:[#allocation2 + $0x30] sm:$0xff] %vm405, 0.0
        %414 = vst.msk [vmem:[#allocation2 + $0x38] sm:$0x1] %vm409, 0.0
        %415 = vst.msk [vmem:[#allocation2 + $0x40] sm:$0xff] %vm405, 0.0
        %416 = vst.msk [vmem:[#allocation2 + $0x48] sm:$0xff] %vm405, 0.0
        %417 = vst.msk [vmem:[#allocation2 + $0x50] sm:$0xff] %vm405, 0.0
        %418 = vst.msk [vmem:[#allocation2 + $0x58] sm:$0x1] %vm409, 0.0
        %419 = vst.msk [vmem:[#allocation2 + $0x60] sm:$0xff] %vm405, 0.0
        %420 = vst.msk [vmem:[#allocation2 + $0x68] sm:$0xff] %vm405, 0.0
        %421 = vst.msk [vmem:[#allocation2 + $0x70] sm:$0xff] %vm405, 0.0
        %422 = vst.msk [vmem:[#allocation2 + $0x78] sm:$0x1] %vm409, 0.0
        %423 = vst.msk [vmem:[#allocation2 + $0x80] sm:$0xff] %vm405, 0.0
        %424 = vst.msk [vmem:[#allocation2 + $0x88] sm:$0xff] %vm405, 0.0
        %425 = vst.msk [vmem:[#allocation2 + $0x90] sm:$0xff] %vm405, 0.0
        %426 = vst.msk [vmem:[#allocation2 + $0x98] sm:$0x1] %vm409, 0.0
        %427 = vst.msk [vmem:[#allocation2 + $0xa0] sm:$0xff] %vm405, 0.0
        %428 = vst.msk [vmem:[#allocation2 + $0xa8] sm:$0xff] %vm405, 0.0
        %429 = vst.msk [vmem:[#allocation2 + $0xb0] sm:$0xff] %vm405, 0.0
        %430 = vst.msk [vmem:[#allocation2 + $0xb8] sm:$0x1] %vm409, 0.0
        %431 = vst.msk [vmem:[#allocation2 + $0xc0] sm:$0xff] %vm405, 0.0
        %432 = vst.msk [vmem:[#allocation2 + $0xc8] sm:$0xff] %vm405, 0.0
        %433 = vst.msk [vmem:[#allocation2 + $0xd0] sm:$0xff] %vm405, 0.0
        %434 = vst.msk [vmem:[#allocation2 + $0xd8] sm:$0x1] %vm409, 0.0
        %435 = vst.msk [vmem:[#allocation2 + $0xe0] sm:$0xff] %vm405, 0.0
        %436 = vst.msk [vmem:[#allocation2 + $0xe8] sm:$0xff] %vm405, 0.0
        %437 = vst.msk [vmem:[#allocation2 + $0xf0] sm:$0xff] %vm405, 0.0
        %438 = vst.msk [vmem:[#allocation2 + $0xf8] sm:$0x1] %vm409, 0.0
        %439 = vst.msk [vmem:[#allocation2 + $0x100] sm:$0xff] %vm405, 0.0
        %440 = vst.msk [vmem:[#allocation2 + $0x108] sm:$0xff] %vm405, 0.0
        %441 = vst.msk [vmem:[#allocation2 + $0x110] sm:$0xff] %vm405, 0.0
        %442 = vst.msk [vmem:[#allocation2 + $0x118] sm:$0x1] %vm409, 0.0
        %443 = vst.msk [vmem:[#allocation2 + $0x120] sm:$0xff] %vm405, 0.0
        %444 = vst.msk [vmem:[#allocation2 + $0x128] sm:$0xff] %vm405, 0.0
        %445 = vst.msk [vmem:[#allocation2 + $0x130] sm:$0xff] %vm405, 0.0
        %446 = vst.msk [vmem:[#allocation2 + $0x138] sm:$0x1] %vm409, 0.0
      $region40: #{bottleneck_forward.5} parent=35 // pred_fallthru
        _
      %p447 = scmp.eq.s32.totalorder %s22, 1
      // Predicated region
      $region41: #{bottleneck_forward.5} parent=35 // pred_check
        %p448 = pneg %p447
      $region42: #{bottleneck_forward.5} parent=35 // pred_check_branch
        %450 = sbr.rel (%p448) target = $region44
      $region43: #{bottleneck_forward.5} parent=35 // pred_region
        %s451 = scalar_lea.vmem [#allocation2], 288
        %vm452 = vcmask 31744
        %453 = vst.msk [vmem:[%s451 + $0x8] sm:$0xff] %vm452, 0.0
        %454 = vst.msk [vmem:[%s451 + $0x10] sm:$0xff] %vm452, 0.0
      $region44: #{bottleneck_forward.5} parent=35 // pred_fallthru
        _
      %v455 = vld [vmem:[%s351] sm:$0xf]
      %v456 = vld [vmem:[%s351 + $0x4] sm:$0xf]
      %v457 = vld [vmem:[%s351 + $0x8] sm:$0xf]
      %v458 = vld [vmem:[%s351 + $0xc] sm:$0xf]
      %v459 = vld [vmem:[%s351 + $0x10] sm:$0xf]
      %v460 = vld [vmem:[%s351 + $0x14] sm:$0xf]
      %v461 = vld [vmem:[%s351 + $0x18] sm:$0xf]
      %v462 = vld [vmem:[%s351 + $0x1c] sm:$0xf]
      %v463 = vld [vmem:[%s351 + $0x20] sm:$0xf]
      %v464 = vld [vmem:[%s351 + $0x24] sm:$0xf]
      %v465 = vld [vmem:[%s351 + $0x28] sm:$0xf]
      %v466 = vld [vmem:[%s351 + $0x2c] sm:$0xf]
      %v467 = vld [vmem:[%s351 + $0x30] sm:$0xf]
      %v468 = vld [vmem:[%s351 + $0x34] sm:$0xf]
      %v469 = vld [vmem:[%s351 + $0x38] sm:$0xf]
      %v470 = vld [vmem:[%s351 + $0x3c] sm:$0xf]
      %v471 = vunpack.c.l.bf16 %v455
      %v472 = vunpack.c.l.bf16 %v456
      %v473 = vunpack.c.l.bf16 %v457
      %v474 = vunpack.c.l.bf16 %v458
      %v475 = vunpack.c.l.bf16 %v459
      %v476 = vunpack.c.l.bf16 %v460
      %v477 = vunpack.c.l.bf16 %v461
      %v478 = vunpack.c.l.bf16 %v462
      %v479 = vunpack.c.l.bf16 %v463
      %v480 = vunpack.c.l.bf16 %v464
      %v481 = vunpack.c.l.bf16 %v465
      %v482 = vunpack.c.l.bf16 %v466
      %v483 = vunpack.c.l.bf16 %v467
      %v484 = vunpack.c.l.bf16 %v468
      %v485 = vunpack.c.l.bf16 %v469
      %v486 = vunpack.c.l.bf16 %v470
      %s487 = scalar_lea.vmem [#allocation2], 32
      %vm488 = vcmask 31744
      %489 = vst.msk [vmem:[%s487 + $0x8] sm:$0xff] %vm488, %v471
      %490 = vst.msk [vmem:[%s487 + $0x10] sm:$0xff] %vm488, %v472
      %491 = vst.msk [vmem:[%s487 + $0x28] sm:$0xff] %vm488, %v473
      %492 = vst.msk [vmem:[%s487 + $0x30] sm:$0xff] %vm488, %v474
      %493 = vst.msk [vmem:[%s487 + $0x48] sm:$0xff] %vm488, %v475
      %494 = vst.msk [vmem:[%s487 + $0x50] sm:$0xff] %vm488, %v476
      %495 = vst.msk [vmem:[%s487 + $0x68] sm:$0xff] %vm488, %v477
      %496 = vst.msk [vmem:[%s487 + $0x70] sm:$0xff] %vm488, %v478
      %497 = vst.msk [vmem:[%s487 + $0x88] sm:$0xff] %vm488, %v479
      %498 = vst.msk [vmem:[%s487 + $0x90] sm:$0xff] %vm488, %v480
      %499 = vst.msk [vmem:[%s487 + $0xa8] sm:$0xff] %vm488, %v481
      %500 = vst.msk [vmem:[%s487 + $0xb0] sm:$0xff] %vm488, %v482
      %501 = vst.msk [vmem:[%s487 + $0xc8] sm:$0xff] %vm488, %v483
      %502 = vst.msk [vmem:[%s487 + $0xd0] sm:$0xff] %vm488, %v484
      %503 = vst.msk [vmem:[%s487 + $0xe8] sm:$0xff] %vm488, %v485
      %504 = vst.msk [vmem:[%s487 + $0xf0] sm:$0xff] %vm488, %v486
      %p505 = scmp.gt.s32.totalorder %s22, 0
      // Predicated region
      $region45: #{bottleneck_forward.5} parent=35 // pred_check
        %p506 = pneg %p505
      $region46: #{bottleneck_forward.5} parent=35 // pred_check_branch
        %508 = sbr.rel (%p506) target = $region48
      $region47: #{bottleneck_forward.5} parent=35 // pred_region
        %v509 = vld [vmem:[%s365] sm:$0xf]
        %v510 = vld [vmem:[%s365 + $0x4] sm:$0xf]
        %v511 = vunpack.c.l.bf16 %v509
        %v512 = vunpack.c.l.bf16 %v510
        %513 = vst.msk [vmem:[#allocation2 + $0x8] sm:$0xff] %vm488, %v511
        %514 = vst.msk [vmem:[#allocation2 + $0x10] sm:$0xff] %vm488, %v512
      $region48: #{bottleneck_forward.5} parent=35 // pred_fallthru
        _
      %p515 = scmp.lt.s32.totalorder %s22, 1
      // Predicated region
      $region49: #{bottleneck_forward.5} parent=35 // pred_check
        %p516 = pneg %p515
      $region50: #{bottleneck_forward.5} parent=35 // pred_check_branch
        %518 = sbr.rel (%p516) target = $region52
      $region51: #{bottleneck_forward.5} parent=35 // pred_region
        %v519 = vld [vmem:[%s382] sm:$0xf]
        %v520 = vld [vmem:[%s382 + $0x4] sm:$0xf]
        %v521 = vunpack.c.l.bf16 %v519
        %v522 = vunpack.c.l.bf16 %v520
        %s523 = scalar_lea.vmem [#allocation2], 288
        %524 = vst.msk [vmem:[%s523 + $0x8] sm:$0xff] %vm488, %v521
        %525 = vst.msk [vmem:[%s523 + $0x10] sm:$0xff] %vm488, %v522
      $region52: #{bottleneck_forward.5} parent=35 // pred_fallthru
        _
      %v526 = vld [vmem:[#allocation2 + $0x7] sm:$0xff]
      %v527 = vld [vmem:[#allocation2 + $0xf] sm:$0xff]
      %v528 = vld [vmem:[#allocation2 + $0x27] sm:$0xff]
      %v529 = vld [vmem:[#allocation2 + $0x2f] sm:$0xff]
      %v530 = vld [vmem:[#allocation2 + $0x47] sm:$0xff]
      %v531 = vld [vmem:[#allocation2 + $0x4f] sm:$0xff]
      %v532 = vld [vmem:[#allocation2 + $0x67] sm:$0xff]
      %v533 = vld [vmem:[#allocation2 + $0x6f] sm:$0xff]
      %v534 = vld [vmem:[#allocation2 + $0x87] sm:$0xff]
      %v535 = vld [vmem:[#allocation2 + $0x8f] sm:$0xff]
      %v536 = vld [vmem:[#allocation2 + $0xa7] sm:$0xff]
      %v537 = vld [vmem:[#allocation2 + $0xaf] sm:$0xff]
      %v538 = vld [vmem:[#allocation2 + $0xc7] sm:$0xff]
      %v539 = vld [vmem:[#allocation2 + $0xcf] sm:$0xff]
      %v540 = vld [vmem:[#allocation2 + $0xe7] sm:$0xff]
      %v541 = vld [vmem:[#allocation2 + $0xef] sm:$0xff]
      %v542 = vpack.c.bf16 %v527, %v526
      %v543 = vpack.c.bf16 %v529, %v528
      %v544 = vpack.c.bf16 %v531, %v530
      %v545 = vpack.c.bf16 %v533, %v532
      %v546 = vpack.c.bf16 %v535, %v534
      %v547 = vpack.c.bf16 %v537, %v536
      %v548 = vpack.c.bf16 %v539, %v538
      %v549 = vpack.c.bf16 %v541, %v540
      %v550 = vld [vmem:[%s3] sm:$0x3]
      %v551 = vld [vmem:[#allocation2 + $0x8] sm:$0xff]
      %v552 = vld [vmem:[#allocation2 + $0x10] sm:$0xff]
      %v553 = vld [vmem:[#allocation2 + $0x28] sm:$0xff]
      %v554 = vld [vmem:[#allocation2 + $0x30] sm:$0xff]
      %v555 = vld [vmem:[#allocation2 + $0x48] sm:$0xff]
      %v556 = vld [vmem:[#allocation2 + $0x50] sm:$0xff]
      %v557 = vld [vmem:[#allocation2 + $0x68] sm:$0xff]
      %v558 = vld [vmem:[#allocation2 + $0x70] sm:$0xff]
      %v559 = vld [vmem:[#allocation2 + $0x88] sm:$0xff]
      %v560 = vld [vmem:[#allocation2 + $0x90] sm:$0xff]
      %v561 = vld [vmem:[#allocation2 + $0xa8] sm:$0xff]
      %v562 = vld [vmem:[#allocation2 + $0xb0] sm:$0xff]
      %v563 = vld [vmem:[#allocation2 + $0xc8] sm:$0xff]
      %v564 = vld [vmem:[#allocation2 + $0xd0] sm:$0xff]
      %v565 = vld [vmem:[#allocation2 + $0xe8] sm:$0xff]
      %v566 = vld [vmem:[#allocation2 + $0xf0] sm:$0xff]
      %v567 = vpack.c.bf16 %v552, %v551
      %v568 = vpack.c.bf16 %v554, %v553
      %v569 = vpack.c.bf16 %v556, %v555
      %v570 = vpack.c.bf16 %v558, %v557
      %v571 = vpack.c.bf16 %v560, %v559
      %v572 = vpack.c.bf16 %v562, %v561
      %v573 = vpack.c.bf16 %v564, %v563
      %v574 = vpack.c.bf16 %v566, %v565
      %s575 = scalar_lea.vmem %s3, 2
      %v576 = vld [vmem:[%s575] sm:$0x3]
      %v578 = vsel %vm488, %v567, 0
      %v581 = vsel %vm488, %v568, 0
      %v584 = vsel %vm488, %v569, 0
      %v587 = vsel %vm488, %v570, 0
      %v590 = vsel %vm488, %v571, 0
      %v593 = vsel %vm488, %v572, 0
      %v596 = vsel %vm488, %v573, 0
      %v599 = vsel %vm488, %v574, 0
      %vm601 = vcmask 1041408
      %v603 = vsel %vm601, %v576, 0
      %605 = vmatprep.subr.bf16.mxu0 0
      %606 = vmatpush1.bf16.msra.mxu0 %v603
      %607 = vmatprep.subr.bf16.mxu0 0
      %608 = vmatpush1.bf16.msra.mxu0 0
      %609 = vmatprep.subr.bf16.mxu0 0
      %610 = vmatpush1.bf16.msra.mxu0 0
      %611 = vmatprep.subr.bf16.mxu0 0
      %612 = vmatpush1.bf16.msra.mxu0 0
      %613 = vmatprep.subr.bf16.mxu0 0
      %614 = vmatpush1.bf16.msra.mxu0 0
      %615 = vmatprep.subr.bf16.mxu0 0
      %616 = vmatpush1.bf16.msra.mxu0 0
      %617 = vmatprep.subr.bf16.mxu0 0
      %618 = vmatpush1.bf16.msra.mxu0 0
      %619 = vmatprep.subr.bf16.mxu0 0
      %620 = vmatpush1.bf16.msra.mxu0 0
      %621 = vmatprep.subr.bf16.mxu0 0
      %622 = vmatpush1.bf16.msra.mxu0 0
      %623 = vmatprep.subr.bf16.mxu0 0
      %624 = vmatpush1.bf16.msra.mxu0 0
      %625 = vmatprep.subr.bf16.mxu0 0
      %626 = vmatpush1.bf16.msra.mxu0 0
      %627 = vmatprep.subr.bf16.mxu0 0
      %628 = vmatpush1.bf16.msra.mxu0 0
      %629 = vmatprep.subr.bf16.mxu0 0
      %630 = vmatpush1.bf16.msra.mxu0 0
      %631 = vmatprep.subr.bf16.mxu0 0
      %632 = vmatpush1.bf16.msra.mxu0 0
      %633 = vmatprep.subr.bf16.mxu0 0
      %634 = vmatpush1.bf16.msra.mxu0 0
      %635 = vmatprep.subr.bf16.mxu0 0
      %636 = vmatpush1.bf16.msra.mxu0 0
      %637 = vmatprep.mubr.bf16.mxu0 0
      %638 = vmatmul.mubr.bf16.gmra.mrb[0].mxu0 %v578
      %v639 = vpop.f32.mrb[0].mxu0
      %v640 = vadd.f32 0.0, %v639
      %v641 = vpop.f32.mrb[0].mxu0
      %v642 = vpop.f32.mrb[0].mxu0
      %v643 = vadd.f32 0.0, %v642
      %v644 = vpop.f32.mrb[0].mxu0
      %645 = vmatprep.mubr.bf16.mxu0 0
      %646 = vmatmul.mubr.bf16.gmra.mrb[0].mxu0 %v581
      %v647 = vpop.f32.mrb[0].mxu0
      %v648 = vadd.f32 0.0, %v647
      %v649 = vpop.f32.mrb[0].mxu0
      %v650 = vpop.f32.mrb[0].mxu0
      %v651 = vadd.f32 0.0, %v650
      %v652 = vpop.f32.mrb[0].mxu0
      %653 = vmatprep.mubr.bf16.mxu0 0
      %654 = vmatmul.mubr.bf16.gmra.mrb[0].mxu0 %v584
      %v655 = vpop.f32.mrb[0].mxu0
      %v656 = vadd.f32 0.0, %v655
      %v657 = vpop.f32.mrb[0].mxu0
      %v658 = vpop.f32.mrb[0].mxu0
      %v659 = vadd.f32 0.0, %v658
      %v660 = vpop.f32.mrb[0].mxu0
      %661 = vmatprep.mubr.bf16.mxu0 0
      %662 = vmatmul.mubr.bf16.gmra.mrb[0].mxu0 %v587
      %v663 = vpop.f32.mrb[0].mxu0
      %v664 = vadd.f32 0.0, %v663
      %v665 = vpop.f32.mrb[0].mxu0
      %v666 = vpop.f32.mrb[0].mxu0
      %v667 = vadd.f32 0.0, %v666
      %v668 = vpop.f32.mrb[0].mxu0
      %669 = vmatprep.mubr.bf16.mxu0 0
      %670 = vmatmul.mubr.bf16.gmra.mrb[0].mxu0 %v590
      %v671 = vpop.f32.mrb[0].mxu0
      %v672 = vadd.f32 0.0, %v671
      %v673 = vpop.f32.mrb[0].mxu0
      %v674 = vpop.f32.mrb[0].mxu0
      %v675 = vadd.f32 0.0, %v674
      %v676 = vpop.f32.mrb[0].mxu0
      %677 = vmatprep.mubr.bf16.mxu0 0
      %678 = vmatmul.mubr.bf16.gmra.mrb[0].mxu0 %v593
      %v679 = vpop.f32.mrb[0].mxu0
      %v680 = vadd.f32 0.0, %v679
      %v681 = vpop.f32.mrb[0].mxu0
      %v682 = vpop.f32.mrb[0].mxu0
      %v683 = vadd.f32 0.0, %v682
      %v684 = vpop.f32.mrb[0].mxu0
      %685 = vmatprep.mubr.bf16.mxu0 0
      %686 = vmatmul.mubr.bf16.gmra.mrb[0].mxu0 %v596
      %v687 = vpop.f32.mrb[0].mxu0
      %v688 = vadd.f32 0.0, %v687
      %v689 = vpop.f32.mrb[0].mxu0
      %v690 = vpop.f32.mrb[0].mxu0
      %v691 = vadd.f32 0.0, %v690
      %v692 = vpop.f32.mrb[0].mxu0
      %693 = vmatprep.mubr.bf16.mxu0 0
      %694 = vmatmul.mubr.bf16.gmra.mrb[0].mxu0 %v599
      %v695 = vpop.f32.mrb[0].mxu0
      %v696 = vadd.f32 0.0, %v695
      %v697 = vpop.f32.mrb[0].mxu0
      %v698 = vpop.f32.mrb[0].mxu0
      %v699 = vadd.f32 0.0, %v698
      %v700 = vpop.f32.mrb[0].mxu0
      %701 = vdwg.mxu0
      %v703 = vsel %vm488, %v542, 0
      %v706 = vsel %vm488, %v543, 0
      %v709 = vsel %vm488, %v544, 0
      %v712 = vsel %vm488, %v545, 0
      %v715 = vsel %vm488, %v546, 0
      %v718 = vsel %vm488, %v547, 0
      %v721 = vsel %vm488, %v548, 0
      %v724 = vsel %vm488, %v549, 0
      %v727 = vsel %vm601, %v550, 0
      %729 = vmatprep.subr.bf16.mxu0 0
      %730 = vmatpush1.bf16.msra.mxu0 %v727
      %731 = vmatprep.subr.bf16.mxu0 0
      %732 = vmatpush1.bf16.msra.mxu0 0
      %733 = vmatprep.subr.bf16.mxu0 0
      %734 = vmatpush1.bf16.msra.mxu0 0
      %735 = vmatprep.subr.bf16.mxu0 0
      %736 = vmatpush1.bf16.msra.mxu0 0
      %737 = vmatprep.subr.bf16.mxu0 0
      %738 = vmatpush1.bf16.msra.mxu0 0
      %739 = vmatprep.subr.bf16.mxu0 0
      %740 = vmatpush1.bf16.msra.mxu0 0
      %741 = vmatprep.subr.bf16.mxu0 0
      %742 = vmatpush1.bf16.msra.mxu0 0
      %743 = vmatprep.subr.bf16.mxu0 0
      %744 = vmatpush1.bf16.msra.mxu0 0
      %745 = vmatprep.subr.bf16.mxu0 0
      %746 = vmatpush1.bf16.msra.mxu0 0
      %747 = vmatprep.subr.bf16.mxu0 0
      %748 = vmatpush1.bf16.msra.mxu0 0
      %749 = vmatprep.subr.bf16.mxu0 0
      %750 = vmatpush1.bf16.msra.mxu0 0
      %751 = vmatprep.subr.bf16.mxu0 0
      %752 = vmatpush1.bf16.msra.mxu0 0
      %753 = vmatprep.subr.bf16.mxu0 0
      %754 = vmatpush1.bf16.msra.mxu0 0
      %755 = vmatprep.subr.bf16.mxu0 0
      %756 = vmatpush1.bf16.msra.mxu0 0
      %757 = vmatprep.subr.bf16.mxu0 0
      %758 = vmatpush1.bf16.msra.mxu0 0
      %759 = vmatprep.subr.bf16.mxu0 0
      %760 = vmatpush1.bf16.msra.mxu0 0
      %761 = vmatprep.mubr.bf16.mxu0 0
      %762 = vmatmul.mubr.bf16.gmra.mrb[0].mxu0 %v703
      %v763 = vpop.f32.mrb[0].mxu0
      %v764 = vadd.f32 %v640, %v763
      %v765 = vpop.f32.mrb[0].mxu0
      %v766 = vpop.f32.mrb[0].mxu0
      %v767 = vadd.f32 %v643, %v766
      %v768 = vpop.f32.mrb[0].mxu0
      %769 = vmatprep.mubr.bf16.mxu0 0
      %770 = vmatmul.mubr.bf16.gmra.mrb[0].mxu0 %v706
      %v771 = vpop.f32.mrb[0].mxu0
      %v772 = vadd.f32 %v648, %v771
      %v773 = vpop.f32.mrb[0].mxu0
      %v774 = vpop.f32.mrb[0].mxu0
      %v775 = vadd.f32 %v651, %v774
      %v776 = vpop.f32.mrb[0].mxu0
      %777 = vmatprep.mubr.bf16.mxu0 0
      %778 = vmatmul.mubr.bf16.gmra.mrb[0].mxu0 %v709
      %v779 = vpop.f32.mrb[0].mxu0
      %v780 = vadd.f32 %v656, %v779
      %v781 = vpop.f32.mrb[0].mxu0
      %v782 = vpop.f32.mrb[0].mxu0
      %v783 = vadd.f32 %v659, %v782
      %v784 = vpop.f32.mrb[0].mxu0
      %785 = vmatprep.mubr.bf16.mxu0 0
      %786 = vmatmul.mubr.bf16.gmra.mrb[0].mxu0 %v712
      %v787 = vpop.f32.mrb[0].mxu0
      %v788 = vadd.f32 %v664, %v787
      %v789 = vpop.f32.mrb[0].mxu0
      %v790 = vpop.f32.mrb[0].mxu0
      %v791 = vadd.f32 %v667, %v790
      %v792 = vpop.f32.mrb[0].mxu0
      %793 = vmatprep.mubr.bf16.mxu0 0
      %794 = vmatmul.mubr.bf16.gmra.mrb[0].mxu0 %v715
      %v795 = vpop.f32.mrb[0].mxu0
      %v796 = vadd.f32 %v672, %v795
      %v797 = vpop.f32.mrb[0].mxu0
      %v798 = vpop.f32.mrb[0].mxu0
      %v799 = vadd.f32 %v675, %v798
      %v800 = vpop.f32.mrb[0].mxu0
      %801 = vmatprep.mubr.bf16.mxu0 0
      %802 = vmatmul.mubr.bf16.gmra.mrb[0].mxu0 %v718
      %v803 = vpop.f32.mrb[0].mxu0
      %v804 = vadd.f32 %v680, %v803
      %v805 = vpop.f32.mrb[0].mxu0
      %v806 = vpop.f32.mrb[0].mxu0
      %v807 = vadd.f32 %v683, %v806
      %v808 = vpop.f32.mrb[0].mxu0
      %809 = vmatprep.mubr.bf16.mxu0 0
      %810 = vmatmul.mubr.bf16.gmra.mrb[0].mxu0 %v721
      %v811 = vpop.f32.mrb[0].mxu0
      %v812 = vadd.f32 %v688, %v811
      %v813 = vpop.f32.mrb[0].mxu0
      %v814 = vpop.f32.mrb[0].mxu0
      %v815 = vadd.f32 %v691, %v814
      %v816 = vpop.f32.mrb[0].mxu0
      %817 = vmatprep.mubr.bf16.mxu0 0
      %818 = vmatmul.mubr.bf16.gmra.mrb[0].mxu0 %v724
      %v819 = vpop.f32.mrb[0].mxu0
      %v820 = vadd.f32 %v696, %v819
      %v821 = vpop.f32.mrb[0].mxu0
      %v822 = vpop.f32.mrb[0].mxu0
      %v823 = vadd.f32 %v699, %v822
      %v824 = vpop.f32.mrb[0].mxu0
      %825 = vdwg.mxu0
      %v826 = vld [vmem:[#allocation2 + $0x9] sm:$0xff]
      %v827 = vld [vmem:[#allocation2 + $0x11] sm:$0xff]
      %v828 = vld [vmem:[#allocation2 + $0x29] sm:$0xff]
      %v829 = vld [vmem:[#allocation2 + $0x31] sm:$0xff]
      %v830 = vld [vmem:[#allocation2 + $0x49] sm:$0xff]
      %v831 = vld [vmem:[#allocation2 + $0x51] sm:$0xff]
      %v832 = vld [vmem:[#allocation2 + $0x69] sm:$0xff]
      %v833 = vld [vmem:[#allocation2 + $0x71] sm:$0xff]
      %v834 = vld [vmem:[#allocation2 + $0x89] sm:$0xff]
      %v835 = vld [vmem:[#allocation2 + $0x91] sm:$0xff]
      %v836 = vld [vmem:[#allocation2 + $0xa9] sm:$0xff]
      %v837 = vld [vmem:[#allocation2 + $0xb1] sm:$0xff]
      %v838 = vld [vmem:[#allocation2 + $0xc9] sm:$0xff]
      %v839 = vld [vmem:[#allocation2 + $0xd1] sm:$0xff]
      %v840 = vld [vmem:[#allocation2 + $0xe9] sm:$0xff]
      %v841 = vld [vmem:[#allocation2 + $0xf1] sm:$0xff]
      %v842 = vpack.c.bf16 %v827, %v826
      %v843 = vpack.c.bf16 %v829, %v828
      %v844 = vpack.c.bf16 %v831, %v830
      %v845 = vpack.c.bf16 %v833, %v832
      %v846 = vpack.c.bf16 %v835, %v834
      %v847 = vpack.c.bf16 %v837, %v836
      %v848 = vpack.c.bf16 %v839, %v838
      %v849 = vpack.c.bf16 %v841, %v840
      %s850 = scalar_lea.vmem %s3, 4
      %v851 = vld [vmem:[%s850] sm:$0x3]
      %v853 = vsel %vm488, %v842, 0
      %v856 = vsel %vm488, %v843, 0
      %v859 = vsel %vm488, %v844, 0
      %v862 = vsel %vm488, %v845, 0
      %v865 = vsel %vm488, %v846, 0
      %v868 = vsel %vm488, %v847, 0
      %v871 = vsel %vm488, %v848, 0
      %v874 = vsel %vm488, %v849, 0
      %v877 = vsel %vm601, %v851, 0
      %879 = vmatprep.subr.bf16.mxu0 0
      %880 = vmatpush1.bf16.msra.mxu0 %v877
      %881 = vmatprep.subr.bf16.mxu0 0
      %882 = vmatpush1.bf16.msra.mxu0 0
      %883 = vmatprep.subr.bf16.mxu0 0
      %884 = vmatpush1.bf16.msra.mxu0 0
      %885 = vmatprep.subr.bf16.mxu0 0
      %886 = vmatpush1.bf16.msra.mxu0 0
      %887 = vmatprep.subr.bf16.mxu0 0
      %888 = vmatpush1.bf16.msra.mxu0 0
      %889 = vmatprep.subr.bf16.mxu0 0
      %890 = vmatpush1.bf16.msra.mxu0 0
      %891 = vmatprep.subr.bf16.mxu0 0
      %892 = vmatpush1.bf16.msra.mxu0 0
      %893 = vmatprep.subr.bf16.mxu0 0
      %894 = vmatpush1.bf16.msra.mxu0 0
      %895 = vmatprep.subr.bf16.mxu0 0
      %896 = vmatpush1.bf16.msra.mxu0 0
      %897 = vmatprep.subr.bf16.mxu0 0
      %898 = vmatpush1.bf16.msra.mxu0 0
      %899 = vmatprep.subr.bf16.mxu0 0
      %900 = vmatpush1.bf16.msra.mxu0 0
      %901 = vmatprep.subr.bf16.mxu0 0
      %902 = vmatpush1.bf16.msra.mxu0 0
      %903 = vmatprep.subr.bf16.mxu0 0
      %904 = vmatpush1.bf16.msra.mxu0 0
      %905 = vmatprep.subr.bf16.mxu0 0
      %906 = vmatpush1.bf16.msra.mxu0 0
      %907 = vmatprep.subr.bf16.mxu0 0
      %908 = vmatpush1.bf16.msra.mxu0 0
      %909 = vmatprep.subr.bf16.mxu0 0
      %910 = vmatpush1.bf16.msra.mxu0 0
      %911 = vmatprep.mubr.bf16.mxu0 0
      %912 = vmatmul.mubr.bf16.gmra.mrb[0].mxu0 %v853
      %v913 = vpop.f32.mrb[0].mxu0
      %v914 = vadd.f32 0.0, %v913
      %v915 = vpop.f32.mrb[0].mxu0
      %v916 = vpop.f32.mrb[0].mxu0
      %v917 = vadd.f32 0.0, %v916
      %v918 = vpop.f32.mrb[0].mxu0
      %919 = vmatprep.mubr.bf16.mxu0 0
      %920 = vmatmul.mubr.bf16.gmra.mrb[0].mxu0 %v856
      %v921 = vpop.f32.mrb[0].mxu0
      %v922 = vadd.f32 0.0, %v921
      %v923 = vpop.f32.mrb[0].mxu0
      %v924 = vpop.f32.mrb[0].mxu0
      %v925 = vadd.f32 0.0, %v924
      %v926 = vpop.f32.mrb[0].mxu0
      %927 = vmatprep.mubr.bf16.mxu0 0
      %928 = vmatmul.mubr.bf16.gmra.mrb[0].mxu0 %v859
      %v929 = vpop.f32.mrb[0].mxu0
      %v930 = vadd.f32 0.0, %v929
      %v931 = vpop.f32.mrb[0].mxu0
      %v932 = vpop.f32.mrb[0].mxu0
      %v933 = vadd.f32 0.0, %v932
      %v934 = vpop.f32.mrb[0].mxu0
      %935 = vmatprep.mubr.bf16.mxu0 0
      %936 = vmatmul.mubr.bf16.gmra.mrb[0].mxu0 %v862
      %v937 = vpop.f32.mrb[0].mxu0
      %v938 = vadd.f32 0.0, %v937
      %v939 = vpop.f32.mrb[0].mxu0
      %v940 = vpop.f32.mrb[0].mxu0
      %v941 = vadd.f32 0.0, %v940
      %v942 = vpop.f32.mrb[0].mxu0
      %943 = vmatprep.mubr.bf16.mxu0 0
      %944 = vmatmul.mubr.bf16.gmra.mrb[0].mxu0 %v865
      %v945 = vpop.f32.mrb[0].mxu0
      %v946 = vadd.f32 0.0, %v945
      %v947 = vpop.f32.mrb[0].mxu0
      %v948 = vpop.f32.mrb[0].mxu0
      %v949 = vadd.f32 0.0, %v948
      %v950 = vpop.f32.mrb[0].mxu0
      %951 = vmatprep.mubr.bf16.mxu0 0
      %952 = vmatmul.mubr.bf16.gmra.mrb[0].mxu0 %v868
      %v953 = vpop.f32.mrb[0].mxu0
      %v954 = vadd.f32 0.0, %v953
      %v955 = vpop.f32.mrb[0].mxu0
      %v956 = vpop.f32.mrb[0].mxu0
      %v957 = vadd.f32 0.0, %v956
      %v958 = vpop.f32.mrb[0].mxu0
      %959 = vmatprep.mubr.bf16.mxu0 0
      %960 = vmatmul.mubr.bf16.gmra.mrb[0].mxu0 %v871
      %v961 = vpop.f32.mrb[0].mxu0
      %v962 = vadd.f32 0.0, %v961
      %v963 = vpop.f32.mrb[0].mxu0
      %v964 = vpop.f32.mrb[0].mxu0
      %v965 = vadd.f32 0.0, %v964
      %v966 = vpop.f32.mrb[0].mxu0
      %967 = vmatprep.mubr.bf16.mxu0 0
      %968 = vmatmul.mubr.bf16.gmra.mrb[0].mxu0 %v874
      %v969 = vpop.f32.mrb[0].mxu0
      %v970 = vadd.f32 0.0, %v969
      %v971 = vpop.f32.mrb[0].mxu0
      %v972 = vpop.f32.mrb[0].mxu0
      %v973 = vadd.f32 0.0, %v972
      %v974 = vpop.f32.mrb[0].mxu0
      %975 = vdwg.mxu0
      %v976 = vadd.f32 %v764, %v914
      %v977 = vadd.f32 %v767, %v917
      %v978 = vadd.f32 %v772, %v922
      %v979 = vadd.f32 %v775, %v925
      %v980 = vadd.f32 %v780, %v930
      %v981 = vadd.f32 %v783, %v933
      %v982 = vadd.f32 %v788, %v938
      %v983 = vadd.f32 %v791, %v941
      %v984 = vadd.f32 %v796, %v946
      %v985 = vadd.f32 %v799, %v949
      %v986 = vadd.f32 %v804, %v954
      %v987 = vadd.f32 %v807, %v957
      %v988 = vadd.f32 %v812, %v962
      %v989 = vadd.f32 %v815, %v965
      %v990 = vadd.f32 %v820, %v970
      %v991 = vadd.f32 %v823, %v973
      %v992 = vld [vmem:[%s487 + $0x7] sm:$0xff]
      %v993 = vld [vmem:[%s487 + $0xf] sm:$0xff]
      %v994 = vld [vmem:[%s487 + $0x27] sm:$0xff]
      %v995 = vld [vmem:[%s487 + $0x2f] sm:$0xff]
      %v996 = vld [vmem:[%s487 + $0x47] sm:$0xff]
      %v997 = vld [vmem:[%s487 + $0x4f] sm:$0xff]
      %v998 = vld [vmem:[%s487 + $0x67] sm:$0xff]
      %v999 = vld [vmem:[%s487 + $0x6f] sm:$0xff]
      %v1000 = vld [vmem:[%s487 + $0x87] sm:$0xff]
      %v1001 = vld [vmem:[%s487 + $0x8f] sm:$0xff]
      %v1002 = vld [vmem:[%s487 + $0xa7] sm:$0xff]
      %v1003 = vld [vmem:[%s487 + $0xaf] sm:$0xff]
      %v1004 = vld [vmem:[%s487 + $0xc7] sm:$0xff]
      %v1005 = vld [vmem:[%s487 + $0xcf] sm:$0xff]
      %v1006 = vld [vmem:[%s487 + $0xe7] sm:$0xff]
      %v1007 = vld [vmem:[%s487 + $0xef] sm:$0xff]
      %v1008 = vpack.c.bf16 %v993, %v992
      %v1009 = vpack.c.bf16 %v995, %v994
      %v1010 = vpack.c.bf16 %v997, %v996
      %v1011 = vpack.c.bf16 %v999, %v998
      %v1012 = vpack.c.bf16 %v1001, %v1000
      %v1013 = vpack.c.bf16 %v1003, %v1002
      %v1014 = vpack.c.bf16 %v1005, %v1004
      %v1015 = vpack.c.bf16 %v1007, %v1006
      %s1016 = scalar_lea.vmem %s3, 6
      %v1017 = vld [vmem:[%s1016] sm:$0x3]
      %v1019 = vsel %vm488, %v1008, 0
      %v1022 = vsel %vm488, %v1009, 0
      %v1025 = vsel %vm488, %v1010, 0
      %v1028 = vsel %vm488, %v1011, 0
      %v1031 = vsel %vm488, %v1012, 0
      %v1034 = vsel %vm488, %v1013, 0
      %v1037 = vsel %vm488, %v1014, 0
      %v1040 = vsel %vm488, %v1015, 0
      %v1043 = vsel %vm601, %v1017, 0
      %1045 = vmatprep.subr.bf16.mxu0 0
      %1046 = vmatpush1.bf16.msra.mxu0 %v1043
      %1047 = vmatprep.subr.bf16.mxu0 0
      %1048 = vmatpush1.bf16.msra.mxu0 0
      %1049 = vmatprep.subr.bf16.mxu0 0
      %1050 = vmatpush1.bf16.msra.mxu0 0
      %1051 = vmatprep.subr.bf16.mxu0 0
      %1052 = vmatpush1.bf16.msra.mxu0 0
      %1053 = vmatprep.subr.bf16.mxu0 0
      %1054 = vmatpush1.bf16.msra.mxu0 0
      %1055 = vmatprep.subr.bf16.mxu0 0
      %1056 = vmatpush1.bf16.msra.mxu0 0
      %1057 = vmatprep.subr.bf16.mxu0 0
      %1058 = vmatpush1.bf16.msra.mxu0 0
      %1059 = vmatprep.subr.bf16.mxu0 0
      %1060 = vmatpush1.bf16.msra.mxu0 0
      %1061 = vmatprep.subr.bf16.mxu0 0
      %1062 = vmatpush1.bf16.msra.mxu0 0
      %1063 = vmatprep.subr.bf16.mxu0 0
      %1064 = vmatpush1.bf16.msra.mxu0 0
      %1065 = vmatprep.subr.bf16.mxu0 0
      %1066 = vmatpush1.bf16.msra.mxu0 0
      %1067 = vmatprep.subr.bf16.mxu0 0
      %1068 = vmatpush1.bf16.msra.mxu0 0
      %1069 = vmatprep.subr.bf16.mxu0 0
      %1070 = vmatpush1.bf16.msra.mxu0 0
      %1071 = vmatprep.subr.bf16.mxu0 0
      %1072 = vmatpush1.bf16.msra.mxu0 0
      %1073 = vmatprep.subr.bf16.mxu0 0
      %1074 = vmatpush1.bf16.msra.mxu0 0
      %1075 = vmatprep.subr.bf16.mxu0 0
      %1076 = vmatpush1.bf16.msra.mxu0 0
      %1077 = vmatprep.mubr.bf16.mxu0 0
      %1078 = vmatmul.mubr.bf16.gmra.mrb[0].mxu0 %v1019
      %v1079 = vpop.f32.mrb[0].mxu0
      %v1080 = vadd.f32 0.0, %v1079
      %v1081 = vpop.f32.mrb[0].mxu0
      %v1082 = vpop.f32.mrb[0].mxu0
      %v1083 = vadd.f32 0.0, %v1082
      %v1084 = vpop.f32.mrb[0].mxu0
      %1085 = vmatprep.mubr.bf16.mxu0 0
      %1086 = vmatmul.mubr.bf16.gmra.mrb[0].mxu0 %v1022
      %v1087 = vpop.f32.mrb[0].mxu0
      %v1088 = vadd.f32 0.0, %v1087
      %v1089 = vpop.f32.mrb[0].mxu0
      %v1090 = vpop.f32.mrb[0].mxu0
      %v1091 = vadd.f32 0.0, %v1090
      %v1092 = vpop.f32.mrb[0].mxu0
      %1093 = vmatprep.mubr.bf16.mxu0 0
      %1094 = vmatmul.mubr.bf16.gmra.mrb[0].mxu0 %v1025
      %v1095 = vpop.f32.mrb[0].mxu0
      %v1096 = vadd.f32 0.0, %v1095
      %v1097 = vpop.f32.mrb[0].mxu0
      %v1098 = vpop.f32.mrb[0].mxu0
      %v1099 = vadd.f32 0.0, %v1098
      %v1100 = vpop.f32.mrb[0].mxu0
      %1101 = vmatprep.mubr.bf16.mxu0 0
      %1102 = vmatmul.mubr.bf16.gmra.mrb[0].mxu0 %v1028
      %v1103 = vpop.f32.mrb[0].mxu0
      %v1104 = vadd.f32 0.0, %v1103
      %v1105 = vpop.f32.mrb[0].mxu0
      %v1106 = vpop.f32.mrb[0].mxu0
      %v1107 = vadd.f32 0.0, %v1106
      %v1108 = vpop.f32.mrb[0].mxu0
      %1109 = vmatprep.mubr.bf16.mxu0 0
      %1110 = vmatmul.mubr.bf16.gmra.mrb[0].mxu0 %v1031
      %v1111 = vpop.f32.mrb[0].mxu0
      %v1112 = vadd.f32 0.0, %v1111
      %v1113 = vpop.f32.mrb[0].mxu0
      %v1114 = vpop.f32.mrb[0].mxu0
      %v1115 = vadd.f32 0.0, %v1114
      %v1116 = vpop.f32.mrb[0].mxu0
      %1117 = vmatprep.mubr.bf16.mxu0 0
      %1118 = vmatmul.mubr.bf16.gmra.mrb[0].mxu0 %v1034
      %v1119 = vpop.f32.mrb[0].mxu0
      %v1120 = vadd.f32 0.0, %v1119
      %v1121 = vpop.f32.mrb[0].mxu0
      %v1122 = vpop.f32.mrb[0].mxu0
      %v1123 = vadd.f32 0.0, %v1122
      %v1124 = vpop.f32.mrb[0].mxu0
      %1125 = vmatprep.mubr.bf16.mxu0 0
      %1126 = vmatmul.mubr.bf16.gmra.mrb[0].mxu0 %v1037
      %v1127 = vpop.f32.mrb[0].mxu0
      %v1128 = vadd.f32 0.0, %v1127
      %v1129 = vpop.f32.mrb[0].mxu0
      %v1130 = vpop.f32.mrb[0].mxu0
      %v1131 = vadd.f32 0.0, %v1130
      %v1132 = vpop.f32.mrb[0].mxu0
      %1133 = vmatprep.mubr.bf16.mxu0 0
      %1134 = vmatmul.mubr.bf16.gmra.mrb[0].mxu0 %v1040
      %v1135 = vpop.f32.mrb[0].mxu0
      %v1136 = vadd.f32 0.0, %v1135
      %v1137 = vpop.f32.mrb[0].mxu0
      %v1138 = vpop.f32.mrb[0].mxu0
      %v1139 = vadd.f32 0.0, %v1138
      %v1140 = vpop.f32.mrb[0].mxu0
      %1141 = vdwg.mxu0
      %v1142 = vadd.f32 %v976, %v1080
      %v1143 = vadd.f32 %v977, %v1083
      %v1144 = vadd.f32 %v978, %v1088
      %v1145 = vadd.f32 %v979, %v1091
      %v1146 = vadd.f32 %v980, %v1096
      %v1147 = vadd.f32 %v981, %v1099
      %v1148 = vadd.f32 %v982, %v1104
      %v1149 = vadd.f32 %v983, %v1107
      %v1150 = vadd.f32 %v984, %v1112
      %v1151 = vadd.f32 %v985, %v1115
      %v1152 = vadd.f32 %v986, %v1120
      %v1153 = vadd.f32 %v987, %v1123
      %v1154 = vadd.f32 %v988, %v1128
      %v1155 = vadd.f32 %v989, %v1131
      %v1156 = vadd.f32 %v990, %v1136
      %v1157 = vadd.f32 %v991, %v1139
      %v1158 = vld [vmem:[%s487 + $0x8] sm:$0xff]
      %v1159 = vld [vmem:[%s487 + $0x10] sm:$0xff]
      %v1160 = vld [vmem:[%s487 + $0x28] sm:$0xff]
      %v1161 = vld [vmem:[%s487 + $0x30] sm:$0xff]
      %v1162 = vld [vmem:[%s487 + $0x48] sm:$0xff]
      %v1163 = vld [vmem:[%s487 + $0x50] sm:$0xff]
      %v1164 = vld [vmem:[%s487 + $0x68] sm:$0xff]
      %v1165 = vld [vmem:[%s487 + $0x70] sm:$0xff]
      %v1166 = vld [vmem:[%s487 + $0x88] sm:$0xff]
      %v1167 = vld [vmem:[%s487 + $0x90] sm:$0xff]
      %v1168 = vld [vmem:[%s487 + $0xa8] sm:$0xff]
      %v1169 = vld [vmem:[%s487 + $0xb0] sm:$0xff]
      %v1170 = vld [vmem:[%s487 + $0xc8] sm:$0xff]
      %v1171 = vld [vmem:[%s487 + $0xd0] sm:$0xff]
      %v1172 = vld [vmem:[%s487 + $0xe8] sm:$0xff]
      %v1173 = vld [vmem:[%s487 + $0xf0] sm:$0xff]
      %v1174 = vpack.c.bf16 %v1159, %v1158
      %v1175 = vpack.c.bf16 %v1161, %v1160
      %v1176 = vpack.c.bf16 %v1163, %v1162
      %v1177 = vpack.c.bf16 %v1165, %v1164
      %v1178 = vpack.c.bf16 %v1167, %v1166
      %v1179 = vpack.c.bf16 %v1169, %v1168
      %v1180 = vpack.c.bf16 %v1171, %v1170
      %v1181 = vpack.c.bf16 %v1173, %v1172
      %s1182 = scalar_lea.vmem %s3, 8
      %v1183 = vld [vmem:[%s1182] sm:$0x3]
      %v1185 = vsel %vm488, %v1174, 0
      %v1188 = vsel %vm488, %v1175, 0
      %v1191 = vsel %vm488, %v1176, 0
      %v1194 = vsel %vm488, %v1177, 0
      %v1197 = vsel %vm488, %v1178, 0
      %v1200 = vsel %vm488, %v1179, 0
      %v1203 = vsel %vm488, %v1180, 0
      %v1206 = vsel %vm488, %v1181, 0
      %v1209 = vsel %vm601, %v1183, 0
      %1211 = vmatprep.subr.bf16.mxu0 0
      %1212 = vmatpush1.bf16.msra.mxu0 %v1209
      %1213 = vmatprep.subr.bf16.mxu0 0
      %1214 = vmatpush1.bf16.msra.mxu0 0
      %1215 = vmatprep.subr.bf16.mxu0 0
      %1216 = vmatpush1.bf16.msra.mxu0 0
      %1217 = vmatprep.subr.bf16.mxu0 0
      %1218 = vmatpush1.bf16.msra.mxu0 0
      %1219 = vmatprep.subr.bf16.mxu0 0
      %1220 = vmatpush1.bf16.msra.mxu0 0
      %1221 = vmatprep.subr.bf16.mxu0 0
      %1222 = vmatpush1.bf16.msra.mxu0 0
      %1223 = vmatprep.subr.bf16.mxu0 0
      %1224 = vmatpush1.bf16.msra.mxu0 0
      %1225 = vmatprep.subr.bf16.mxu0 0
      %1226 = vmatpush1.bf16.msra.mxu0 0
      %1227 = vmatprep.subr.bf16.mxu0 0
      %1228 = vmatpush1.bf16.msra.mxu0 0
      %1229 = vmatprep.subr.bf16.mxu0 0
      %1230 = vmatpush1.bf16.msra.mxu0 0
      %1231 = vmatprep.subr.bf16.mxu0 0
      %1232 = vmatpush1.bf16.msra.mxu0 0
      %1233 = vmatprep.subr.bf16.mxu0 0
      %1234 = vmatpush1.bf16.msra.mxu0 0
      %1235 = vmatprep.subr.bf16.mxu0 0
      %1236 = vmatpush1.bf16.msra.mxu0 0
      %1237 = vmatprep.subr.bf16.mxu0 0
      %1238 = vmatpush1.bf16.msra.mxu0 0
      %1239 = vmatprep.subr.bf16.mxu0 0
      %1240 = vmatpush1.bf16.msra.mxu0 0
      %1241 = vmatprep.subr.bf16.mxu0 0
      %1242 = vmatpush1.bf16.msra.mxu0 0
      %1243 = vmatprep.mubr.bf16.mxu0 0
      %1244 = vmatmul.mubr.bf16.gmra.mrb[0].mxu0 %v1185
      %v1245 = vpop.f32.mrb[0].mxu0
      %v1246 = vadd.f32 0.0, %v1245
      %v1247 = vpop.f32.mrb[0].mxu0
      %v1248 = vpop.f32.mrb[0].mxu0
      %v1249 = vadd.f32 0.0, %v1248
      %v1250 = vpop.f32.mrb[0].mxu0
      %1251 = vmatprep.mubr.bf16.mxu0 0
      %1252 = vmatmul.mubr.bf16.gmra.mrb[0].mxu0 %v1188
      %v1253 = vpop.f32.mrb[0].mxu0
      %v1254 = vadd.f32 0.0, %v1253
      %v1255 = vpop.f32.mrb[0].mxu0
      %v1256 = vpop.f32.mrb[0].mxu0
      %v1257 = vadd.f32 0.0, %v1256
      %v1258 = vpop.f32.mrb[0].mxu0
      %1259 = vmatprep.mubr.bf16.mxu0 0
      %1260 = vmatmul.mubr.bf16.gmra.mrb[0].mxu0 %v1191
      %v1261 = vpop.f32.mrb[0].mxu0
      %v1262 = vadd.f32 0.0, %v1261
      %v1263 = vpop.f32.mrb[0].mxu0
      %v1264 = vpop.f32.mrb[0].mxu0
      %v1265 = vadd.f32 0.0, %v1264
      %v1266 = vpop.f32.mrb[0].mxu0
      %1267 = vmatprep.mubr.bf16.mxu0 0
      %1268 = vmatmul.mubr.bf16.gmra.mrb[0].mxu0 %v1194
      %v1269 = vpop.f32.mrb[0].mxu0
      %v1270 = vadd.f32 0.0, %v1269
      %v1271 = vpop.f32.mrb[0].mxu0
      %v1272 = vpop.f32.mrb[0].mxu0
      %v1273 = vadd.f32 0.0, %v1272
      %v1274 = vpop.f32.mrb[0].mxu0
      %1275 = vmatprep.mubr.bf16.mxu0 0
      %1276 = vmatmul.mubr.bf16.gmra.mrb[0].mxu0 %v1197
      %v1277 = vpop.f32.mrb[0].mxu0
      %v1278 = vadd.f32 0.0, %v1277
      %v1279 = vpop.f32.mrb[0].mxu0
      %v1280 = vpop.f32.mrb[0].mxu0
      %v1281 = vadd.f32 0.0, %v1280
      %v1282 = vpop.f32.mrb[0].mxu0
      %1283 = vmatprep.mubr.bf16.mxu0 0
      %1284 = vmatmul.mubr.bf16.gmra.mrb[0].mxu0 %v1200
      %v1285 = vpop.f32.mrb[0].mxu0
      %v1286 = vadd.f32 0.0, %v1285
      %v1287 = vpop.f32.mrb[0].mxu0
      %v1288 = vpop.f32.mrb[0].mxu0
      %v1289 = vadd.f32 0.0, %v1288
      %v1290 = vpop.f32.mrb[0].mxu0
      %1291 = vmatprep.mubr.bf16.mxu0 0
      %1292 = vmatmul.mubr.bf16.gmra.mrb[0].mxu0 %v1203
      %v1293 = vpop.f32.mrb[0].mxu0
      %v1294 = vadd.f32 0.0, %v1293
      %v1295 = vpop.f32.mrb[0].mxu0
      %v1296 = vpop.f32.mrb[0].mxu0
      %v1297 = vadd.f32 0.0, %v1296
      %v1298 = vpop.f32.mrb[0].mxu0
      %1299 = vmatprep.mubr.bf16.mxu0 0
      %1300 = vmatmul.mubr.bf16.gmra.mrb[0].mxu0 %v1206
      %v1301 = vpop.f32.mrb[0].mxu0
      %v1302 = vadd.f32 0.0, %v1301
      %v1303 = vpop.f32.mrb[0].mxu0
      %v1304 = vpop.f32.mrb[0].mxu0
      %v1305 = vadd.f32 0.0, %v1304
      %v1306 = vpop.f32.mrb[0].mxu0
      %1307 = vdwg.mxu0
      %v1308 = vadd.f32 %v1142, %v1246
      %v1309 = vadd.f32 %v1143, %v1249
      %v1310 = vadd.f32 %v1144, %v1254
      %v1311 = vadd.f32 %v1145, %v1257
      %v1312 = vadd.f32 %v1146, %v1262
      %v1313 = vadd.f32 %v1147, %v1265
      %v1314 = vadd.f32 %v1148, %v1270
      %v1315 = vadd.f32 %v1149, %v1273
      %v1316 = vadd.f32 %v1150, %v1278
      %v1317 = vadd.f32 %v1151, %v1281
      %v1318 = vadd.f32 %v1152, %v1286
      %v1319 = vadd.f32 %v1153, %v1289
      %v1320 = vadd.f32 %v1154, %v1294
      %v1321 = vadd.f32 %v1155, %v1297
      %v1322 = vadd.f32 %v1156, %v1302
      %v1323 = vadd.f32 %v1157, %v1305
      %v1324 = vld [vmem:[%s487 + $0x9] sm:$0xff]
      %v1325 = vld [vmem:[%s487 + $0x11] sm:$0xff]
      %v1326 = vld [vmem:[%s487 + $0x29] sm:$0xff]
      %v1327 = vld [vmem:[%s487 + $0x31] sm:$0xff]
      %v1328 = vld [vmem:[%s487 + $0x49] sm:$0xff]
      %v1329 = vld [vmem:[%s487 + $0x51] sm:$0xff]
      %v1330 = vld [vmem:[%s487 + $0x69] sm:$0xff]
      %v1331 = vld [vmem:[%s487 + $0x71] sm:$0xff]
      %v1332 = vld [vmem:[%s487 + $0x89] sm:$0xff]
      %v1333 = vld [vmem:[%s487 + $0x91] sm:$0xff]
      %v1334 = vld [vmem:[%s487 + $0xa9] sm:$0xff]
      %v1335 = vld [vmem:[%s487 + $0xb1] sm:$0xff]
      %v1336 = vld [vmem:[%s487 + $0xc9] sm:$0xff]
      %v1337 = vld [vmem:[%s487 + $0xd1] sm:$0xff]
      %v1338 = vld [vmem:[%s487 + $0xe9] sm:$0xff]
      %v1339 = vld [vmem:[%s487 + $0xf1] sm:$0xff]
      %v1340 = vpack.c.bf16 %v1325, %v1324
      %v1341 = vpack.c.bf16 %v1327, %v1326
      %v1342 = vpack.c.bf16 %v1329, %v1328
      %v1343 = vpack.c.bf16 %v1331, %v1330
      %v1344 = vpack.c.bf16 %v1333, %v1332
      %v1345 = vpack.c.bf16 %v1335, %v1334
      %v1346 = vpack.c.bf16 %v1337, %v1336
      %v1347 = vpack.c.bf16 %v1339, %v1338
      %s1348 = scalar_lea.vmem %s3, 10
      %v1349 = vld [vmem:[%s1348] sm:$0x3]
      %v1351 = vsel %vm488, %v1340, 0
      %v1354 = vsel %vm488, %v1341, 0
      %v1357 = vsel %vm488, %v1342, 0
      %v1360 = vsel %vm488, %v1343, 0
      %v1363 = vsel %vm488, %v1344, 0
      %v1366 = vsel %vm488, %v1345, 0
      %v1369 = vsel %vm488, %v1346, 0
      %v1372 = vsel %vm488, %v1347, 0
      %v1375 = vsel %vm601, %v1349, 0
      %1377 = vmatprep.subr.bf16.mxu0 0
      %1378 = vmatpush1.bf16.msra.mxu0 %v1375
      %1379 = vmatprep.subr.bf16.mxu0 0
      %1380 = vmatpush1.bf16.msra.mxu0 0
      %1381 = vmatprep.subr.bf16.mxu0 0
      %1382 = vmatpush1.bf16.msra.mxu0 0
      %1383 = vmatprep.subr.bf16.mxu0 0
      %1384 = vmatpush1.bf16.msra.mxu0 0
      %1385 = vmatprep.subr.bf16.mxu0 0
      %1386 = vmatpush1.bf16.msra.mxu0 0
      %1387 = vmatprep.subr.bf16.mxu0 0
      %1388 = vmatpush1.bf16.msra.mxu0 0
      %1389 = vmatprep.subr.bf16.mxu0 0
      %1390 = vmatpush1.bf16.msra.mxu0 0
      %1391 = vmatprep.subr.bf16.mxu0 0
      %1392 = vmatpush1.bf16.msra.mxu0 0
      %1393 = vmatprep.subr.bf16.mxu0 0
      %1394 = vmatpush1.bf16.msra.mxu0 0
      %1395 = vmatprep.subr.bf16.mxu0 0
      %1396 = vmatpush1.bf16.msra.mxu0 0
      %1397 = vmatprep.subr.bf16.mxu0 0
      %1398 = vmatpush1.bf16.msra.mxu0 0
      %1399 = vmatprep.subr.bf16.mxu0 0
      %1400 = vmatpush1.bf16.msra.mxu0 0
      %1401 = vmatprep.subr.bf16.mxu0 0
      %1402 = vmatpush1.bf16.msra.mxu0 0
      %1403 = vmatprep.subr.bf16.mxu0 0
      %1404 = vmatpush1.bf16.msra.mxu0 0
      %1405 = vmatprep.subr.bf16.mxu0 0
      %1406 = vmatpush1.bf16.msra.mxu0 0
      %1407 = vmatprep.subr.bf16.mxu0 0
      %1408 = vmatpush1.bf16.msra.mxu0 0
      %1409 = vmatprep.mubr.bf16.mxu0 0
      %1410 = vmatmul.mubr.bf16.gmra.mrb[0].mxu0 %v1351
      %v1411 = vpop.f32.mrb[0].mxu0
      %v1412 = vadd.f32 0.0, %v1411
      %v1413 = vpop.f32.mrb[0].mxu0
      %v1414 = vpop.f32.mrb[0].mxu0
      %v1415 = vadd.f32 0.0, %v1414
      %v1416 = vpop.f32.mrb[0].mxu0
      %1417 = vmatprep.mubr.bf16.mxu0 0
      %1418 = vmatmul.mubr.bf16.gmra.mrb[0].mxu0 %v1354
      %v1419 = vpop.f32.mrb[0].mxu0
      %v1420 = vadd.f32 0.0, %v1419
      %v1421 = vpop.f32.mrb[0].mxu0
      %v1422 = vpop.f32.mrb[0].mxu0
      %v1423 = vadd.f32 0.0, %v1422
      %v1424 = vpop.f32.mrb[0].mxu0
      %1425 = vmatprep.mubr.bf16.mxu0 0
      %1426 = vmatmul.mubr.bf16.gmra.mrb[0].mxu0 %v1357
      %v1427 = vpop.f32.mrb[0].mxu0
      %v1428 = vadd.f32 0.0, %v1427
      %v1429 = vpop.f32.mrb[0].mxu0
      %v1430 = vpop.f32.mrb[0].mxu0
      %v1431 = vadd.f32 0.0, %v1430
      %v1432 = vpop.f32.mrb[0].mxu0
      %1433 = vmatprep.mubr.bf16.mxu0 0
      %1434 = vmatmul.mubr.bf16.gmra.mrb[0].mxu0 %v1360
      %v1435 = vpop.f32.mrb[0].mxu0
      %v1436 = vadd.f32 0.0, %v1435
      %v1437 = vpop.f32.mrb[0].mxu0
      %v1438 = vpop.f32.mrb[0].mxu0
      %v1439 = vadd.f32 0.0, %v1438
      %v1440 = vpop.f32.mrb[0].mxu0
      %1441 = vmatprep.mubr.bf16.mxu0 0
      %1442 = vmatmul.mubr.bf16.gmra.mrb[0].mxu0 %v1363
      %v1443 = vpop.f32.mrb[0].mxu0
      %v1444 = vadd.f32 0.0, %v1443
      %v1445 = vpop.f32.mrb[0].mxu0
      %v1446 = vpop.f32.mrb[0].mxu0
      %v1447 = vadd.f32 0.0, %v1446
      %v1448 = vpop.f32.mrb[0].mxu0
      %1449 = vmatprep.mubr.bf16.mxu0 0
      %1450 = vmatmul.mubr.bf16.gmra.mrb[0].mxu0 %v1366
      %v1451 = vpop.f32.mrb[0].mxu0
      %v1452 = vadd.f32 0.0, %v1451
      %v1453 = vpop.f32.mrb[0].mxu0
      %v1454 = vpop.f32.mrb[0].mxu0
      %v1455 = vadd.f32 0.0, %v1454
      %v1456 = vpop.f32.mrb[0].mxu0
      %1457 = vmatprep.mubr.bf16.mxu0 0
      %1458 = vmatmul.mubr.bf16.gmra.mrb[0].mxu0 %v1369
      %v1459 = vpop.f32.mrb[0].mxu0
      %v1460 = vadd.f32 0.0, %v1459
      %v1461 = vpop.f32.mrb[0].mxu0
      %v1462 = vpop.f32.mrb[0].mxu0
      %v1463 = vadd.f32 0.0, %v1462
      %v1464 = vpop.f32.mrb[0].mxu0
      %1465 = vmatprep.mubr.bf16.mxu0 0
      %1466 = vmatmul.mubr.bf16.gmra.mrb[0].mxu0 %v1372
      %v1467 = vpop.f32.mrb[0].mxu0
      %v1468 = vadd.f32 0.0, %v1467
      %v1469 = vpop.f32.mrb[0].mxu0
      %v1470 = vpop.f32.mrb[0].mxu0
      %v1471 = vadd.f32 0.0, %v1470
      %v1472 = vpop.f32.mrb[0].mxu0
      %1473 = vdwg.mxu0
      %v1474 = vadd.f32 %v1308, %v1412
      %v1475 = vadd.f32 %v1309, %v1415
      %v1476 = vadd.f32 %v1310, %v1420
      %v1477 = vadd.f32 %v1311, %v1423
      %v1478 = vadd.f32 %v1312, %v1428
      %v1479 = vadd.f32 %v1313, %v1431
      %v1480 = vadd.f32 %v1314, %v1436
      %v1481 = vadd.f32 %v1315, %v1439
      %v1482 = vadd.f32 %v1316, %v1444
      %v1483 = vadd.f32 %v1317, %v1447
      %v1484 = vadd.f32 %v1318, %v1452
      %v1485 = vadd.f32 %v1319, %v1455
      %v1486 = vadd.f32 %v1320, %v1460
      %v1487 = vadd.f32 %v1321, %v1463
      %v1488 = vadd.f32 %v1322, %v1468
      %v1489 = vadd.f32 %v1323, %v1471
      %s1490 = scalar_lea.vmem [#allocation2], 64
      %v1491 = vld [vmem:[%s1490 + $0x7] sm:$0xff]
      %v1492 = vld [vmem:[%s1490 + $0xf] sm:$0xff]
      %v1493 = vld [vmem:[%s1490 + $0x27] sm:$0xff]
      %v1494 = vld [vmem:[%s1490 + $0x2f] sm:$0xff]
      %v1495 = vld [vmem:[%s1490 + $0x47] sm:$0xff]
      %v1496 = vld [vmem:[%s1490 + $0x4f] sm:$0xff]
      %v1497 = vld [vmem:[%s1490 + $0x67] sm:$0xff]
      %v1498 = vld [vmem:[%s1490 + $0x6f] sm:$0xff]
      %v1499 = vld [vmem:[%s1490 + $0x87] sm:$0xff]
      %v1500 = vld [vmem:[%s1490 + $0x8f] sm:$0xff]
      %v1501 = vld [vmem:[%s1490 + $0xa7] sm:$0xff]
      %v1502 = vld [vmem:[%s1490 + $0xaf] sm:$0xff]
      %v1503 = vld [vmem:[%s1490 + $0xc7] sm:$0xff]
      %v1504 = vld [vmem:[%s1490 + $0xcf] sm:$0xff]
      %v1505 = vld [vmem:[%s1490 + $0xe7] sm:$0xff]
      %v1506 = vld [vmem:[%s1490 + $0xef] sm:$0xff]
      %v1507 = vpack.c.bf16 %v1492, %v1491
      %v1508 = vpack.c.bf16 %v1494, %v1493
      %v1509 = vpack.c.bf16 %v1496, %v1495
      %v1510 = vpack.c.bf16 %v1498, %v1497
      %v1511 = vpack.c.bf16 %v1500, %v1499
      %v1512 = vpack.c.bf16 %v1502, %v1501
      %v1513 = vpack.c.bf16 %v1504, %v1503
      %v1514 = vpack.c.bf16 %v1506, %v1505
      %s1515 = scalar_lea.vmem %s3, 12
      %v1516 = vld [vmem:[%s1515] sm:$0x3]
      %v1518 = vsel %vm488, %v1507, 0
      %v1521 = vsel %vm488, %v1508, 0
      %v1524 = vsel %vm488, %v1509, 0
      %v1527 = vsel %vm488, %v1510, 0
      %v1530 = vsel %vm488, %v1511, 0
      %v1533 = vsel %vm488, %v1512, 0
      %v1536 = vsel %vm488, %v1513, 0
      %v1539 = vsel %vm488, %v1514, 0
      %v1542 = vsel %vm601, %v1516, 0
      %1544 = vmatprep.subr.bf16.mxu0 0
      %1545 = vmatpush1.bf16.msra.mxu0 %v1542
      %1546 = vmatprep.subr.bf16.mxu0 0
      %1547 = vmatpush1.bf16.msra.mxu0 0
      %1548 = vmatprep.subr.bf16.mxu0 0
      %1549 = vmatpush1.bf16.msra.mxu0 0
      %1550 = vmatprep.subr.bf16.mxu0 0
      %1551 = vmatpush1.bf16.msra.mxu0 0
      %1552 = vmatprep.subr.bf16.mxu0 0
      %1553 = vmatpush1.bf16.msra.mxu0 0
      %1554 = vmatprep.subr.bf16.mxu0 0
      %1555 = vmatpush1.bf16.msra.mxu0 0
      %1556 = vmatprep.subr.bf16.mxu0 0
      %1557 = vmatpush1.bf16.msra.mxu0 0
      %1558 = vmatprep.subr.bf16.mxu0 0
      %1559 = vmatpush1.bf16.msra.mxu0 0
      %1560 = vmatprep.subr.bf16.mxu0 0
      %1561 = vmatpush1.bf16.msra.mxu0 0
      %1562 = vmatprep.subr.bf16.mxu0 0
      %1563 = vmatpush1.bf16.msra.mxu0 0
      %1564 = vmatprep.subr.bf16.mxu0 0
      %1565 = vmatpush1.bf16.msra.mxu0 0
      %1566 = vmatprep.subr.bf16.mxu0 0
      %1567 = vmatpush1.bf16.msra.mxu0 0
      %1568 = vmatprep.subr.bf16.mxu0 0
      %1569 = vmatpush1.bf16.msra.mxu0 0
      %1570 = vmatprep.subr.bf16.mxu0 0
      %1571 = vmatpush1.bf16.msra.mxu0 0
      %1572 = vmatprep.subr.bf16.mxu0 0
      %1573 = vmatpush1.bf16.msra.mxu0 0
      %1574 = vmatprep.subr.bf16.mxu0 0
      %1575 = vmatpush1.bf16.msra.mxu0 0
      %1576 = vmatprep.mubr.bf16.mxu0 0
      %1577 = vmatmul.mubr.bf16.gmra.mrb[0].mxu0 %v1518
      %v1578 = vpop.f32.mrb[0].mxu0
      %v1579 = vadd.f32 0.0, %v1578
      %v1580 = vpop.f32.mrb[0].mxu0
      %v1581 = vpop.f32.mrb[0].mxu0
      %v1582 = vadd.f32 0.0, %v1581
      %v1583 = vpop.f32.mrb[0].mxu0
      %1584 = vmatprep.mubr.bf16.mxu0 0
      %1585 = vmatmul.mubr.bf16.gmra.mrb[0].mxu0 %v1521
      %v1586 = vpop.f32.mrb[0].mxu0
      %v1587 = vadd.f32 0.0, %v1586
      %v1588 = vpop.f32.mrb[0].mxu0
      %v1589 = vpop.f32.mrb[0].mxu0
      %v1590 = vadd.f32 0.0, %v1589
      %v1591 = vpop.f32.mrb[0].mxu0
      %1592 = vmatprep.mubr.bf16.mxu0 0
      %1593 = vmatmul.mubr.bf16.gmra.mrb[0].mxu0 %v1524
      %v1594 = vpop.f32.mrb[0].mxu0
      %v1595 = vadd.f32 0.0, %v1594
      %v1596 = vpop.f32.mrb[0].mxu0
      %v1597 = vpop.f32.mrb[0].mxu0
      %v1598 = vadd.f32 0.0, %v1597
      %v1599 = vpop.f32.mrb[0].mxu0
      %1600 = vmatprep.mubr.bf16.mxu0 0
      %1601 = vmatmul.mubr.bf16.gmra.mrb[0].mxu0 %v1527
      %v1602 = vpop.f32.mrb[0].mxu0
      %v1603 = vadd.f32 0.0, %v1602
      %v1604 = vpop.f32.mrb[0].mxu0
      %v1605 = vpop.f32.mrb[0].mxu0
      %v1606 = vadd.f32 0.0, %v1605
      %v1607 = vpop.f32.mrb[0].mxu0
      %1608 = vmatprep.mubr.bf16.mxu0 0
      %1609 = vmatmul.mubr.bf16.gmra.mrb[0].mxu0 %v1530
      %v1610 = vpop.f32.mrb[0].mxu0
      %v1611 = vadd.f32 0.0, %v1610
      %v1612 = vpop.f32.mrb[0].mxu0
      %v1613 = vpop.f32.mrb[0].mxu0
      %v1614 = vadd.f32 0.0, %v1613
      %v1615 = vpop.f32.mrb[0].mxu0
      %1616 = vmatprep.mubr.bf16.mxu0 0
      %1617 = vmatmul.mubr.bf16.gmra.mrb[0].mxu0 %v1533
      %v1618 = vpop.f32.mrb[0].mxu0
      %v1619 = vadd.f32 0.0, %v1618
      %v1620 = vpop.f32.mrb[0].mxu0
      %v1621 = vpop.f32.mrb[0].mxu0
      %v1622 = vadd.f32 0.0, %v1621
      %v1623 = vpop.f32.mrb[0].mxu0
      %1624 = vmatprep.mubr.bf16.mxu0 0
      %1625 = vmatmul.mubr.bf16.gmra.mrb[0].mxu0 %v1536
      %v1626 = vpop.f32.mrb[0].mxu0
      %v1627 = vadd.f32 0.0, %v1626
      %v1628 = vpop.f32.mrb[0].mxu0
      %v1629 = vpop.f32.mrb[0].mxu0
      %v1630 = vadd.f32 0.0, %v1629
      %v1631 = vpop.f32.mrb[0].mxu0
      %1632 = vmatprep.mubr.bf16.mxu0 0
      %1633 = vmatmul.mubr.bf16.gmra.mrb[0].mxu0 %v1539
      %v1634 = vpop.f32.mrb[0].mxu0
      %v1635 = vadd.f32 0.0, %v1634
      %v1636 = vpop.f32.mrb[0].mxu0
      %v1637 = vpop.f32.mrb[0].mxu0
      %v1638 = vadd.f32 0.0, %v1637
      %v1639 = vpop.f32.mrb[0].mxu0
      %1640 = vdwg.mxu0
      %v1641 = vadd.f32 %v1474, %v1579
      %v1642 = vadd.f32 %v1475, %v1582
      %v1643 = vadd.f32 %v1476, %v1587
      %v1644 = vadd.f32 %v1477, %v1590
      %v1645 = vadd.f32 %v1478, %v1595
      %v1646 = vadd.f32 %v1479, %v1598
      %v1647 = vadd.f32 %v1480, %v1603
      %v1648 = vadd.f32 %v1481, %v1606
      %v1649 = vadd.f32 %v1482, %v1611
      %v1650 = vadd.f32 %v1483, %v1614
      %v1651 = vadd.f32 %v1484, %v1619
      %v1652 = vadd.f32 %v1485, %v1622
      %v1653 = vadd.f32 %v1486, %v1627
      %v1654 = vadd.f32 %v1487, %v1630
      %v1655 = vadd.f32 %v1488, %v1635
      %v1656 = vadd.f32 %v1489, %v1638
      %v1657 = vld [vmem:[%s1490 + $0x8] sm:$0xff]
      %v1658 = vld [vmem:[%s1490 + $0x10] sm:$0xff]
      %v1659 = vld [vmem:[%s1490 + $0x28] sm:$0xff]
      %v1660 = vld [vmem:[%s1490 + $0x30] sm:$0xff]
      %v1661 = vld [vmem:[%s1490 + $0x48] sm:$0xff]
      %v1662 = vld [vmem:[%s1490 + $0x50] sm:$0xff]
      %v1663 = vld [vmem:[%s1490 + $0x68] sm:$0xff]
      %v1664 = vld [vmem:[%s1490 + $0x70] sm:$0xff]
      %v1665 = vld [vmem:[%s1490 + $0x88] sm:$0xff]
      %v1666 = vld [vmem:[%s1490 + $0x90] sm:$0xff]
      %v1667 = vld [vmem:[%s1490 + $0xa8] sm:$0xff]
      %v1668 = vld [vmem:[%s1490 + $0xb0] sm:$0xff]
      %v1669 = vld [vmem:[%s1490 + $0xc8] sm:$0xff]
      %v1670 = vld [vmem:[%s1490 + $0xd0] sm:$0xff]
      %v1671 = vld [vmem:[%s1490 + $0xe8] sm:$0xff]
      %v1672 = vld [vmem:[%s1490 + $0xf0] sm:$0xff]
      %v1673 = vpack.c.bf16 %v1658, %v1657
      %v1674 = vpack.c.bf16 %v1660, %v1659
      %v1675 = vpack.c.bf16 %v1662, %v1661
      %v1676 = vpack.c.bf16 %v1664, %v1663
      %v1677 = vpack.c.bf16 %v1666, %v1665
      %v1678 = vpack.c.bf16 %v1668, %v1667
      %v1679 = vpack.c.bf16 %v1670, %v1669
      %v1680 = vpack.c.bf16 %v1672, %v1671
      %s1681 = scalar_lea.vmem %s3, 14
      %v1682 = vld [vmem:[%s1681] sm:$0x3]
      %v1684 = vsel %vm488, %v1673, 0
      %v1687 = vsel %vm488, %v1674, 0
      %v1690 = vsel %vm488, %v1675, 0
      %v1693 = vsel %vm488, %v1676, 0
      %v1696 = vsel %vm488, %v1677, 0
      %v1699 = vsel %vm488, %v1678, 0
      %v1702 = vsel %vm488, %v1679, 0
      %v1705 = vsel %vm488, %v1680, 0
      %v1708 = vsel %vm601, %v1682, 0
      %1710 = vmatprep.subr.bf16.mxu0 0
      %1711 = vmatpush1.bf16.msra.mxu0 %v1708
      %1712 = vmatprep.subr.bf16.mxu0 0
      %1713 = vmatpush1.bf16.msra.mxu0 0
      %1714 = vmatprep.subr.bf16.mxu0 0
      %1715 = vmatpush1.bf16.msra.mxu0 0
      %1716 = vmatprep.subr.bf16.mxu0 0
      %1717 = vmatpush1.bf16.msra.mxu0 0
      %1718 = vmatprep.subr.bf16.mxu0 0
      %1719 = vmatpush1.bf16.msra.mxu0 0
      %1720 = vmatprep.subr.bf16.mxu0 0
      %1721 = vmatpush1.bf16.msra.mxu0 0
      %1722 = vmatprep.subr.bf16.mxu0 0
      %1723 = vmatpush1.bf16.msra.mxu0 0
      %1724 = vmatprep.subr.bf16.mxu0 0
      %1725 = vmatpush1.bf16.msra.mxu0 0
      %1726 = vmatprep.subr.bf16.mxu0 0
      %1727 = vmatpush1.bf16.msra.mxu0 0
      %1728 = vmatprep.subr.bf16.mxu0 0
      %1729 = vmatpush1.bf16.msra.mxu0 0
      %1730 = vmatprep.subr.bf16.mxu0 0
      %1731 = vmatpush1.bf16.msra.mxu0 0
      %1732 = vmatprep.subr.bf16.mxu0 0
      %1733 = vmatpush1.bf16.msra.mxu0 0
      %1734 = vmatprep.subr.bf16.mxu0 0
      %1735 = vmatpush1.bf16.msra.mxu0 0
      %1736 = vmatprep.subr.bf16.mxu0 0
      %1737 = vmatpush1.bf16.msra.mxu0 0
      %1738 = vmatprep.subr.bf16.mxu0 0
      %1739 = vmatpush1.bf16.msra.mxu0 0
      %1740 = vmatprep.subr.bf16.mxu0 0
      %1741 = vmatpush1.bf16.msra.mxu0 0
      %1742 = vmatprep.mubr.bf16.mxu0 0
      %1743 = vmatmul.mubr.bf16.gmra.mrb[0].mxu0 %v1684
      %v1744 = vpop.f32.mrb[0].mxu0
      %v1745 = vadd.f32 0.0, %v1744
      %v1746 = vpop.f32.mrb[0].mxu0
      %v1747 = vpop.f32.mrb[0].mxu0
      %v1748 = vadd.f32 0.0, %v1747
      %v1749 = vpop.f32.mrb[0].mxu0
      %1750 = vmatprep.mubr.bf16.mxu0 0
      %1751 = vmatmul.mubr.bf16.gmra.mrb[0].mxu0 %v1687
      %v1752 = vpop.f32.mrb[0].mxu0
      %v1753 = vadd.f32 0.0, %v1752
      %v1754 = vpop.f32.mrb[0].mxu0
      %v1755 = vpop.f32.mrb[0].mxu0
      %v1756 = vadd.f32 0.0, %v1755
      %v1757 = vpop.f32.mrb[0].mxu0
      %1758 = vmatprep.mubr.bf16.mxu0 0
      %1759 = vmatmul.mubr.bf16.gmra.mrb[0].mxu0 %v1690
      %v1760 = vpop.f32.mrb[0].mxu0
      %v1761 = vadd.f32 0.0, %v1760
      %v1762 = vpop.f32.mrb[0].mxu0
      %v1763 = vpop.f32.mrb[0].mxu0
      %v1764 = vadd.f32 0.0, %v1763
      %v1765 = vpop.f32.mrb[0].mxu0
      %1766 = vmatprep.mubr.bf16.mxu0 0
      %1767 = vmatmul.mubr.bf16.gmra.mrb[0].mxu0 %v1693
      %v1768 = vpop.f32.mrb[0].mxu0
      %v1769 = vadd.f32 0.0, %v1768
      %v1770 = vpop.f32.mrb[0].mxu0
      %v1771 = vpop.f32.mrb[0].mxu0
      %v1772 = vadd.f32 0.0, %v1771
      %v1773 = vpop.f32.mrb[0].mxu0
      %1774 = vmatprep.mubr.bf16.mxu0 0
      %1775 = vmatmul.mubr.bf16.gmra.mrb[0].mxu0 %v1696
      %v1776 = vpop.f32.mrb[0].mxu0
      %v1777 = vadd.f32 0.0, %v1776
      %v1778 = vpop.f32.mrb[0].mxu0
      %v1779 = vpop.f32.mrb[0].mxu0
      %v1780 = vadd.f32 0.0, %v1779
      %v1781 = vpop.f32.mrb[0].mxu0
      %1782 = vmatprep.mubr.bf16.mxu0 0
      %1783 = vmatmul.mubr.bf16.gmra.mrb[0].mxu0 %v1699
      %v1784 = vpop.f32.mrb[0].mxu0
      %v1785 = vadd.f32 0.0, %v1784
      %v1786 = vpop.f32.mrb[0].mxu0
      %v1787 = vpop.f32.mrb[0].mxu0
      %v1788 = vadd.f32 0.0, %v1787
      %v1789 = vpop.f32.mrb[0].mxu0
      %1790 = vmatprep.mubr.bf16.mxu0 0
      %1791 = vmatmul.mubr.bf16.gmra.mrb[0].mxu0 %v1702
      %v1792 = vpop.f32.mrb[0].mxu0
      %v1793 = vadd.f32 0.0, %v1792
      %v1794 = vpop.f32.mrb[0].mxu0
      %v1795 = vpop.f32.mrb[0].mxu0
      %v1796 = vadd.f32 0.0, %v1795
      %v1797 = vpop.f32.mrb[0].mxu0
      %1798 = vmatprep.mubr.bf16.mxu0 0
      %1799 = vmatmul.mubr.bf16.gmra.mrb[0].mxu0 %v1705
      %v1800 = vpop.f32.mrb[0].mxu0
      %v1801 = vadd.f32 0.0, %v1800
      %v1802 = vpop.f32.mrb[0].mxu0
      %v1803 = vpop.f32.mrb[0].mxu0
      %v1804 = vadd.f32 0.0, %v1803
      %v1805 = vpop.f32.mrb[0].mxu0
      %1806 = vdwg.mxu0
      %v1807 = vadd.f32 %v1641, %v1745
      %v1808 = vadd.f32 %v1642, %v1748
      %v1809 = vadd.f32 %v1643, %v1753
      %v1810 = vadd.f32 %v1644, %v1756
      %v1811 = vadd.f32 %v1645, %v1761
      %v1812 = vadd.f32 %v1646, %v1764
      %v1813 = vadd.f32 %v1647, %v1769
      %v1814 = vadd.f32 %v1648, %v1772
      %v1815 = vadd.f32 %v1649, %v1777
      %v1816 = vadd.f32 %v1650, %v1780
      %v1817 = vadd.f32 %v1651, %v1785
      %v1818 = vadd.f32 %v1652, %v1788
      %v1819 = vadd.f32 %v1653, %v1793
      %v1820 = vadd.f32 %v1654, %v1796
      %v1821 = vadd.f32 %v1655, %v1801
      %v1822 = vadd.f32 %v1656, %v1804
      %v1823 = vld [vmem:[%s1490 + $0x9] sm:$0xff]
      %v1824 = vld [vmem:[%s1490 + $0x11] sm:$0xff]
      %v1825 = vld [vmem:[%s1490 + $0x29] sm:$0xff]
      %v1826 = vld [vmem:[%s1490 + $0x31] sm:$0xff]
      %v1827 = vld [vmem:[%s1490 + $0x49] sm:$0xff]
      %v1828 = vld [vmem:[%s1490 + $0x51] sm:$0xff]
      %v1829 = vld [vmem:[%s1490 + $0x69] sm:$0xff]
      %v1830 = vld [vmem:[%s1490 + $0x71] sm:$0xff]
      %v1831 = vld [vmem:[%s1490 + $0x89] sm:$0xff]
      %v1832 = vld [vmem:[%s1490 + $0x91] sm:$0xff]
      %v1833 = vld [vmem:[%s1490 + $0xa9] sm:$0xff]
      %v1834 = vld [vmem:[%s1490 + $0xb1] sm:$0xff]
      %v1835 = vld [vmem:[%s1490 + $0xc9] sm:$0xff]
      %v1836 = vld [vmem:[%s1490 + $0xd1] sm:$0xff]
      %v1837 = vld [vmem:[%s1490 + $0xe9] sm:$0xff]
      %v1838 = vld [vmem:[%s1490 + $0xf1] sm:$0xff]
      %v1839 = vpack.c.bf16 %v1824, %v1823
      %v1840 = vpack.c.bf16 %v1826, %v1825
      %v1841 = vpack.c.bf16 %v1828, %v1827
      %v1842 = vpack.c.bf16 %v1830, %v1829
      %v1843 = vpack.c.bf16 %v1832, %v1831
      %v1844 = vpack.c.bf16 %v1834, %v1833
      %v1845 = vpack.c.bf16 %v1836, %v1835
      %v1846 = vpack.c.bf16 %v1838, %v1837
      %s1847 = scalar_lea.vmem %s3, 16
      %v1848 = vld [vmem:[%s1847] sm:$0x3]
      %v1850 = vsel %vm488, %v1839, 0
      %v1853 = vsel %vm488, %v1840, 0
      %v1856 = vsel %vm488, %v1841, 0
      %v1859 = vsel %vm488, %v1842, 0
      %v1862 = vsel %vm488, %v1843, 0
      %v1865 = vsel %vm488, %v1844, 0
      %v1868 = vsel %vm488, %v1845, 0
      %v1871 = vsel %vm488, %v1846, 0
      %v1874 = vsel %vm601, %v1848, 0
      %1876 = vmatprep.subr.bf16.mxu0 0
      %1877 = vmatpush1.bf16.msra.mxu0 %v1874
      %1878 = vmatprep.subr.bf16.mxu0 0
      %1879 = vmatpush1.bf16.msra.mxu0 0
      %1880 = vmatprep.subr.bf16.mxu0 0
      %1881 = vmatpush1.bf16.msra.mxu0 0
      %1882 = vmatprep.subr.bf16.mxu0 0
      %1883 = vmatpush1.bf16.msra.mxu0 0
      %1884 = vmatprep.subr.bf16.mxu0 0
      %1885 = vmatpush1.bf16.msra.mxu0 0
      %1886 = vmatprep.subr.bf16.mxu0 0
      %1887 = vmatpush1.bf16.msra.mxu0 0
      %1888 = vmatprep.subr.bf16.mxu0 0
      %1889 = vmatpush1.bf16.msra.mxu0 0
      %1890 = vmatprep.subr.bf16.mxu0 0
      %1891 = vmatpush1.bf16.msra.mxu0 0
      %1892 = vmatprep.subr.bf16.mxu0 0
      %1893 = vmatpush1.bf16.msra.mxu0 0
      %1894 = vmatprep.subr.bf16.mxu0 0
      %1895 = vmatpush1.bf16.msra.mxu0 0
      %1896 = vmatprep.subr.bf16.mxu0 0
      %1897 = vmatpush1.bf16.msra.mxu0 0
      %1898 = vmatprep.subr.bf16.mxu0 0
      %1899 = vmatpush1.bf16.msra.mxu0 0
      %1900 = vmatprep.subr.bf16.mxu0 0
      %1901 = vmatpush1.bf16.msra.mxu0 0
      %1902 = vmatprep.subr.bf16.mxu0 0
      %1903 = vmatpush1.bf16.msra.mxu0 0
      %1904 = vmatprep.subr.bf16.mxu0 0
      %1905 = vmatpush1.bf16.msra.mxu0 0
      %1906 = vmatprep.subr.bf16.mxu0 0
      %1907 = vmatpush1.bf16.msra.mxu0 0
      %1908 = vmatprep.mubr.bf16.mxu0 0
      %1909 = vmatmul.mubr.bf16.gmra.mrb[0].mxu0 %v1850
      %v1910 = vpop.f32.mrb[0].mxu0
      %v1911 = vadd.f32 0.0, %v1910
      %v1912 = vpop.f32.mrb[0].mxu0
      %v1913 = vpop.f32.mrb[0].mxu0
      %v1914 = vadd.f32 0.0, %v1913
      %v1915 = vpop.f32.mrb[0].mxu0
      %1916 = vmatprep.mubr.bf16.mxu0 0
      %1917 = vmatmul.mubr.bf16.gmra.mrb[0].mxu0 %v1853
      %v1918 = vpop.f32.mrb[0].mxu0
      %v1919 = vadd.f32 0.0, %v1918
      %v1920 = vpop.f32.mrb[0].mxu0
      %v1921 = vpop.f32.mrb[0].mxu0
      %v1922 = vadd.f32 0.0, %v1921
      %v1923 = vpop.f32.mrb[0].mxu0
      %1924 = vmatprep.mubr.bf16.mxu0 0
      %1925 = vmatmul.mubr.bf16.gmra.mrb[0].mxu0 %v1856
      %v1926 = vpop.f32.mrb[0].mxu0
      %v1927 = vadd.f32 0.0, %v1926
      %v1928 = vpop.f32.mrb[0].mxu0
      %v1929 = vpop.f32.mrb[0].mxu0
      %v1930 = vadd.f32 0.0, %v1929
      %v1931 = vpop.f32.mrb[0].mxu0
      %1932 = vmatprep.mubr.bf16.mxu0 0
      %1933 = vmatmul.mubr.bf16.gmra.mrb[0].mxu0 %v1859
      %v1934 = vpop.f32.mrb[0].mxu0
      %v1935 = vadd.f32 0.0, %v1934
      %v1936 = vpop.f32.mrb[0].mxu0
      %v1937 = vpop.f32.mrb[0].mxu0
      %v1938 = vadd.f32 0.0, %v1937
      %v1939 = vpop.f32.mrb[0].mxu0
      %1940 = vmatprep.mubr.bf16.mxu0 0
      %1941 = vmatmul.mubr.bf16.gmra.mrb[0].mxu0 %v1862
      %v1942 = vpop.f32.mrb[0].mxu0
      %v1943 = vadd.f32 0.0, %v1942
      %v1944 = vpop.f32.mrb[0].mxu0
      %v1945 = vpop.f32.mrb[0].mxu0
      %v1946 = vadd.f32 0.0, %v1945
      %v1947 = vpop.f32.mrb[0].mxu0
      %1948 = vmatprep.mubr.bf16.mxu0 0
      %1949 = vmatmul.mubr.bf16.gmra.mrb[0].mxu0 %v1865
      %v1950 = vpop.f32.mrb[0].mxu0
      %v1951 = vadd.f32 0.0, %v1950
      %v1952 = vpop.f32.mrb[0].mxu0
      %v1953 = vpop.f32.mrb[0].mxu0
      %v1954 = vadd.f32 0.0, %v1953
      %v1955 = vpop.f32.mrb[0].mxu0
      %1956 = vmatprep.mubr.bf16.mxu0 0
      %1957 = vmatmul.mubr.bf16.gmra.mrb[0].mxu0 %v1868
      %v1958 = vpop.f32.mrb[0].mxu0
      %v1959 = vadd.f32 0.0, %v1958
      %v1960 = vpop.f32.mrb[0].mxu0
      %v1961 = vpop.f32.mrb[0].mxu0
      %v1962 = vadd.f32 0.0, %v1961
      %v1963 = vpop.f32.mrb[0].mxu0
      %1964 = vmatprep.mubr.bf16.mxu0 0
      %1965 = vmatmul.mubr.bf16.gmra.mrb[0].mxu0 %v1871
      %v1966 = vpop.f32.mrb[0].mxu0
      %v1967 = vadd.f32 0.0, %v1966
      %v1968 = vpop.f32.mrb[0].mxu0
      %v1969 = vpop.f32.mrb[0].mxu0
      %v1970 = vadd.f32 0.0, %v1969
      %v1971 = vpop.f32.mrb[0].mxu0
      %1972 = vdwg.mxu0
      %v1973 = vadd.f32 %v1807, %v1911
      %v1974 = vadd.f32 %v1808, %v1914
      %v1975 = vadd.f32 %v1809, %v1919
      %v1976 = vadd.f32 %v1810, %v1922
      %v1977 = vadd.f32 %v1811, %v1927
      %v1978 = vadd.f32 %v1812, %v1930
      %v1979 = vadd.f32 %v1813, %v1935
      %v1980 = vadd.f32 %v1814, %v1938
      %v1981 = vadd.f32 %v1815, %v1943
      %v1982 = vadd.f32 %v1816, %v1946
      %v1983 = vadd.f32 %v1817, %v1951
      %v1984 = vadd.f32 %v1818, %v1954
      %v1985 = vadd.f32 %v1819, %v1959
      %v1986 = vadd.f32 %v1820, %v1962
      %v1987 = vadd.f32 %v1821, %v1967
      %v1988 = vadd.f32 %v1822, %v1970
      %v1989 = vmax.f32 %v1973, 0.0
      %v1990 = vmax.f32 %v1974, 0.0
      %v1991 = vmax.f32 %v1975, 0.0
      %v1992 = vmax.f32 %v1976, 0.0
      %v1993 = vmax.f32 %v1977, 0.0
      %v1994 = vmax.f32 %v1978, 0.0
      %v1995 = vmax.f32 %v1979, 0.0
      %v1996 = vmax.f32 %v1980, 0.0
      %v1997 = vmax.f32 %v1981, 0.0
      %v1998 = vmax.f32 %v1982, 0.0
      %v1999 = vmax.f32 %v1983, 0.0
      %v2000 = vmax.f32 %v1984, 0.0
      %v2001 = vmax.f32 %v1985, 0.0
      %v2002 = vmax.f32 %v1986, 0.0
      %v2003 = vmax.f32 %v1987, 0.0
      %v2004 = vmax.f32 %v1988, 0.0
      %v2005 = vpack.c.bf16 %v1990, %v1989
      %v2006 = vpack.c.bf16 %v1992, %v1991
      %v2007 = vpack.c.bf16 %v1994, %v1993
      %v2008 = vpack.c.bf16 %v1996, %v1995
      %v2009 = vpack.c.bf16 %v1998, %v1997
      %v2010 = vpack.c.bf16 %v2000, %v1999
      %v2011 = vpack.c.bf16 %v2002, %v2001
      %v2012 = vpack.c.bf16 %v2004, %v2003
      %v2021 = vunpack.c.l.b16 %v2005
      %v2022 = vunpack.c.h.b16 %v2005
      %v2023 = vunpack.c.l.b16 %v2006
      %v2024 = vunpack.c.h.b16 %v2006
      %v2025 = vunpack.c.l.b16 %v2007
      %v2026 = vunpack.c.h.b16 %v2007
      %v2027 = vunpack.c.l.b16 %v2008
      %v2028 = vunpack.c.h.b16 %v2008
      %v2029 = vunpack.c.l.b16 %v2009
      %v2030 = vunpack.c.h.b16 %v2009
      %v2031 = vunpack.c.l.b16 %v2010
      %v2032 = vunpack.c.h.b16 %v2010
      %v2033 = vunpack.c.l.b16 %v2011
      %v2034 = vunpack.c.h.b16 %v2011
      %v2035 = vunpack.c.l.b16 %v2012
      %v2036 = vunpack.c.h.b16 %v2012
      %v2037 = vpack.c.b16 %v2021, %v2021
      %v2038 = vpack.c.b16 %v2022, %v2022
      %v2039 = vpack.c.b16 %v2023, %v2023
      %v2040 = vpack.c.b16 %v2024, %v2024
      %v2041 = vpack.c.b16 %v2025, %v2025
      %v2042 = vpack.c.b16 %v2026, %v2026
      %v2043 = vpack.c.b16 %v2027, %v2027
      %v2044 = vpack.c.b16 %v2028, %v2028
      %v2045 = vpack.c.b16 %v2029, %v2029
      %v2046 = vpack.c.b16 %v2030, %v2030
      %v2047 = vpack.c.b16 %v2031, %v2031
      %v2048 = vpack.c.b16 %v2032, %v2032
      %v2049 = vpack.c.b16 %v2033, %v2033
      %v2050 = vpack.c.b16 %v2034, %v2034
      %v2051 = vpack.c.b16 %v2035, %v2035
      %v2052 = vpack.c.b16 %v2036, %v2036
      %vm2069 = vcmask 27648
      %2070 = vst.msk [vmem:[%s395] sm:$0xf] %vm2069, %v2037
      %2071 = vst.msk [vmem:[%s395 + $0x4] sm:$0xf] %vm2069, %v2038
      %2072 = vst.msk [vmem:[%s395 + $0x8] sm:$0xf] %vm2069, %v2039
      %2073 = vst.msk [vmem:[%s395 + $0xc] sm:$0xf] %vm2069, %v2040
      %2074 = vst.msk [vmem:[%s395 + $0x10] sm:$0xf] %vm2069, %v2041
      %2075 = vst.msk [vmem:[%s395 + $0x14] sm:$0xf] %vm2069, %v2042
      %2076 = vst.msk [vmem:[%s395 + $0x18] sm:$0xf] %vm2069, %v2043
      %2077 = vst.msk [vmem:[%s395 + $0x1c] sm:$0xf] %vm2069, %v2044
      %2078 = vst.msk [vmem:[%s395 + $0x20] sm:$0xf] %vm2069, %v2045
      %2079 = vst.msk [vmem:[%s395 + $0x24] sm:$0xf] %vm2069, %v2046
      %2080 = vst.msk [vmem:[%s395 + $0x28] sm:$0xf] %vm2069, %v2047
      %2081 = vst.msk [vmem:[%s395 + $0x2c] sm:$0xf] %vm2069, %v2048
      %2082 = vst.msk [vmem:[%s395 + $0x30] sm:$0xf] %vm2069, %v2049
      %2083 = vst.msk [vmem:[%s395 + $0x34] sm:$0xf] %vm2069, %v2050
      %2084 = vst.msk [vmem:[%s395 + $0x38] sm:$0xf] %vm2069, %v2051
      %2085 = vst.msk [vmem:[%s395 + $0x3c] sm:$0xf] %vm2069, %v2052
      // Predicated region
      $region53: #{bottleneck_forward.5} parent=35 // pred_check
        %p2086 = pneg %p401
      $region54: #{bottleneck_forward.5} parent=35 // pred_check_branch
        %2088 = sbr.rel (%p2086) target = $region56
      $region55: #{bottleneck_forward.5} parent=35 // pred_region
        %vm2089 = vcmask 24576
        %2090 = vst.msk [vmem:[#allocation3] sm:$0x1] %vm2089, 0.0
      $region56: #{bottleneck_forward.5} parent=35 // pred_fallthru
        _
      %v2091 = vld [vmem:[#allocation3] sm:$0x1]
      %v2092 = vsel %vm488, %v1989, 0.0
      %v2093 = vsel %vm488, %v1990, 0.0
      %v2094 = vadd.f32 %v2092, %v2093
      %v2095 = vsel %vm488, %v1991, 0.0
      %v2096 = vadd.f32 %v2094, %v2095
      %v2097 = vsel %vm488, %v1992, 0.0
      %v2098 = vadd.f32 %v2096, %v2097
      %v2099 = vsel %vm488, %v1993, 0.0
      %v2100 = vadd.f32 %v2098, %v2099
      %v2101 = vsel %vm488, %v1994, 0.0
      %v2102 = vadd.f32 %v2100, %v2101
      %v2103 = vsel %vm488, %v1995, 0.0
      %v2104 = vadd.f32 %v2102, %v2103
      %v2105 = vsel %vm488, %v1996, 0.0
      %v2106 = vadd.f32 %v2104, %v2105
      %v2107 = vsel %vm488, %v1997, 0.0
      %v2108 = vadd.f32 %v2106, %v2107
      %v2109 = vsel %vm488, %v1998, 0.0
      %v2110 = vadd.f32 %v2108, %v2109
      %v2111 = vsel %vm488, %v1999, 0.0
      %v2112 = vadd.f32 %v2110, %v2111
      %v2113 = vsel %vm488, %v2000, 0.0
      %v2114 = vadd.f32 %v2112, %v2113
      %v2115 = vsel %vm488, %v2001, 0.0
      %v2116 = vadd.f32 %v2114, %v2115
      %v2117 = vsel %vm488, %v2002, 0.0
      %v2118 = vadd.f32 %v2116, %v2117
      %v2119 = vsel %vm488, %v2003, 0.0
      %v2120 = vadd.f32 %v2118, %v2119
      %v2121 = vsel %vm488, %v2004, 0.0
      %v2122 = vadd.f32 %v2120, %v2121
      %v2123 = vrot.slane %v2122, 4
      %v2124 = vadd.f32 %v2122, %v2123
      %v2125 = vrot.slane %v2124, 2
      %v2126 = vadd.f32 %v2124, %v2125
      %v2127 = vrot.slane %v2126, 1
      %v2128 = vadd.f32 %v2126, %v2127
      %v2129 = vadd.f32 %v2091, %v2128
      %vm2130 = vcmask 24576
      %2131 = vst.msk [vmem:[#allocation3] sm:$0x1] %vm2130, %v2129
      // Predicated region
      $region57: #{bottleneck_forward.5} parent=35 // pred_check
        %p2132 = pneg %p447
      $region58: #{bottleneck_forward.5} parent=35 // pred_check_branch
        %2134 = sbr.rel (%p2132) target = $region60
      $region59: #{bottleneck_forward.5} parent=35 // pred_region
        %v2135 = vld [vmem:[#allocation3] sm:$0x1]
        %v2136 = vmul.f32 %v2135, 0.00390625
        %2137 = vst.msk [vmem:[%s399] sm:$0x1] %vm2130, %v2136
      $region60: #{bottleneck_forward.5} parent=35 // pred_fallthru
        _
      %s2138 = smul.u32 16, %s22
      %p2139 = scmp.lt.s32.totalorder %s21, 1
      %s2140 = scalar_select %p2139, %s21, 1
      %p2141 = scmp.lt.s32.totalorder %s2138, 31
      %s2142 = scalar_select %p2141, %s2138, 31
      %s2143 = smul.addr %s2140, 32
      %s2144 = sadd.s32 %s2142, %s2143
      %s2145 = smul.addr %s2144, 4
      %s2146 = scalar_lea.vmem %s4, %s2145
      %p2147 = scmp.lt.s32.totalorder %s21, 1
      %s2148 = scalar_select %p2147, %s21, 1
      %s2149 = scalar_lea.vmem %s5, %s2148
      // Predicated region
      $region61: #{bottleneck_forward.5} parent=35 // pred_check
        %p2150 = pneg %p170
      $region62: #{bottleneck_forward.5} parent=35 // pred_check_branch
        %2152 = sbr.rel (%p2150) target = $region64
      $region63: #{bottleneck_forward.5} parent=35 // pred_region
        %s2153 = smul.u32 16, %s22
      $region64: #{bottleneck_forward.5} parent=35 // pred_fallthru
        _
      // Predicated region
      $region65: #{bottleneck_forward.5} parent=35 // pred_check
        %p2154 = pneg %p196
      $region66: #{bottleneck_forward.5} parent=35 // pred_check_branch
        %2156 = sbr.rel (%p2154) target = $region68
      $region67: #{bottleneck_forward.5} parent=35 // pred_region
        _
      $region68: #{bottleneck_forward.5} parent=35 // pred_fallthru
        _
    $region36: #{bottleneck_forward.5} parent=5 // pred_fallthru
      _
    %p2157 = scmp.le.s32.totalorder 2, %s12
    // Predicated region
    $region69: #{bottleneck_forward.5} parent=5 // pred_check
      %p2158 = pneg %p2157
    $region70: #{bottleneck_forward.5} parent=5 // pred_check_branch
      %2160 = sbr.rel (%p2158) target = $region72
    $region71: #{bottleneck_forward.5} parent=5 // pred_region
      %s2161 = ssub.s32 %s12, 2
      // Predicated region
      $region73: #{bottleneck_forward.5} parent=71 // pred_check
        %p2162 = pneg %p176
      $region74: #{bottleneck_forward.5} parent=71 // pred_check_branch
        %2164 = sbr.rel (%p2162) target = $region76
      $region75: #{bottleneck_forward.5} parent=71 // pred_region
        %s2165 = smul.u32 16, %s24
        %p2166 = scmp.lt.s32.totalorder %s23, 1
        %s2167 = scalar_select %p2166, %s23, 1
        %p2168 = scmp.lt.s32.totalorder %s2165, 31
        %s2169 = scalar_select %p2168, %s2165, 31
        %s2170 = smul.addr %s2167, 32
        %s2171 = sadd.s32 %s2169, %s2170
        %s2172 = smul.addr %s2171, 4
        %s2173 = scalar_lea.vmem %s4, %s2172
      $region76: #{bottleneck_forward.5} parent=71 // pred_fallthru
        _
      // Predicated region
      $region77: #{bottleneck_forward.5} parent=71 // pred_check
        %p2174 = pneg %p202
      $region78: #{bottleneck_forward.5} parent=71 // pred_check_branch
        %2176 = sbr.rel (%p2174) target = $region80
      $region79: #{bottleneck_forward.5} parent=71 // pred_region
        %p2177 = scmp.lt.s32.totalorder %s23, 1
        %s2178 = scalar_select %p2177, %s23, 1
        %s2179 = scalar_lea.vmem %s5, %s2178
      $region80: #{bottleneck_forward.5} parent=71 // pred_fallthru
        _
    $region72: #{bottleneck_forward.5} parent=5 // pred_fallthru
      _
  $region6: #{bottleneck_forward.5} parent=0 // loop_footer
    %s16 = sadd.s32 1, %s12
  $region7: #{bottleneck_forward.5} parent=0 // loop_footer_branch
    %11 = sbr.rel target = $region3
  $region8: #{bottleneck_forward.5} parent=0 // loop_exit
    _

</llo_original>
